<compile_context>
chip_gen: v5e
topology: v5e:2x2
jax: 0.10.0
libtpu: 0.0.40
codegen_flags: <defaults>
</compile_context>

<pallas_src>
import functools

import jax
import jax.numpy as jnp
from jax import lax
from jax.experimental import pallas as pl
from jax.experimental.pallas import tpu as pltpu


def _detect_vmem_limit():
    cap = 64 * 1024 * 1024
    try:
        info = pltpu.get_tpu_info()
        for name in ("vmem_capacity_bytes", "vmem_size_bytes", "vmem_bytes"):
            v = getattr(info, name, None)
            if v:
                cap = int(v)
                break
    except Exception:
        pass
    # ~48 MiB on v7x (64 MiB parts), ~100 MiB on v5e/v6e (128 MiB parts).
    return max(32 * 1024 * 1024, min(cap - 16 * 1024 * 1024, 100 * 1024 * 1024))


_VMEM_LIMIT = _detect_vmem_limit()
_BAND_BUDGET = _VMEM_LIMIT // 2     # per-grid-step working-set target


def _band_bytes(r, W, Wp, t_ci, t_co, n_ci, pooled):
    ro = r // 2 if pooled else r
    wo = W // 2 if pooled else W
    in_b = 2 * (r + 3) * Wp * t_ci * 2           # double-buffered bf16 input band
    out_b = 2 * ro * wo * t_co * 2               # double-buffered bf16 output band
    acc_b = (r * Wp * t_co * 4) if n_ci > 1 else 0
    w_b = 2 * 9 * t_ci * t_co * 2                # double-buffered bf16 weights
    return in_b + out_b + acc_b + w_b


def _pick_band_rows(H, W, Wp, t_ci, t_co, n_ci, pooled, B):
    """Largest row-band (divisor of H, even if pooled) whose working set fits the budget."""
    divs = [d for d in range(1, H + 1)
            if H % d == 0 and (not pooled or d % 2 == 0)]
    if not divs:
        divs = [H]

    def ok(d, want_multi):
        if want_multi and H // d < 2:
            return False
        return _band_bytes(d, W, Wp, t_ci, t_co, n_ci, pooled) <= _BAND_BUDGET

    # Prefer >=2 bands when batch==1 so both v7x TensorCores get work.
    prefs = (True, False) if (B == 1 and len(divs) > 1) else (False,)
    for want_multi in prefs:
        cands = [d for d in divs if ok(d, want_multi)]
        if cands:
            return max(cands)
    return min(divs)


def _pick_row_chunk(band_rows, Wp, pooled, target=512):
    """Largest divisor of band_rows (even if pooled) with row_chunk*(W+2) <= target."""
    best = None
    for d in range(1, band_rows + 1):
        if band_rows % d:
            continue
        if pooled and d % 2:
            continue
        if d * Wp <= target:
            best = d
    if best is None:
        best = 2 if pooled else 1
    return best


# ----------------------------------------------------------------------------
# Pallas kernels
# ----------------------------------------------------------------------------
def _conv3x3_kernel(x_ref, w_ref, b_ref, o_ref, *acc_refs,
                    apply_relu, apply_pool, row_chunk, W, Wp, n_ci_steps):
    """Fused 3x3 same-padding conv (+bias, +ReLU, +optional 2x2 maxpool) on one row band.

    Grid: (cout_tile, batch, band, cin_tile); cin_tile is the innermost reduction axis.

    x_ref:   ((band_rows+3)*Wp, t_ci) bf16  flattened padded row slab (Wp = W+2)
    w_ref:   (9, t_ci, t_co)          bf16  taps ordered dy-major (flat offset dy*Wp+dx)
    b_ref:   (1, t_co)                f32   bias
    o_ref:   (rows_out, Wo, t_co)     bf16  output band
    acc_refs: optional (n_chunks, row_chunk*Wp, t_co) f32 scratch (only if n_ci_steps>1)
    """
    t_co = o_ref.shape[-1]
    rows_out = o_ref.shape[0]
    band_rows = rows_out * 2 if apply_pool else rows_out
    n_chunks = band_rows // row_chunk
    M = row_chunk * Wp

    # Hoisted once per grid step.
    w_taps = [w_ref[t] for t in range(9)]
    offsets = [dy * Wp + dx for dy in range(3) for dx in range(3)]
    bias = b_ref[...]                                    # (1, t_co) f32

    def tap_sum(base):
        # 9 contiguous flat slices -> 9 MXU GEMMs accumulated in f32.
        part = jnp.dot(x_ref[pl.ds(base + offsets[0], M), :], w_taps[0],
                       preferred_element_type=jnp.float32)
        for t in range(1, 9):
            part = part + jnp.dot(x_ref[pl.ds(base + offsets[t], M), :], w_taps[t],
                                  preferred_element_type=jnp.float32)
        return part

    def epilogue_store(flat, r0):
        # Drop the 2 junk columns per row, then bias/ReLU/pool in f32 and store bf16.
        out = flat.reshape(row_chunk, Wp, t_co)[:, :W, :] + bias
        if apply_relu:
            out = jnp.maximum(out, 0.0)
        if apply_pool:
            out = jnp.max(out.reshape(row_chunk // 2, 2, W // 2, 2, t_co), axis=(1, 3))
            o_ref[pl.ds(r0 // 2, row_chunk // 2), :, :] = out.astype(o_ref.dtype)
        else:
            o_ref[pl.ds(r0, row_chunk), :, :] = out.astype(o_ref.dtype)

    def run_chunks(mode):
        def one(c):
            r0 = c * row_chunk
            base = r0 * Wp
            part = tap_sum(base)
            if mode == "store":              # single Cin tile: no scratch at all
                epilogue_store(part, r0)
            elif mode == "init":             # first Cin step: plain store, no zero-init
                acc_refs[0][c] = part
            elif mode == "accum":            # middle Cin steps
                acc_refs[0][c] += part
            else:                            # last Cin step: fuse epilogue, no finalize pass
                epilogue_store(acc_refs[0][c] + part, r0)

        if n_chunks == 1:
            one(0)
        else:
            def body(c, carry):
                one(c)
                return carry
            lax.fori_loop(0, n_chunks, body, 0, unroll=(n_chunks <= 8))

    if n_ci_steps == 1:
        run_chunks("store")
    else:
        ci = pl.program_id(3)

        @pl.when(ci == 0)
        def _():
            run_chunks("init")

        @pl.when(jnp.logical_and(ci > 0, ci < n_ci_steps - 1))
        def _():
            run_chunks("accum")

        @pl.when(ci == n_ci_steps - 1)
        def _():
            run_chunks("final")


def _relu_kernel(x_ref, o_ref):
    o_ref[...] = jnp.maximum(x_ref[...], jnp.zeros((), x_ref.dtype))


def _maxpool2x2_kernel(x_ref, o_ref):
    """Standalone 2x2 max pool, stride 2 (fallback; normally fused into the conv)."""
    H, W, C = x_ref.shape[1], x_ref.shape[2], x_ref.shape[3]
    x = x_ref[0].reshape(H // 2, 2, W // 2, 2, C)
    o_ref[0] = jnp.max(x, axis=(1, 3))


# ----------------------------------------------------------------------------
# Wrappers (pallas_call glue)
# ----------------------------------------------------------------------------
def conv3x3(x, w9, b, *, apply_relu=True, apply_pool=False):
    """x: (B,H,W,Cin) bf16, w9: (9,Cin,Cout) bf16 (dy-major taps), b: (1,Cout) f32."""
    B, H, W, Cin = x.shape
    Cout = w9.shape[-1]
    if apply_pool:
        assert H % 2 == 0 and W % 2 == 0, "fused maxpool requires even spatial dims"

    Wp = W + 2
    t_co = min(Cout, 256)            # matches v6e/v7x 256-wide MXU
    t_ci = min(Cin, 256)
    n_co = Cout // t_co
    n_ci = Cin // t_ci

    band_rows = _pick_band_rows(H, W, Wp, t_ci, t_co, n_ci, apply_pool, B)
    n_bands = H // band_rows
    row_chunk = _pick_row_chunk(band_rows, Wp, apply_pool)
    n_chunks = band_rows // row_chunk
    rows_out = band_rows // 2 if apply_pool else band_rows
    Wo = W // 2 if apply_pool else W
    Ho = H // 2 if apply_pool else H
    flat_len = (band_rows + 3) * Wp

    # 1px halo left/right/top, 2px bottom (extra row absorbs the flat-tap overrun of the
    # last chunk); row bands duplicate their small halo.
    # TODO(synk): the halo/band slab is still built with jnp.pad/stack in HBM; an
    # in-kernel halo (manual DMA of overlapping rows) would remove one activation copy.
    xp = jnp.pad(x, ((0, 0), (1, 2), (1, 1), (0, 0)))
    if n_bands == 1:
        xb = xp.reshape(B, 1, flat_len, Cin)
    else:
        xb = jnp.stack([xp[:, i * band_rows: i * band_rows + band_rows + 3]
                        for i in range(n_bands)], axis=1)
        xb = xb.reshape(B, n_bands, flat_len, Cin)

    kernel = functools.partial(
        _conv3x3_kernel, apply_relu=apply_relu, apply_pool=apply_pool,
        row_chunk=row_chunk, W=W, Wp=Wp, n_ci_steps=n_ci)
    scratch = ([] if n_ci == 1
               else [pltpu.VMEM((n_chunks, row_chunk * Wp, t_co), jnp.float32)])

    # TODO(synk): lane-dense (>=128) store layout for the Cout=64 conv1 layers and an
    # im2col K=27 specialization for Cin=3 would further help v5e; not implemented.
    out = pl.pallas_call(
        kernel,
        out_shape=jax.ShapeDtypeStruct((B, n_bands, rows_out, Wo, Cout), jnp.bfloat16),
        grid=(n_co, B, n_bands, n_ci),
        in_specs=[
            pl.BlockSpec((None, None, flat_len, t_ci), lambda co, b, s, ci: (b, s, 0, ci)),
            pl.BlockSpec((9, t_ci, t_co),              lambda co, b, s, ci: (0, ci, co)),
            pl.BlockSpec((1, t_co),                    lambda co, b, s, ci: (0, co)),
        ],
        out_specs=pl.BlockSpec((None, None, rows_out, Wo, t_co),
                               lambda co, b, s, ci: (b, s, 0, 0, co)),
        scratch_shapes=scratch,
        compiler_params=pltpu.CompilerParams(
            dimension_semantics=("parallel", "parallel", "parallel", "arbitrary"),
            vmem_limit_bytes=_VMEM_LIMIT),
    )(xb, w9, b)
    return out.reshape(B, Ho, Wo, Cout)


def relu(x):
    """Standalone ReLU (only used when a pre-activation conv output is requested)."""
    B, H, W, C = x.shape
    tc = min(C, 256)
    return pl.pallas_call(
        _relu_kernel,
        out_shape=jax.ShapeDtypeStruct((B, H, W, C), x.dtype),
        grid=(B, C // tc),
        in_specs=[pl.BlockSpec((1, H, W, tc), lambda b, c: (b, 0, 0, c))],
        out_specs=pl.BlockSpec((1, H, W, tc), lambda b, c: (b, 0, 0, c)),
        compiler_params=pltpu.CompilerParams(
            dimension_semantics=("parallel", "parallel"),
            vmem_limit_bytes=_VMEM_LIMIT),
    )(x)


def maxpool2x2(x):
    """Standalone 2x2 maxpool fallback (pools are normally fused into the conv)."""
    B, H, W, C = x.shape
    tc = min(C, 256)
    return pl.pallas_call(
        _maxpool2x2_kernel,
        out_shape=jax.ShapeDtypeStruct((B, H // 2, W // 2, C), x.dtype),
        grid=(B, C // tc),
        in_specs=[pl.BlockSpec((1, H, W, tc), lambda b, c: (b, 0, 0, c))],
        out_specs=pl.BlockSpec((1, H // 2, W // 2, tc), lambda b, c: (b, 0, 0, c)),
        compiler_params=pltpu.CompilerParams(
            dimension_semantics=("parallel", "parallel"),
            vmem_limit_bytes=_VMEM_LIMIT),
    )(x)


# ----------------------------------------------------------------------------
# VGG19 prefix (torchvision vgg19.features[:30])
# ----------------------------------------------------------------------------
class VGG19:
    layer_name_to_index_map = {
        'conv1_1': 0, 'relu1_1': 1, 'conv2_1': 5, 'relu2_1': 6,
        'conv3_1': 10, 'relu3_1': 11, 'conv4_1': 19, 'relu4_1': 20,
        'conv4_2': 21, 'relu4_2': 22, 'conv5_1': 28, 'relu5_1': 29,
    }

    # vgg19.features config through conv5_1 ('M' == MaxPool2d(2, 2))
    _CFG = [64, 64, 'M', 128, 128, 'M', 256, 256, 256, 256, 'M',
            512, 512, 512, 512, 'M', 512]

    def __init__(self, key):
        self.layers = []  # list of ('conv', (w9, b)) / ('relu', None) / ('pool', None)
        cin = 3
        for c in self._CFG:
            if c == 'M':
                self.layers.append(('pool', None))
            else:
                key, kw, kb = jax.random.split(key, 3)
                fan_in = cin * 9
                w = (jax.random.normal(kw, (3, 3, cin, c), jnp.float32)
                     * jnp.sqrt(2.0 / fan_in)).astype(jnp.bfloat16)
                w9 = w.reshape(9, cin, c)                       # dy-major taps
                b = (jax.random.normal(kb, (c,), jnp.float32) * 0.01).reshape(1, c)
                self.layers.append(('conv', (w9, b)))
                self.layers.append(('relu', None))
                cin = c
        assert len(self.layers) == max(self.layer_name_to_index_map.values()) + 1

    def forward(self, batch):
        raise NotImplementedError('Class "VGG19" does not implement method "forward".')

    def extract_feature_maps(self, batch, layer_names, normalize=False):
        """batch: NCHW [B, 3, R, C] float32. Returns dict name -> NCHW f32 feature map."""
        if normalize:
            mean = jnp.array([0.485, 0.456, 0.406], jnp.float32).reshape(1, 3, 1, 1)
            std = jnp.array([0.229, 0.224, 0.225], jnp.float32).reshape(1, 3, 1, 1)
            batch = (batch - mean) / std
        act = jnp.transpose(batch, (0, 2, 3, 1)).astype(jnp.bfloat16)  # NCHW -> NHWC bf16
        wanted = {self.layer_name_to_index_map[n]: n for n in layer_names}
        depth = max(wanted) + 1
        n_layers = len(self.layers)
        feature_maps = {}

        def record(idx, a):
            if idx in wanted:
                feature_maps[wanted[idx]] = jnp.transpose(a, (0, 3, 1, 2)).astype(jnp.float32)

        i = 0
        while i < depth:
            kind, params = self.layers[i]
            if kind == 'conv':
                w9, b = params
                # Fuse ReLU (and a following maxpool) into the conv epilogue whenever
                # the intermediate activations are not requested.
                fuse_relu = (i + 1 < depth and i + 1 < n_layers
                             and self.layers[i + 1][0] == 'relu' and i not in wanted)
                fuse_pool = (fuse_relu and i + 2 < depth and i + 2 < n_layers
                             and self.layers[i + 2][0] == 'pool'
                             and (i + 1) not in wanted and (i + 2) not in wanted)
                act = conv3x3(act, w9, b, apply_relu=fuse_relu, apply_pool=fuse_pool)
                if fuse_relu:
                    record(i + 1, act)        # fused output == post-ReLU activation
                    i += 3 if fuse_pool else 2
                else:
                    record(i, act)            # pre-activation conv output requested
                    i += 1
            elif kind == 'relu':
                act = relu(act)
                record(i, act)
                i += 1
            else:  # 'pool'
                act = maxpool2x2(act)
                record(i, act)
                i += 1
        return feature_maps


if __name__ == "__main__":
    key = jax.random.PRNGKey(0)
    kparams, kx = jax.random.split(key)
    model = VGG19(kparams)
    x = jax.random.uniform(kx, (2, 3, 16, 16), dtype=jnp.float32)  # NCHW images
    layer_names = ['relu1_1', 'relu2_1', 'relu3_1', 'relu4_1', 'conv4_2', 'relu5_1']
    fmaps = model.extract_feature_maps(x, layer_names, normalize=False)
    jax.block_until_ready(fmaps)
    assert fmaps['relu1_1'].shape == (2, 64, 16, 16)
    assert fmaps['relu2_1'].shape == (2, 128, 8, 8)
    assert fmaps['relu3_1'].shape == (2, 256, 4, 4)
    assert fmaps['relu4_1'].shape == (2, 512, 2, 2)
    assert fmaps['conv4_2'].shape == (2, 512, 2, 2)
    assert fmaps['relu5_1'].shape == (2, 512, 1, 1)
    print("KERNEL_OK")
</pallas_src>

<mosaic_0001>
module attributes {stable_mosaic.version = 11 : i64} {
  func.func @_conv3x3_kernel(%arg0: i32, %arg1: i32, %arg2: i32, %arg3: i32, %arg4: memref<1x1x342x3xbf16, #tpu.memory_space<vmem>>, %arg5: memref<9x3x64xbf16, #tpu.memory_space<vmem>>, %arg6: memref<1x64xf32, #tpu.memory_space<vmem>>, %arg7: memref<1x1x16x16x64xbf16, #tpu.memory_space<vmem>>) attributes {dimension_semantics = [#tpu.dimension_semantics<parallel>, #tpu.dimension_semantics<parallel>, #tpu.dimension_semantics<parallel>, #tpu.dimension_semantics<arbitrary>], iteration_bounds = array<i64: 1, 2, 1, 1>, scalar_prefetch = 0 : i64, scratch_operands = 0 : i64, tpu.core_type = #tpu.core_type<tc>, window_params = [{transform_indices = @transform_0, window_bounds = array<i64: 1, 1, 342, 3>}, {transform_indices = @transform_1, window_bounds = array<i64: 9, 3, 64>}, {transform_indices = @transform_2, window_bounds = array<i64: 1, 64>}, {transform_indices = @transform_3, window_bounds = array<i64: 1, 1, 16, 16, 64>}]} {
    %c0 = arith.constant 0 : index
    %c0_0 = arith.constant 0 : index
    %c0_1 = arith.constant 0 : index
    %0 = vector.load %arg5[%c0, %c0_0, %c0_1] : memref<9x3x64xbf16, #tpu.memory_space<vmem>>, vector<1x3x64xbf16>
    %1 = vector.shape_cast %0 : vector<1x3x64xbf16> to vector<3x64xbf16>
    %c1 = arith.constant 1 : index
    %c0_2 = arith.constant 0 : index
    %c0_3 = arith.constant 0 : index
    %2 = vector.load %arg5[%c1, %c0_2, %c0_3] : memref<9x3x64xbf16, #tpu.memory_space<vmem>>, vector<1x3x64xbf16>
    %3 = vector.shape_cast %2 : vector<1x3x64xbf16> to vector<3x64xbf16>
    %c2 = arith.constant 2 : index
    %c0_4 = arith.constant 0 : index
    %c0_5 = arith.constant 0 : index
    %4 = vector.load %arg5[%c2, %c0_4, %c0_5] : memref<9x3x64xbf16, #tpu.memory_space<vmem>>, vector<1x3x64xbf16>
    %5 = vector.shape_cast %4 : vector<1x3x64xbf16> to vector<3x64xbf16>
    %c3 = arith.constant 3 : index
    %c0_6 = arith.constant 0 : index
    %c0_7 = arith.constant 0 : index
    %6 = vector.load %arg5[%c3, %c0_6, %c0_7] : memref<9x3x64xbf16, #tpu.memory_space<vmem>>, vector<1x3x64xbf16>
    %7 = vector.shape_cast %6 : vector<1x3x64xbf16> to vector<3x64xbf16>
    %c4 = arith.constant 4 : index
    %c0_8 = arith.constant 0 : index
    %c0_9 = arith.constant 0 : index
    %8 = vector.load %arg5[%c4, %c0_8, %c0_9] : memref<9x3x64xbf16, #tpu.memory_space<vmem>>, vector<1x3x64xbf16>
    %9 = vector.shape_cast %8 : vector<1x3x64xbf16> to vector<3x64xbf16>
    %c5 = arith.constant 5 : index
    %c0_10 = arith.constant 0 : index
    %c0_11 = arith.constant 0 : index
    %10 = vector.load %arg5[%c5, %c0_10, %c0_11] : memref<9x3x64xbf16, #tpu.memory_space<vmem>>, vector<1x3x64xbf16>
    %11 = vector.shape_cast %10 : vector<1x3x64xbf16> to vector<3x64xbf16>
    %c6 = arith.constant 6 : index
    %c0_12 = arith.constant 0 : index
    %c0_13 = arith.constant 0 : index
    %12 = vector.load %arg5[%c6, %c0_12, %c0_13] : memref<9x3x64xbf16, #tpu.memory_space<vmem>>, vector<1x3x64xbf16>
    %13 = vector.shape_cast %12 : vector<1x3x64xbf16> to vector<3x64xbf16>
    %c7 = arith.constant 7 : index
    %c0_14 = arith.constant 0 : index
    %c0_15 = arith.constant 0 : index
    %14 = vector.load %arg5[%c7, %c0_14, %c0_15] : memref<9x3x64xbf16, #tpu.memory_space<vmem>>, vector<1x3x64xbf16>
    %15 = vector.shape_cast %14 : vector<1x3x64xbf16> to vector<3x64xbf16>
    %c8 = arith.constant 8 : index
    %c0_16 = arith.constant 0 : index
    %c0_17 = arith.constant 0 : index
    %16 = vector.load %arg5[%c8, %c0_16, %c0_17] : memref<9x3x64xbf16, #tpu.memory_space<vmem>>, vector<1x3x64xbf16>
    %17 = vector.shape_cast %16 : vector<1x3x64xbf16> to vector<3x64xbf16>
    %c0_18 = arith.constant 0 : index
    %c0_19 = arith.constant 0 : index
    %18 = vector.load %arg6[%c0_18, %c0_19] : memref<1x64xf32, #tpu.memory_space<vmem>>, vector<1x64xf32>
    %c0_20 = arith.constant 0 : index
    %c0_21 = arith.constant 0 : index
    %c0_22 = arith.constant 0 : index
    %c0_23 = arith.constant 0 : index
    %19 = vector.load %arg4[%c0_20, %c0_21, %c0_22, %c0_23] : memref<1x1x342x3xbf16, #tpu.memory_space<vmem>>, vector<1x1x288x3xbf16>
    %20 = vector.shape_cast %19 : vector<1x1x288x3xbf16> to vector<288x3xbf16>
    %cst = arith.constant dense<0.000000e+00> : vector<288x64xf32>
    %21 = tpu.matmul %20, %1, %cst {dimension_numbers = #tpu.dot_dimension_numbers<[1], [0], [0], [1], [0, 0, 1, 1], [], []>} : vector<288x3xbf16>, vector<3x64xbf16>, vector<288x64xf32> -> vector<288x64xf32>
    %c0_24 = arith.constant 0 : index
    %c0_25 = arith.constant 0 : index
    %c1_26 = arith.constant 1 : index
    %c0_27 = arith.constant 0 : index
    %22 = vector.load %arg4[%c0_24, %c0_25, %c1_26, %c0_27] : memref<1x1x342x3xbf16, #tpu.memory_space<vmem>>, vector<1x1x288x3xbf16>
    %23 = vector.shape_cast %22 : vector<1x1x288x3xbf16> to vector<288x3xbf16>
    %cst_28 = arith.constant dense<0.000000e+00> : vector<288x64xf32>
    %24 = tpu.matmul %23, %3, %cst_28 {dimension_numbers = #tpu.dot_dimension_numbers<[1], [0], [0], [1], [0, 0, 1, 1], [], []>} : vector<288x3xbf16>, vector<3x64xbf16>, vector<288x64xf32> -> vector<288x64xf32>
    %25 = arith.addf %21, %24 : vector<288x64xf32>
    %c0_29 = arith.constant 0 : index
    %c0_30 = arith.constant 0 : index
    %c2_31 = arith.constant 2 : index
    %c0_32 = arith.constant 0 : index
    %26 = vector.load %arg4[%c0_29, %c0_30, %c2_31, %c0_32] : memref<1x1x342x3xbf16, #tpu.memory_space<vmem>>, vector<1x1x288x3xbf16>
    %27 = vector.shape_cast %26 : vector<1x1x288x3xbf16> to vector<288x3xbf16>
    %cst_33 = arith.constant dense<0.000000e+00> : vector<288x64xf32>
    %28 = tpu.matmul %27, %5, %cst_33 {dimension_numbers = #tpu.dot_dimension_numbers<[1], [0], [0], [1], [0, 0, 1, 1], [], []>} : vector<288x3xbf16>, vector<3x64xbf16>, vector<288x64xf32> -> vector<288x64xf32>
    %29 = arith.addf %25, %28 : vector<288x64xf32>
    %c0_34 = arith.constant 0 : index
    %c0_35 = arith.constant 0 : index
    %c18 = arith.constant 18 : index
    %c0_36 = arith.constant 0 : index
    %30 = vector.load %arg4[%c0_34, %c0_35, %c18, %c0_36] : memref<1x1x342x3xbf16, #tpu.memory_space<vmem>>, vector<1x1x288x3xbf16>
    %31 = vector.shape_cast %30 : vector<1x1x288x3xbf16> to vector<288x3xbf16>
    %cst_37 = arith.constant dense<0.000000e+00> : vector<288x64xf32>
    %32 = tpu.matmul %31, %7, %cst_37 {dimension_numbers = #tpu.dot_dimension_numbers<[1], [0], [0], [1], [0, 0, 1, 1], [], []>} : vector<288x3xbf16>, vector<3x64xbf16>, vector<288x64xf32> -> vector<288x64xf32>
    %33 = arith.addf %29, %32 : vector<288x64xf32>
    %c0_38 = arith.constant 0 : index
    %c0_39 = arith.constant 0 : index
    %c19 = arith.constant 19 : index
    %c0_40 = arith.constant 0 : index
    %34 = vector.load %arg4[%c0_38, %c0_39, %c19, %c0_40] : memref<1x1x342x3xbf16, #tpu.memory_space<vmem>>, vector<1x1x288x3xbf16>
    %35 = vector.shape_cast %34 : vector<1x1x288x3xbf16> to vector<288x3xbf16>
    %cst_41 = arith.constant dense<0.000000e+00> : vector<288x64xf32>
    %36 = tpu.matmul %35, %9, %cst_41 {dimension_numbers = #tpu.dot_dimension_numbers<[1], [0], [0], [1], [0, 0, 1, 1], [], []>} : vector<288x3xbf16>, vector<3x64xbf16>, vector<288x64xf32> -> vector<288x64xf32>
    %37 = arith.addf %33, %36 : vector<288x64xf32>
    %c0_42 = arith.constant 0 : index
    %c0_43 = arith.constant 0 : index
    %c20 = arith.constant 20 : index
    %c0_44 = arith.constant 0 : index
    %38 = vector.load %arg4[%c0_42, %c0_43, %c20, %c0_44] : memref<1x1x342x3xbf16, #tpu.memory_space<vmem>>, vector<1x1x288x3xbf16>
    %39 = vector.shape_cast %38 : vector<1x1x288x3xbf16> to vector<288x3xbf16>
    %cst_45 = arith.constant dense<0.000000e+00> : vector<288x64xf32>
    %40 = tpu.matmul %39, %11, %cst_45 {dimension_numbers = #tpu.dot_dimension_numbers<[1], [0], [0], [1], [0, 0, 1, 1], [], []>} : vector<288x3xbf16>, vector<3x64xbf16>, vector<288x64xf32> -> vector<288x64xf32>
    %41 = arith.addf %37, %40 : vector<288x64xf32>
    %c0_46 = arith.constant 0 : index
    %c0_47 = arith.constant 0 : index
    %c36 = arith.constant 36 : index
    %c0_48 = arith.constant 0 : index
    %42 = vector.load %arg4[%c0_46, %c0_47, %c36, %c0_48] : memref<1x1x342x3xbf16, #tpu.memory_space<vmem>>, vector<1x1x288x3xbf16>
    %43 = vector.shape_cast %42 : vector<1x1x288x3xbf16> to vector<288x3xbf16>
    %cst_49 = arith.constant dense<0.000000e+00> : vector<288x64xf32>
    %44 = tpu.matmul %43, %13, %cst_49 {dimension_numbers = #tpu.dot_dimension_numbers<[1], [0], [0], [1], [0, 0, 1, 1], [], []>} : vector<288x3xbf16>, vector<3x64xbf16>, vector<288x64xf32> -> vector<288x64xf32>
    %45 = arith.addf %41, %44 : vector<288x64xf32>
    %c0_50 = arith.constant 0 : index
    %c0_51 = arith.constant 0 : index
    %c37 = arith.constant 37 : index
    %c0_52 = arith.constant 0 : index
    %46 = vector.load %arg4[%c0_50, %c0_51, %c37, %c0_52] : memref<1x1x342x3xbf16, #tpu.memory_space<vmem>>, vector<1x1x288x3xbf16>
    %47 = vector.shape_cast %46 : vector<1x1x288x3xbf16> to vector<288x3xbf16>
    %cst_53 = arith.constant dense<0.000000e+00> : vector<288x64xf32>
    %48 = tpu.matmul %47, %15, %cst_53 {dimension_numbers = #tpu.dot_dimension_numbers<[1], [0], [0], [1], [0, 0, 1, 1], [], []>} : vector<288x3xbf16>, vector<3x64xbf16>, vector<288x64xf32> -> vector<288x64xf32>
    %49 = arith.addf %45, %48 : vector<288x64xf32>
    %c0_54 = arith.constant 0 : index
    %c0_55 = arith.constant 0 : index
    %c38 = arith.constant 38 : index
    %c0_56 = arith.constant 0 : index
    %50 = vector.load %arg4[%c0_54, %c0_55, %c38, %c0_56] : memref<1x1x342x3xbf16, #tpu.memory_space<vmem>>, vector<1x1x288x3xbf16>
    %51 = vector.shape_cast %50 : vector<1x1x288x3xbf16> to vector<288x3xbf16>
    %cst_57 = arith.constant dense<0.000000e+00> : vector<288x64xf32>
    %52 = tpu.matmul %51, %17, %cst_57 {dimension_numbers = #tpu.dot_dimension_numbers<[1], [0], [0], [1], [0, 0, 1, 1], [], []>} : vector<288x3xbf16>, vector<3x64xbf16>, vector<288x64xf32> -> vector<288x64xf32>
    %53 = arith.addf %49, %52 : vector<288x64xf32>
    %54 = vector.shape_cast %53 : vector<288x64xf32> to vector<16x18x64xf32>
    %55 = vector.extract_strided_slice %54 {offsets = [0, 0, 0], sizes = [16, 16, 64], strides = [1, 1, 1]} : vector<16x18x64xf32> to vector<16x16x64xf32>
    %56 = vector.shape_cast %18 : vector<1x64xf32> to vector<1x1x64xf32>
    %57 = vector.broadcast %56 : vector<1x1x64xf32> to vector<16x16x64xf32>
    %58 = arith.addf %55, %57 : vector<16x16x64xf32>
    %cst_58 = arith.constant 0.000000e+00 : f32
    %59 = vector.broadcast %cst_58 : f32 to vector<16x16x64xf32>
    %60 = arith.maximumf %58, %59 : vector<16x16x64xf32>
    %61 = arith.truncf %60 : vector<16x16x64xf32> to vector<16x16x64xbf16>
    %c0_59 = arith.constant 0 : index
    %c0_60 = arith.constant 0 : index
    %c0_61 = arith.constant 0 : index
    %c0_62 = arith.constant 0 : index
    %c0_63 = arith.constant 0 : index
    %62 = vector.load %arg7[%c0_59, %c0_60, %c0_61, %c0_62, %c0_63] : memref<1x1x16x16x64xbf16, #tpu.memory_space<vmem>>, vector<1x1x16x16x64xbf16>
    %63 = vector.shape_cast %62 : vector<1x1x16x16x64xbf16> to vector<16x16x64xbf16>
    %64 = vector.shape_cast %61 : vector<16x16x64xbf16> to vector<1x1x16x16x64xbf16>
    tpu.vector_store %arg7[%c0_59, %c0_60, %c0_61, %c0_62, %c0_63], %64 {strides = array<i32>} : memref<1x1x16x16x64xbf16, #tpu.memory_space<vmem>>, vector<1x1x16x16x64xbf16>,
    return
  }
  func.func @transform_0(%arg0: i32, %arg1: i32, %arg2: i32, %arg3: i32) -> (i32, i32, i32, i32) {
    %c0_i32 = arith.constant 0 : i32
    %c0_i32_0 = arith.constant 0 : i32
    return %arg1, %arg2, %c0_i32, %arg3 : i32, i32, i32, i32
  }
  func.func @transform_1(%arg0: i32, %arg1: i32, %arg2: i32, %arg3: i32) -> (i32, i32, i32) {
    %c0_i32 = arith.constant 0 : i32
    %c0_i32_0 = arith.constant 0 : i32
    return %c0_i32, %arg3, %arg0 : i32, i32, i32
  }
  func.func @transform_2(%arg0: i32, %arg1: i32, %arg2: i32, %arg3: i32) -> (i32, i32) {
    %c0_i32 = arith.constant 0 : i32
    %c0_i32_0 = arith.constant 0 : i32
    return %c0_i32, %arg0 : i32, i32
  }
  func.func @transform_3(%arg0: i32, %arg1: i32, %arg2: i32, %arg3: i32) -> (i32, i32, i32, i32, i32) {
    %c0_i32 = arith.constant 0 : i32
    %c0_i32_0 = arith.constant 0 : i32
    %c0_i32_1 = arith.constant 0 : i32
    return %arg1, %arg2, %c0_i32, %c0_i32_0, %arg0 : i32, i32, i32, i32, i32
  }
}

</mosaic_0001>

<llo_original>
// kernel: tpu_custom_call.1
$region0: #{tpu_custom_call.1}
  #allocation0 [shape = 'u32[]', space=smem, size = 0x4, offset = 0x4, fixed_abs, tag = 'smem constant byte address 0x4 - core index']
  #allocation1 [shape = 'u32[72,128]{1,0:T(1,128)}', space=vmem, size = 0x9000, scoped, tag = 'internal scratch']
  %s0 = inlined_call_operand.vmem [shape: bf16[2,1,342,3], index: 0, kind: input, shape index: {}]
  %s1 = inlined_call_operand.vmem [shape: bf16[9,3,64], index: 1, kind: input, shape index: {}]
  %s2 = inlined_call_operand.vmem [shape: f32[1,64], index: 2, kind: input, shape index: {}]
  %s3 = inlined_call_operand.hbm [shape: bf16[2,1,16,16,64], index: 3, kind: output, shape index: {}]
  %s4 = sld [smem:[#allocation0]]
  $region45: #{tpu_custom_call.1} parent=0
    _
  %s6 = ssub.s32 1, %s4
  %s7 = scalar_select 0, %s6, %s4
  $region1: #{tpu_custom_call.1} parent=0
    #allocation2 [shape = 'u8[131072]{0}', space=vmem, size = 0x20000, scoped, tag = 'output window, operand 0']
    #allocation3 [shape = 's32[2]{0}', space=sflag, size = 0x8, scoped, tag = 'scoped memory for tpu_custom_call.1']
    %8 = vsyncpa [#allocation3], 0
    %s9 = scalar_lea.sflag [#allocation3], 1
    %10 = vsyncpa %s9, 0
    loop: start=0, step=1, limit=4
    $region2: #{tpu_custom_call.1} parent=1 // loop_pre_header
      _
    $region3: #{tpu_custom_call.1} parent=1 // loop_header
      %s12 = sphi 0, %s16
      %p13 = scmp.ge.s32.totalorder %s12, 4
      %s19 = sphi 0, %s45
      %s20 = sphi 0, %s41
      %s21 = sphi 0, %s37
      %s22 = sphi 0, %s33
      %s23 = sphi 0, %s19
      %s24 = sphi 0, %s20
      %s25 = sphi 0, %s21
      %s26 = sphi 0, %s22
      %s27 = sphi 0, %s23
      %s28 = sphi 0, %s24
      %s29 = sphi 0, %s25
      %s30 = sphi 0, %s26
      %s52 = sphi 0, %s54
      %s55 = sphi 0, %s52
      %s56 = sphi 0, %s55
      %s72 = sphi 0, %s56
      %s80 = sphi 0, %s82
      %s83 = sphi 0, %s80
      %s84 = sphi 0, %s83
      %s100 = sphi 0, %s84
      %s106 = sphi 0, %s108
      %s109 = sphi 0, %s106
      %s110 = sphi 0, %s109
      %s126 = sphi 0, %s110
      %s136 = sphi 0, %s138
      %s139 = sphi 0, %s136
      %s140 = sphi 0, %s139
      %s156 = sphi 0, %s140
    $region4: #{tpu_custom_call.1} parent=1 // loop_header_branch
      %15 = sbr.rel (%p13) target = $region8
    $region5: #{tpu_custom_call.1} parent=1 // loop_body
      %s17 = ssub.s32 %s12, 1
      %s18 = ssub.s32 %s12, 2
      %s31 = sadd.s32 1, %s22
      %p32 = scmp.ge.s32.totalorder %s31, 1
      %s33 = scalar_select %p32, 0, %s31
      %s34 = sadd.s32 1, %s21
      %s35 = scalar_select %p32, %s34, %s21
      %p36 = scmp.ge.s32.totalorder %s35, 1
      %s37 = scalar_select %p36, 0, %s35
      %s38 = sadd.s32 1, %s20
      %s39 = scalar_select %p36, %s38, %s20
      %p40 = scmp.ge.s32.totalorder %s39, 2
      %s41 = scalar_select %p40, 0, %s39
      %s42 = sadd.s32 1, %s19
      %s43 = scalar_select %p40, %s42, %s19
      %p44 = scmp.ge.s32.totalorder %s43, 1
      %s45 = scalar_select %p44, 0, %s43
      %s46 = ssub.s32 %s20, %s41
      %s47 = ssub.s32 %s21, %s37
      %s48 = sor.u32 %s46, %s47
      %s49 = ssub.s32 %s22, %s33
      %s50 = sor.u32 %s48, %s49
      %p51 = scmp.eq.s32.totalorder %s50, 0
      %s53 = sadd.s32 %s52, 1
      %s54 = scalar_select %p51, %s52, %s53
      %p57 = pneg %p51
      %p58 = scmp.eq.s32.totalorder %s12, 1
      %p59 = por %p57, %p58
      %p60 = scmp.ne.s32.totalorder %s52, %s55
      %p61 = scmp.eq.s32.totalorder %s12, 0
      %p62 = por %p60, %p61
      %p63 = scmp.ne.s32.totalorder %s52, %s55
      %p64 = scmp.eq.s32.totalorder %s17, 1
      %p65 = por %p63, %p64
      %p66 = scmp.ne.s32.totalorder %s55, %s56
      %p67 = scmp.eq.s32.totalorder %s17, 0
      %p68 = por %p66, %p67
      %p69 = scmp.ne.s32.totalorder %s55, %s56
      %p70 = scmp.eq.s32.totalorder %s18, 1
      %p71 = por %p69, %p70
      %p73 = scmp.ne.s32.totalorder %s56, %s72
      %p74 = scmp.eq.s32.totalorder %s18, 0
      %p75 = por %p73, %p74
      %s76 = ssub.s32 %s22, %s33
      %s77 = ssub.s32 %s19, %s45
      %s78 = sor.u32 %s76, %s77
      %p79 = scmp.eq.s32.totalorder %s78, 0
      %s81 = sadd.s32 %s80, 1
      %s82 = scalar_select %p79, %s80, %s81
      %p85 = pneg %p79
      %p86 = scmp.eq.s32.totalorder %s12, 1
      %p87 = por %p85, %p86
      %p88 = scmp.ne.s32.totalorder %s80, %s83
      %p89 = scmp.eq.s32.totalorder %s12, 0
      %p90 = por %p88, %p89
      %p91 = scmp.ne.s32.totalorder %s80, %s83
      %p92 = scmp.eq.s32.totalorder %s17, 1
      %p93 = por %p91, %p92
      %p94 = scmp.ne.s32.totalorder %s83, %s84
      %p95 = scmp.eq.s32.totalorder %s17, 0
      %p96 = por %p94, %p95
      %p97 = scmp.ne.s32.totalorder %s83, %s84
      %p98 = scmp.eq.s32.totalorder %s18, 1
      %p99 = por %p97, %p98
      %p101 = scmp.ne.s32.totalorder %s84, %s100
      %p102 = scmp.eq.s32.totalorder %s18, 0
      %p103 = por %p101, %p102
      %s104 = ssub.s32 %s19, %s45
      %p105 = scmp.eq.s32.totalorder %s104, 0
      %s107 = sadd.s32 %s106, 1
      %s108 = scalar_select %p105, %s106, %s107
      %p111 = pneg %p105
      %p112 = scmp.eq.s32.totalorder %s12, 1
      %p113 = por %p111, %p112
      %p114 = scmp.ne.s32.totalorder %s106, %s109
      %p115 = scmp.eq.s32.totalorder %s12, 0
      %p116 = por %p114, %p115
      %p117 = scmp.ne.s32.totalorder %s106, %s109
      %p118 = scmp.eq.s32.totalorder %s17, 1
      %p119 = por %p117, %p118
      %p120 = scmp.ne.s32.totalorder %s109, %s110
      %p121 = scmp.eq.s32.totalorder %s17, 0
      %p122 = por %p120, %p121
      %p123 = scmp.ne.s32.totalorder %s109, %s110
      %p124 = scmp.eq.s32.totalorder %s18, 1
      %p125 = por %p123, %p124
      %p127 = scmp.ne.s32.totalorder %s110, %s126
      %p128 = scmp.eq.s32.totalorder %s18, 0
      %p129 = por %p127, %p128
      %s130 = ssub.s32 %s20, %s41
      %s131 = ssub.s32 %s21, %s37
      %s132 = sor.u32 %s130, %s131
      %s133 = ssub.s32 %s19, %s45
      %s134 = sor.u32 %s132, %s133
      %p135 = scmp.eq.s32.totalorder %s134, 0
      %s137 = sadd.s32 %s136, 1
      %s138 = scalar_select %p135, %s136, %s137
      %p141 = pneg %p135
      %p142 = scmp.eq.s32.totalorder %s12, 1
      %p143 = por %p141, %p142
      %p144 = scmp.ne.s32.totalorder %s136, %s139
      %p145 = scmp.eq.s32.totalorder %s12, 0
      %p146 = por %p144, %p145
      %p147 = scmp.ne.s32.totalorder %s136, %s139
      %p148 = scmp.eq.s32.totalorder %s17, 1
      %p149 = por %p147, %p148
      %p150 = scmp.ne.s32.totalorder %s139, %s140
      %p151 = scmp.eq.s32.totalorder %s17, 0
      %p152 = por %p150, %p151
      %p153 = scmp.ne.s32.totalorder %s139, %s140
      %p154 = scmp.eq.s32.totalorder %s18, 1
      %p155 = por %p153, %p154
      %p157 = scmp.ne.s32.totalorder %s140, %s156
      %p158 = scmp.eq.s32.totalorder %s18, 0
      %p159 = por %p157, %p158
      %p160 = scmp.le.s32.totalorder 1, %s12
      %p161 = scmp.lt.s32.totalorder %s12, 3
      %p162 = pnand %p160, %p161
      %p163 = pneg %p162
      // Predicated region
      $region9: #{tpu_custom_call.1} parent=5 // pred_check
        _
      $region10: #{tpu_custom_call.1} parent=5 // pred_check_branch
        %165 = sbr.rel (%p162) target = $region12
      $region11: #{tpu_custom_call.1} parent=5 // pred_region
        %s166 = ssub.s32 %s12, 1
        // Predicated region
        $region13: #{tpu_custom_call.1} parent=11 // pred_check
          %p167 = pneg %p96
        $region14: #{tpu_custom_call.1} parent=11 // pred_check_branch
          %169 = sbr.rel (%p167) target = $region16
        $region15: #{tpu_custom_call.1} parent=11 // pred_region
          %p170 = scmp.lt.s32.totalorder %s26, 0
          %s171 = scalar_select %p170, %s26, 0
          %p172 = scmp.lt.s32.totalorder %s23, 0
          %s173 = scalar_select %p172, %s23, 0
          %s174 = sadd.s32 %s173, %s171
          %s175 = smul.addr %s174, 2
          %s176 = scalar_lea.vmem %s1, %s175
        $region16: #{tpu_custom_call.1} parent=11 // pred_fallthru
          _
        // Predicated region
        $region17: #{tpu_custom_call.1} parent=11 // pred_check
          %p177 = pneg %p122
        $region18: #{tpu_custom_call.1} parent=11 // pred_check_branch
          %179 = sbr.rel (%p177) target = $region20
        $region19: #{tpu_custom_call.1} parent=11 // pred_region
          %p180 = scmp.lt.s32.totalorder %s23, 0
          %s181 = scalar_select %p180, %s23, 0
          %s182 = scalar_lea.vmem %s2, %s181
        $region20: #{tpu_custom_call.1} parent=11 // pred_fallthru
          _
      $region12: #{tpu_custom_call.1} parent=5 // pred_fallthru
        _
      %p183 = scmp.lt.s32.totalorder %s12, 2
      // Predicated region
      $region21: #{tpu_custom_call.1} parent=5 // pred_check
        %p184 = pneg %p183
      $region22: #{tpu_custom_call.1} parent=5 // pred_check_branch
        %186 = sbr.rel (%p184) target = $region24
      $region23: #{tpu_custom_call.1} parent=5 // pred_region
        // Predicated region
        $region25: #{tpu_custom_call.1} parent=23 // pred_check
          %p187 = pneg %p62
        $region26: #{tpu_custom_call.1} parent=23 // pred_check_branch
          %189 = sbr.rel (%p187) target = $region28
        $region27: #{tpu_custom_call.1} parent=23 // pred_region
          %p190 = scmp.lt.s32.totalorder %s20, 1
          %s191 = scalar_select %p190, %s20, 1
          %p192 = scmp.lt.s32.totalorder %s21, 0
          %s193 = scalar_select %p192, %s21, 0
          %p194 = scmp.lt.s32.totalorder %s22, 0
          %s195 = scalar_select %p194, %s22, 0
          %s196 = smul.addr %s193, 43
          %s197 = sadd.s32 %s195, %s196
          %s198 = smul.addr %s191, 43
          %s199 = sadd.s32 %s197, %s198
          %s200 = smul.addr %s199, 4
          %s201 = scalar_lea.vmem %s0, %s200
        $region28: #{tpu_custom_call.1} parent=23 // pred_fallthru
          _
      $region24: #{tpu_custom_call.1} parent=5 // pred_fallthru
        _
      %p202 = scmp.le.s32.totalorder 1, %s12
      %p203 = scmp.lt.s32.totalorder %s12, 3
      %p204 = pnand %p202, %p203
      %p205 = pneg %p204
      // Predicated region
      $region29: #{tpu_custom_call.1} parent=5 // pred_check
        _
      $region30: #{tpu_custom_call.1} parent=5 // pred_check_branch
        %207 = sbr.rel (%p204) target = $region32
      $region31: #{tpu_custom_call.1} parent=5 // pred_region
        %s208 = ssub.s32 %s12, 1
        %p209 = scmp.lt.s32.totalorder %s24, 1
        %s210 = scalar_select %p209, %s24, 1
        %p211 = scmp.lt.s32.totalorder %s25, 0
        %s212 = scalar_select %p211, %s25, 0
        %p213 = scmp.lt.s32.totalorder %s26, 0
        %s214 = scalar_select %p213, %s26, 0
        %s215 = smul.addr %s212, 43
        %s216 = sadd.s32 %s214, %s215
        %s217 = smul.addr %s210, 43
        %s218 = sadd.s32 %s216, %s217
        %s219 = smul.addr %s218, 4
        %s220 = scalar_lea.vmem %s0, %s219
        %p221 = pneg %p68
        %p222 = pneg %p65
        %p223 = scmp.lt.s32.totalorder %s26, 0
        %s224 = scalar_select %p223, %s26, 0
        %p225 = scmp.lt.s32.totalorder %s23, 0
        %s226 = scalar_select %p225, %s23, 0
        %s227 = sadd.s32 %s226, %s224
        %s228 = smul.addr %s227, 2
        %s229 = scalar_lea.vmem %s1, %s228
        %p230 = pneg %p96
        %p231 = pneg %p93
        %p232 = scmp.lt.s32.totalorder %s23, 0
        %s233 = scalar_select %p232, %s23, 0
        %s234 = scalar_lea.vmem %s2, %s233
        %p235 = pneg %p122
        %p236 = pneg %p119
        %p237 = pneg %p152
        %p238 = pneg %p149
        %s239 = sand.u32 %s139, 1
        %s240 = scalar_lea.sflag [#allocation3], %s239
        %s241 = sand.u32 %s139, 1
        %s242 = smul.addr %s241, 128
        %s243 = scalar_lea.vmem [#allocation2], %s242
        %p244 = scmp.lt.s32.totalorder %s24, 1
        %s245 = scalar_select %p244, %s24, 1
        %p246 = scmp.lt.s32.totalorder %s25, 0
        %s247 = scalar_select %p246, %s25, 0
        %p248 = scmp.lt.s32.totalorder %s26, 0
        %s249 = scalar_select %p248, %s26, 0
        %s250 = smul.addr %s247, 43
        %s251 = sadd.s32 %s249, %s250
        %s252 = smul.addr %s245, 43
        %s253 = sadd.s32 %s251, %s252
        %s254 = smul.addr %s253, 4
        %s255 = scalar_lea.vmem %s0, %s254
        %p256 = scmp.lt.s32.totalorder %s26, 0
        %s257 = scalar_select %p256, %s26, 0
        %p258 = scmp.lt.s32.totalorder %s23, 0
        %s259 = scalar_select %p258, %s23, 0
        %s260 = sadd.s32 %s259, %s257
        %s261 = smul.addr %s260, 2
        %s262 = scalar_lea.vmem %s1, %s261
        %p263 = scmp.lt.s32.totalorder %s23, 0
        %s264 = scalar_select %p263, %s23, 0
        %s265 = scalar_lea.vmem %s2, %s264
        %v267 = vld [vmem:[%s262] sm:$0x3]
        %s268 = scalar_lea.vmem %s262, 2
        %v269 = vld [vmem:[%s268] sm:$0x3]
        %s270 = scalar_lea.vmem %s262, 4
        %v271 = vld [vmem:[%s270] sm:$0x3]
        %s272 = scalar_lea.vmem %s262, 6
        %v273 = vld [vmem:[%s272] sm:$0x3]
        %s274 = scalar_lea.vmem %s262, 8
        %v275 = vld [vmem:[%s274] sm:$0x3]
        %s276 = scalar_lea.vmem %s262, 10
        %v277 = vld [vmem:[%s276] sm:$0x3]
        %s278 = scalar_lea.vmem %s262, 12
        %v279 = vld [vmem:[%s278] sm:$0x3]
        %s280 = scalar_lea.vmem %s262, 14
        %v281 = vld [vmem:[%s280] sm:$0x3]
        %s282 = scalar_lea.vmem %s262, 16
        %v283 = vld [vmem:[%s282] sm:$0x3]
        %v284 = vld [vmem:[%s265] sm:$0x1]
        %v285 = vld [vmem:[%s255] sm:$0xf]
        %v286 = vld [vmem:[%s255 + $0x4] sm:$0xf]
        %v287 = vld [vmem:[%s255 + $0x8] sm:$0xf]
        %v288 = vld [vmem:[%s255 + $0xc] sm:$0xf]
        %v289 = vld [vmem:[%s255 + $0x10] sm:$0xf]
        %v290 = vld [vmem:[%s255 + $0x14] sm:$0xf]
        %v291 = vld [vmem:[%s255 + $0x18] sm:$0xf]
        %v292 = vld [vmem:[%s255 + $0x1c] sm:$0xf]
        %v293 = vld [vmem:[%s255 + $0x20] sm:$0xf]
        %v294 = vld [vmem:[%s255 + $0x24] sm:$0xf]
        %v295 = vld [vmem:[%s255 + $0x28] sm:$0xf]
        %v296 = vld [vmem:[%s255 + $0x2c] sm:$0xf]
        %v297 = vld [vmem:[%s255 + $0x30] sm:$0xf]
        %v298 = vld [vmem:[%s255 + $0x34] sm:$0xf]
        %v299 = vld [vmem:[%s255 + $0x38] sm:$0xf]
        %v300 = vld [vmem:[%s255 + $0x3c] sm:$0xf]
        %v301 = vld [vmem:[%s255 + $0x40] sm:$0xf]
        %v302 = vld [vmem:[%s255 + $0x44] sm:$0xf]
        %v303 = vld [vmem:[%s255 + $0x48] sm:$0xf]
        %v304 = vld [vmem:[%s255 + $0x4c] sm:$0xf]
        %v305 = vld [vmem:[%s255 + $0x50] sm:$0xf]
        %v306 = vld [vmem:[%s255 + $0x54] sm:$0xf]
        %v307 = vld [vmem:[%s255 + $0x58] sm:$0xf]
        %v308 = vld [vmem:[%s255 + $0x5c] sm:$0xf]
        %v309 = vld [vmem:[%s255 + $0x60] sm:$0xf]
        %v310 = vld [vmem:[%s255 + $0x64] sm:$0xf]
        %v311 = vld [vmem:[%s255 + $0x68] sm:$0xf]
        %v312 = vld [vmem:[%s255 + $0x6c] sm:$0xf]
        %v313 = vld [vmem:[%s255 + $0x70] sm:$0xf]
        %v314 = vld [vmem:[%s255 + $0x74] sm:$0xf]
        %v315 = vld [vmem:[%s255 + $0x78] sm:$0xf]
        %v316 = vld [vmem:[%s255 + $0x7c] sm:$0xf]
        %v317 = vld [vmem:[%s255 + $0x80] sm:$0xf]
        %v318 = vld [vmem:[%s255 + $0x84] sm:$0xf]
        %v319 = vld [vmem:[%s255 + $0x88] sm:$0xf]
        %v320 = vld [vmem:[%s255 + $0x8c] sm:$0xf]
        %v321 = vld [vmem:[%s255 + $0x90] sm:$0x1]
        %v359 = vunpack.c.l.b16 %v285
        %v360 = vunpack.c.l.b16 %v286
        %v361 = vunpack.c.l.b16 %v287
        %v362 = vunpack.c.l.b16 %v288
        %v363 = vunpack.c.l.b16 %v289
        %v364 = vunpack.c.l.b16 %v290
        %v365 = vunpack.c.l.b16 %v291
        %v366 = vunpack.c.l.b16 %v292
        %v367 = vunpack.c.l.b16 %v293
        %v368 = vunpack.c.l.b16 %v294
        %v369 = vunpack.c.l.b16 %v295
        %v370 = vunpack.c.l.b16 %v296
        %v371 = vunpack.c.l.b16 %v297
        %v372 = vunpack.c.l.b16 %v298
        %v373 = vunpack.c.l.b16 %v299
        %v374 = vunpack.c.l.b16 %v300
        %v375 = vunpack.c.l.b16 %v301
        %v376 = vunpack.c.l.b16 %v302
        %v377 = vunpack.c.l.b16 %v303
        %v378 = vunpack.c.l.b16 %v304
        %v379 = vunpack.c.l.b16 %v305
        %v380 = vunpack.c.l.b16 %v306
        %v381 = vunpack.c.l.b16 %v307
        %v382 = vunpack.c.l.b16 %v308
        %v383 = vunpack.c.l.b16 %v309
        %v384 = vunpack.c.l.b16 %v310
        %v385 = vunpack.c.l.b16 %v311
        %v386 = vunpack.c.l.b16 %v312
        %v387 = vunpack.c.l.b16 %v313
        %v388 = vunpack.c.l.b16 %v314
        %v389 = vunpack.c.l.b16 %v315
        %v390 = vunpack.c.l.b16 %v316
        %v391 = vunpack.c.l.b16 %v317
        %v392 = vunpack.c.l.b16 %v318
        %v393 = vunpack.c.l.b16 %v319
        %v394 = vunpack.c.l.b16 %v320
        %v395 = vunpack.c.l.b16 %v321
        %v396 = vpack.c.b16 %v360, %v359
        %v397 = vpack.c.b16 %v362, %v361
        %v398 = vpack.c.b16 %v364, %v363
        %v399 = vpack.c.b16 %v366, %v365
        %v400 = vpack.c.b16 %v368, %v367
        %v401 = vpack.c.b16 %v370, %v369
        %v402 = vpack.c.b16 %v372, %v371
        %v403 = vpack.c.b16 %v374, %v373
        %v404 = vpack.c.b16 %v376, %v375
        %v405 = vpack.c.b16 %v378, %v377
        %v406 = vpack.c.b16 %v380, %v379
        %v407 = vpack.c.b16 %v382, %v381
        %v408 = vpack.c.b16 %v384, %v383
        %v409 = vpack.c.b16 %v386, %v385
        %v410 = vpack.c.b16 %v388, %v387
        %v411 = vpack.c.b16 %v390, %v389
        %v412 = vpack.c.b16 %v392, %v391
        %v413 = vpack.c.b16 %v394, %v393
        %v414 = vpack.c.b16 %v395, %v395
        %vm415 = vsmask.f32 7424
        %v417 = vshrl.u32 %v396, 16
        %v419 = vshll.u32 %v396, 16
        %v421 = vrot.slane %v419, 1
        %v422 = vor.u32 %v417, %v421
        %v424 = vshll.u32 %v397, 16
        %v426 = vrot.slane %v424, 1
        %v427 = vsel %vm415, %v422, %v426
        %v428 = vshrl.u32 %v397, 16
        %v430 = vor.u32 %v428, %v426
        %v432 = vshll.u32 %v398, 16
        %v434 = vrot.slane %v432, 1
        %v435 = vsel %vm415, %v430, %v434
        %v436 = vshrl.u32 %v398, 16
        %v438 = vor.u32 %v436, %v434
        %v440 = vshll.u32 %v399, 16
        %v442 = vrot.slane %v440, 1
        %v443 = vsel %vm415, %v438, %v442
        %v444 = vshrl.u32 %v399, 16
        %v446 = vor.u32 %v444, %v442
        %v448 = vshll.u32 %v400, 16
        %v450 = vrot.slane %v448, 1
        %v451 = vsel %vm415, %v446, %v450
        %v452 = vshrl.u32 %v400, 16
        %v454 = vor.u32 %v452, %v450
        %v456 = vshll.u32 %v401, 16
        %v458 = vrot.slane %v456, 1
        %v459 = vsel %vm415, %v454, %v458
        %v460 = vshrl.u32 %v401, 16
        %v462 = vor.u32 %v460, %v458
        %v464 = vshll.u32 %v402, 16
        %v466 = vrot.slane %v464, 1
        %v467 = vsel %vm415, %v462, %v466
        %v468 = vshrl.u32 %v402, 16
        %v470 = vor.u32 %v468, %v466
        %v472 = vshll.u32 %v403, 16
        %v474 = vrot.slane %v472, 1
        %v475 = vsel %vm415, %v470, %v474
        %v476 = vshrl.u32 %v403, 16
        %v478 = vor.u32 %v476, %v474
        %v480 = vshll.u32 %v404, 16
        %v482 = vrot.slane %v480, 1
        %v483 = vsel %vm415, %v478, %v482
        %v484 = vshrl.u32 %v404, 16
        %v486 = vor.u32 %v484, %v482
        %v488 = vshll.u32 %v405, 16
        %v490 = vrot.slane %v488, 1
        %v491 = vsel %vm415, %v486, %v490
        %v492 = vshrl.u32 %v405, 16
        %v494 = vor.u32 %v492, %v490
        %v496 = vshll.u32 %v406, 16
        %v498 = vrot.slane %v496, 1
        %v499 = vsel %vm415, %v494, %v498
        %v500 = vshrl.u32 %v406, 16
        %v502 = vor.u32 %v500, %v498
        %v504 = vshll.u32 %v407, 16
        %v506 = vrot.slane %v504, 1
        %v507 = vsel %vm415, %v502, %v506
        %v508 = vshrl.u32 %v407, 16
        %v510 = vor.u32 %v508, %v506
        %v512 = vshll.u32 %v408, 16
        %v514 = vrot.slane %v512, 1
        %v515 = vsel %vm415, %v510, %v514
        %v516 = vshrl.u32 %v408, 16
        %v518 = vor.u32 %v516, %v514
        %v520 = vshll.u32 %v409, 16
        %v522 = vrot.slane %v520, 1
        %v523 = vsel %vm415, %v518, %v522
        %v524 = vshrl.u32 %v409, 16
        %v526 = vor.u32 %v524, %v522
        %v528 = vshll.u32 %v410, 16
        %v530 = vrot.slane %v528, 1
        %v531 = vsel %vm415, %v526, %v530
        %v532 = vshrl.u32 %v410, 16
        %v534 = vor.u32 %v532, %v530
        %v536 = vshll.u32 %v411, 16
        %v538 = vrot.slane %v536, 1
        %v539 = vsel %vm415, %v534, %v538
        %v540 = vshrl.u32 %v411, 16
        %v542 = vor.u32 %v540, %v538
        %v544 = vshll.u32 %v412, 16
        %v546 = vrot.slane %v544, 1
        %v547 = vsel %vm415, %v542, %v546
        %v548 = vshrl.u32 %v412, 16
        %v550 = vor.u32 %v548, %v546
        %v552 = vshll.u32 %v413, 16
        %v554 = vrot.slane %v552, 1
        %v555 = vsel %vm415, %v550, %v554
        %v556 = vshrl.u32 %v413, 16
        %v558 = vor.u32 %v556, %v554
        %v560 = vshll.u32 %v414, 16
        %v562 = vrot.slane %v560, 1
        %v563 = vsel %vm415, %v558, %v562
        %vm564 = vcmask 23552
        %v566 = vsel %vm564, %v427, 0
        %v569 = vsel %vm564, %v435, 0
        %v572 = vsel %vm564, %v443, 0
        %v575 = vsel %vm564, %v451, 0
        %v578 = vsel %vm564, %v459, 0
        %v581 = vsel %vm564, %v467, 0
        %v584 = vsel %vm564, %v475, 0
        %v587 = vsel %vm564, %v483, 0
        %v590 = vsel %vm564, %v491, 0
        %v593 = vsel %vm564, %v499, 0
        %v596 = vsel %vm564, %v507, 0
        %v599 = vsel %vm564, %v515, 0
        %v602 = vsel %vm564, %v523, 0
        %v605 = vsel %vm564, %v531, 0
        %v608 = vsel %vm564, %v539, 0
        %v611 = vsel %vm564, %v547, 0
        %v614 = vsel %vm564, %v555, 0
        %v617 = vsel %vm564, %v563, 0
        %vm619 = vcmask 1040384
        %vm620 = vcmask 1041408
        %v621 = vsel %vm619, 4294967295, 65535
        %v622 = vsel %vm620, %v621, 0
        %v624 = vand.u32 %v269, %v622
        %626 = vmatpush.bf16.msra.mxu0 0
        %627 = vmatpush.bf16.msra.mxu0 0
        %628 = vmatpush.bf16.msra.mxu0 0
        %629 = vmatpush.bf16.msra.mxu0 0
        %630 = vmatpush.bf16.msra.mxu0 0
        %631 = vmatpush.bf16.msra.mxu0 0
        %632 = vmatpush.bf16.msra.mxu0 0
        %633 = vmatpush.bf16.msra.mxu0 %v624
        %634 = vmatmul.bf16.gmra.mxu0 %v566
        %v635 = vpop.f32.mrf.mxu0
        %v636 = vadd.f32 0.0, %v635
        %v637 = vpop.f32.mrf.mxu0
        %v638 = vadd.f32 0.0, %v637
        %639 = vmatmul.bf16.gmra.mxu0 %v569
        %v640 = vpop.f32.mrf.mxu0
        %v641 = vadd.f32 0.0, %v640
        %v642 = vpop.f32.mrf.mxu0
        %v643 = vadd.f32 0.0, %v642
        %644 = vmatmul.bf16.gmra.mxu0 %v572
        %v645 = vpop.f32.mrf.mxu0
        %v646 = vadd.f32 0.0, %v645
        %v647 = vpop.f32.mrf.mxu0
        %v648 = vadd.f32 0.0, %v647
        %649 = vmatmul.bf16.gmra.mxu0 %v575
        %v650 = vpop.f32.mrf.mxu0
        %v651 = vadd.f32 0.0, %v650
        %v652 = vpop.f32.mrf.mxu0
        %v653 = vadd.f32 0.0, %v652
        %654 = vmatmul.bf16.gmra.mxu0 %v578
        %v655 = vpop.f32.mrf.mxu0
        %v656 = vadd.f32 0.0, %v655
        %v657 = vpop.f32.mrf.mxu0
        %v658 = vadd.f32 0.0, %v657
        %659 = vmatmul.bf16.gmra.mxu0 %v581
        %v660 = vpop.f32.mrf.mxu0
        %v661 = vadd.f32 0.0, %v660
        %v662 = vpop.f32.mrf.mxu0
        %v663 = vadd.f32 0.0, %v662
        %664 = vmatmul.bf16.gmra.mxu0 %v584
        %v665 = vpop.f32.mrf.mxu0
        %v666 = vadd.f32 0.0, %v665
        %v667 = vpop.f32.mrf.mxu0
        %v668 = vadd.f32 0.0, %v667
        %669 = vmatmul.bf16.gmra.mxu0 %v587
        %v670 = vpop.f32.mrf.mxu0
        %v671 = vadd.f32 0.0, %v670
        %v672 = vpop.f32.mrf.mxu0
        %v673 = vadd.f32 0.0, %v672
        %674 = vmatmul.bf16.gmra.mxu0 %v590
        %v675 = vpop.f32.mrf.mxu0
        %v676 = vadd.f32 0.0, %v675
        %v677 = vpop.f32.mrf.mxu0
        %v678 = vadd.f32 0.0, %v677
        %679 = vmatmul.bf16.gmra.mxu0 %v593
        %v680 = vpop.f32.mrf.mxu0
        %v681 = vadd.f32 0.0, %v680
        %v682 = vpop.f32.mrf.mxu0
        %v683 = vadd.f32 0.0, %v682
        %684 = vmatmul.bf16.gmra.mxu0 %v596
        %v685 = vpop.f32.mrf.mxu0
        %v686 = vadd.f32 0.0, %v685
        %v687 = vpop.f32.mrf.mxu0
        %v688 = vadd.f32 0.0, %v687
        %689 = vmatmul.bf16.gmra.mxu0 %v599
        %v690 = vpop.f32.mrf.mxu0
        %v691 = vadd.f32 0.0, %v690
        %v692 = vpop.f32.mrf.mxu0
        %v693 = vadd.f32 0.0, %v692
        %694 = vmatmul.bf16.gmra.mxu0 %v602
        %v695 = vpop.f32.mrf.mxu0
        %v696 = vadd.f32 0.0, %v695
        %v697 = vpop.f32.mrf.mxu0
        %v698 = vadd.f32 0.0, %v697
        %699 = vmatmul.bf16.gmra.mxu0 %v605
        %v700 = vpop.f32.mrf.mxu0
        %v701 = vadd.f32 0.0, %v700
        %v702 = vpop.f32.mrf.mxu0
        %v703 = vadd.f32 0.0, %v702
        %704 = vmatmul.bf16.gmra.mxu0 %v608
        %v705 = vpop.f32.mrf.mxu0
        %v706 = vadd.f32 0.0, %v705
        %v707 = vpop.f32.mrf.mxu0
        %v708 = vadd.f32 0.0, %v707
        %709 = vmatmul.bf16.gmra.mxu0 %v611
        %v710 = vpop.f32.mrf.mxu0
        %v711 = vadd.f32 0.0, %v710
        %v712 = vpop.f32.mrf.mxu0
        %v713 = vadd.f32 0.0, %v712
        %714 = vmatmul.bf16.gmra.mxu0 %v614
        %v715 = vpop.f32.mrf.mxu0
        %v716 = vadd.f32 0.0, %v715
        %v717 = vpop.f32.mrf.mxu0
        %v718 = vadd.f32 0.0, %v717
        %719 = vmatmul.bf16.gmra.mxu0 %v617
        %v720 = vpop.f32.mrf.mxu0
        %v721 = vadd.f32 0.0, %v720
        %v722 = vpop.f32.mrf.mxu0
        %v723 = vadd.f32 0.0, %v722
        %724 = vdwg.mxu0
        %v725 = vsel %vm564, %v396, 0
        %v727 = vsel %vm564, %v397, 0
        %v729 = vsel %vm564, %v398, 0
        %v731 = vsel %vm564, %v399, 0
        %v733 = vsel %vm564, %v400, 0
        %v735 = vsel %vm564, %v401, 0
        %v737 = vsel %vm564, %v402, 0
        %v739 = vsel %vm564, %v403, 0
        %v741 = vsel %vm564, %v404, 0
        %v743 = vsel %vm564, %v405, 0
        %v745 = vsel %vm564, %v406, 0
        %v747 = vsel %vm564, %v407, 0
        %v749 = vsel %vm564, %v408, 0
        %v751 = vsel %vm564, %v409, 0
        %v753 = vsel %vm564, %v410, 0
        %v755 = vsel %vm564, %v411, 0
        %v757 = vsel %vm564, %v412, 0
        %v759 = vsel %vm564, %v413, 0
        %v762 = vand.u32 %v267, %v622
        %764 = vmatpush.bf16.msra.mxu0 0
        %765 = vmatpush.bf16.msra.mxu0 0
        %766 = vmatpush.bf16.msra.mxu0 0
        %767 = vmatpush.bf16.msra.mxu0 0
        %768 = vmatpush.bf16.msra.mxu0 0
        %769 = vmatpush.bf16.msra.mxu0 0
        %770 = vmatpush.bf16.msra.mxu0 0
        %771 = vmatpush.bf16.msra.mxu0 %v762
        %772 = vmatmul.bf16.gmra.mxu0 %v725
        %v773 = vpop.f32.mrf.mxu0
        %v774 = vadd.f32 %v636, %v773
        %v775 = vpop.f32.mrf.mxu0
        %v776 = vadd.f32 %v638, %v775
        %777 = vmatmul.bf16.gmra.mxu0 %v727
        %v778 = vpop.f32.mrf.mxu0
        %v779 = vadd.f32 %v641, %v778
        %v780 = vpop.f32.mrf.mxu0
        %v781 = vadd.f32 %v643, %v780
        %782 = vmatmul.bf16.gmra.mxu0 %v729
        %v783 = vpop.f32.mrf.mxu0
        %v784 = vadd.f32 %v646, %v783
        %v785 = vpop.f32.mrf.mxu0
        %v786 = vadd.f32 %v648, %v785
        %787 = vmatmul.bf16.gmra.mxu0 %v731
        %v788 = vpop.f32.mrf.mxu0
        %v789 = vadd.f32 %v651, %v788
        %v790 = vpop.f32.mrf.mxu0
        %v791 = vadd.f32 %v653, %v790
        %792 = vmatmul.bf16.gmra.mxu0 %v733
        %v793 = vpop.f32.mrf.mxu0
        %v794 = vadd.f32 %v656, %v793
        %v795 = vpop.f32.mrf.mxu0
        %v796 = vadd.f32 %v658, %v795
        %797 = vmatmul.bf16.gmra.mxu0 %v735
        %v798 = vpop.f32.mrf.mxu0
        %v799 = vadd.f32 %v661, %v798
        %v800 = vpop.f32.mrf.mxu0
        %v801 = vadd.f32 %v663, %v800
        %802 = vmatmul.bf16.gmra.mxu0 %v737
        %v803 = vpop.f32.mrf.mxu0
        %v804 = vadd.f32 %v666, %v803
        %v805 = vpop.f32.mrf.mxu0
        %v806 = vadd.f32 %v668, %v805
        %807 = vmatmul.bf16.gmra.mxu0 %v739
        %v808 = vpop.f32.mrf.mxu0
        %v809 = vadd.f32 %v671, %v808
        %v810 = vpop.f32.mrf.mxu0
        %v811 = vadd.f32 %v673, %v810
        %812 = vmatmul.bf16.gmra.mxu0 %v741
        %v813 = vpop.f32.mrf.mxu0
        %v814 = vadd.f32 %v676, %v813
        %v815 = vpop.f32.mrf.mxu0
        %v816 = vadd.f32 %v678, %v815
        %817 = vmatmul.bf16.gmra.mxu0 %v743
        %v818 = vpop.f32.mrf.mxu0
        %v819 = vadd.f32 %v681, %v818
        %v820 = vpop.f32.mrf.mxu0
        %v821 = vadd.f32 %v683, %v820
        %822 = vmatmul.bf16.gmra.mxu0 %v745
        %v823 = vpop.f32.mrf.mxu0
        %v824 = vadd.f32 %v686, %v823
        %v825 = vpop.f32.mrf.mxu0
        %v826 = vadd.f32 %v688, %v825
        %827 = vmatmul.bf16.gmra.mxu0 %v747
        %v828 = vpop.f32.mrf.mxu0
        %v829 = vadd.f32 %v691, %v828
        %v830 = vpop.f32.mrf.mxu0
        %v831 = vadd.f32 %v693, %v830
        %832 = vmatmul.bf16.gmra.mxu0 %v749
        %v833 = vpop.f32.mrf.mxu0
        %v834 = vadd.f32 %v696, %v833
        %v835 = vpop.f32.mrf.mxu0
        %v836 = vadd.f32 %v698, %v835
        %837 = vmatmul.bf16.gmra.mxu0 %v751
        %v838 = vpop.f32.mrf.mxu0
        %v839 = vadd.f32 %v701, %v838
        %v840 = vpop.f32.mrf.mxu0
        %v841 = vadd.f32 %v703, %v840
        %842 = vmatmul.bf16.gmra.mxu0 %v753
        %v843 = vpop.f32.mrf.mxu0
        %v844 = vadd.f32 %v706, %v843
        %v845 = vpop.f32.mrf.mxu0
        %v846 = vadd.f32 %v708, %v845
        %847 = vmatmul.bf16.gmra.mxu0 %v755
        %v848 = vpop.f32.mrf.mxu0
        %v849 = vadd.f32 %v711, %v848
        %v850 = vpop.f32.mrf.mxu0
        %v851 = vadd.f32 %v713, %v850
        %852 = vmatmul.bf16.gmra.mxu0 %v757
        %v853 = vpop.f32.mrf.mxu0
        %v854 = vadd.f32 %v716, %v853
        %v855 = vpop.f32.mrf.mxu0
        %v856 = vadd.f32 %v718, %v855
        %857 = vmatmul.bf16.gmra.mxu0 %v759
        %v858 = vpop.f32.mrf.mxu0
        %v859 = vadd.f32 %v721, %v858
        %v860 = vpop.f32.mrf.mxu0
        %v861 = vadd.f32 %v723, %v860
        %862 = vdwg.mxu0
        %v863 = vld [vmem:[%s255] sm:$0xe]
        %v865 = vunpack.c.l.b16 %v863
        %v866 = vpack.c.b16 %v360, %v865
        %vm867 = vcmask 1046528
        %v868 = vrot.slane %v866, 1
        %v869 = vrot.slane %v397, 1
        %v870 = vsel %vm867, %v868, %v869
        %v871 = vrot.slane %v398, 1
        %v872 = vsel %vm867, %v869, %v871
        %v873 = vrot.slane %v399, 1
        %v874 = vsel %vm867, %v871, %v873
        %v875 = vrot.slane %v400, 1
        %v876 = vsel %vm867, %v873, %v875
        %v877 = vrot.slane %v401, 1
        %v878 = vsel %vm867, %v875, %v877
        %v879 = vrot.slane %v402, 1
        %v880 = vsel %vm867, %v877, %v879
        %v881 = vrot.slane %v403, 1
        %v882 = vsel %vm867, %v879, %v881
        %v883 = vrot.slane %v404, 1
        %v884 = vsel %vm867, %v881, %v883
        %v885 = vrot.slane %v405, 1
        %v886 = vsel %vm867, %v883, %v885
        %v887 = vrot.slane %v406, 1
        %v888 = vsel %vm867, %v885, %v887
        %v889 = vrot.slane %v407, 1
        %v890 = vsel %vm867, %v887, %v889
        %v891 = vrot.slane %v408, 1
        %v892 = vsel %vm867, %v889, %v891
        %v893 = vrot.slane %v409, 1
        %v894 = vsel %vm867, %v891, %v893
        %v895 = vrot.slane %v410, 1
        %v896 = vsel %vm867, %v893, %v895
        %v897 = vrot.slane %v411, 1
        %v898 = vsel %vm867, %v895, %v897
        %v899 = vrot.slane %v412, 1
        %v900 = vsel %vm867, %v897, %v899
        %v901 = vrot.slane %v413, 1
        %v902 = vsel %vm867, %v899, %v901
        %v903 = vrot.slane %v414, 1
        %v904 = vsel %vm867, %v901, %v903
        %v906 = vsel %vm564, %v870, 0
        %v909 = vsel %vm564, %v872, 0
        %v912 = vsel %vm564, %v874, 0
        %v915 = vsel %vm564, %v876, 0
        %v918 = vsel %vm564, %v878, 0
        %v921 = vsel %vm564, %v880, 0
        %v924 = vsel %vm564, %v882, 0
        %v927 = vsel %vm564, %v884, 0
        %v930 = vsel %vm564, %v886, 0
        %v933 = vsel %vm564, %v888, 0
        %v936 = vsel %vm564, %v890, 0
        %v939 = vsel %vm564, %v892, 0
        %v942 = vsel %vm564, %v894, 0
        %v945 = vsel %vm564, %v896, 0
        %v948 = vsel %vm564, %v898, 0
        %v951 = vsel %vm564, %v900, 0
        %v954 = vsel %vm564, %v902, 0
        %v957 = vsel %vm564, %v904, 0
        %v960 = vand.u32 %v271, %v622
        %962 = vmatpush.bf16.msra.mxu0 0
        %963 = vmatpush.bf16.msra.mxu0 0
        %964 = vmatpush.bf16.msra.mxu0 0
        %965 = vmatpush.bf16.msra.mxu0 0
        %966 = vmatpush.bf16.msra.mxu0 0
        %967 = vmatpush.bf16.msra.mxu0 0
        %968 = vmatpush.bf16.msra.mxu0 0
        %969 = vmatpush.bf16.msra.mxu0 %v960
        %970 = vmatmul.bf16.gmra.mxu0 %v906
        %v971 = vpop.f32.mrf.mxu0
        %v972 = vadd.f32 0.0, %v971
        %v973 = vpop.f32.mrf.mxu0
        %v974 = vadd.f32 0.0, %v973
        %975 = vmatmul.bf16.gmra.mxu0 %v909
        %v976 = vpop.f32.mrf.mxu0
        %v977 = vadd.f32 0.0, %v976
        %v978 = vpop.f32.mrf.mxu0
        %v979 = vadd.f32 0.0, %v978
        %980 = vmatmul.bf16.gmra.mxu0 %v912
        %v981 = vpop.f32.mrf.mxu0
        %v982 = vadd.f32 0.0, %v981
        %v983 = vpop.f32.mrf.mxu0
        %v984 = vadd.f32 0.0, %v983
        %985 = vmatmul.bf16.gmra.mxu0 %v915
        %v986 = vpop.f32.mrf.mxu0
        %v987 = vadd.f32 0.0, %v986
        %v988 = vpop.f32.mrf.mxu0
        %v989 = vadd.f32 0.0, %v988
        %990 = vmatmul.bf16.gmra.mxu0 %v918
        %v991 = vpop.f32.mrf.mxu0
        %v992 = vadd.f32 0.0, %v991
        %v993 = vpop.f32.mrf.mxu0
        %v994 = vadd.f32 0.0, %v993
        %995 = vmatmul.bf16.gmra.mxu0 %v921
        %v996 = vpop.f32.mrf.mxu0
        %v997 = vadd.f32 0.0, %v996
        %v998 = vpop.f32.mrf.mxu0
        %v999 = vadd.f32 0.0, %v998
        %1000 = vmatmul.bf16.gmra.mxu0 %v924
        %v1001 = vpop.f32.mrf.mxu0
        %v1002 = vadd.f32 0.0, %v1001
        %v1003 = vpop.f32.mrf.mxu0
        %v1004 = vadd.f32 0.0, %v1003
        %1005 = vmatmul.bf16.gmra.mxu0 %v927
        %v1006 = vpop.f32.mrf.mxu0
        %v1007 = vadd.f32 0.0, %v1006
        %v1008 = vpop.f32.mrf.mxu0
        %v1009 = vadd.f32 0.0, %v1008
        %1010 = vmatmul.bf16.gmra.mxu0 %v930
        %v1011 = vpop.f32.mrf.mxu0
        %v1012 = vadd.f32 0.0, %v1011
        %v1013 = vpop.f32.mrf.mxu0
        %v1014 = vadd.f32 0.0, %v1013
        %1015 = vmatmul.bf16.gmra.mxu0 %v933
        %v1016 = vpop.f32.mrf.mxu0
        %v1017 = vadd.f32 0.0, %v1016
        %v1018 = vpop.f32.mrf.mxu0
        %v1019 = vadd.f32 0.0, %v1018
        %1020 = vmatmul.bf16.gmra.mxu0 %v936
        %v1021 = vpop.f32.mrf.mxu0
        %v1022 = vadd.f32 0.0, %v1021
        %v1023 = vpop.f32.mrf.mxu0
        %v1024 = vadd.f32 0.0, %v1023
        %1025 = vmatmul.bf16.gmra.mxu0 %v939
        %v1026 = vpop.f32.mrf.mxu0
        %v1027 = vadd.f32 0.0, %v1026
        %v1028 = vpop.f32.mrf.mxu0
        %v1029 = vadd.f32 0.0, %v1028
        %1030 = vmatmul.bf16.gmra.mxu0 %v942
        %v1031 = vpop.f32.mrf.mxu0
        %v1032 = vadd.f32 0.0, %v1031
        %v1033 = vpop.f32.mrf.mxu0
        %v1034 = vadd.f32 0.0, %v1033
        %1035 = vmatmul.bf16.gmra.mxu0 %v945
        %v1036 = vpop.f32.mrf.mxu0
        %v1037 = vadd.f32 0.0, %v1036
        %v1038 = vpop.f32.mrf.mxu0
        %v1039 = vadd.f32 0.0, %v1038
        %1040 = vmatmul.bf16.gmra.mxu0 %v948
        %v1041 = vpop.f32.mrf.mxu0
        %v1042 = vadd.f32 0.0, %v1041
        %v1043 = vpop.f32.mrf.mxu0
        %v1044 = vadd.f32 0.0, %v1043
        %1045 = vmatmul.bf16.gmra.mxu0 %v951
        %v1046 = vpop.f32.mrf.mxu0
        %v1047 = vadd.f32 0.0, %v1046
        %v1048 = vpop.f32.mrf.mxu0
        %v1049 = vadd.f32 0.0, %v1048
        %1050 = vmatmul.bf16.gmra.mxu0 %v954
        %v1051 = vpop.f32.mrf.mxu0
        %v1052 = vadd.f32 0.0, %v1051
        %v1053 = vpop.f32.mrf.mxu0
        %v1054 = vadd.f32 0.0, %v1053
        %1055 = vmatmul.bf16.gmra.mxu0 %v957
        %v1056 = vpop.f32.mrf.mxu0
        %v1057 = vadd.f32 0.0, %v1056
        %v1058 = vpop.f32.mrf.mxu0
        %v1059 = vadd.f32 0.0, %v1058
        %1060 = vdwg.mxu0
        %v1061 = vadd.f32 %v774, %v972
        %v1062 = vadd.f32 %v776, %v974
        %v1063 = vadd.f32 %v779, %v977
        %v1064 = vadd.f32 %v781, %v979
        %v1065 = vadd.f32 %v784, %v982
        %v1066 = vadd.f32 %v786, %v984
        %v1067 = vadd.f32 %v789, %v987
        %v1068 = vadd.f32 %v791, %v989
        %v1069 = vadd.f32 %v794, %v992
        %v1070 = vadd.f32 %v796, %v994
        %v1071 = vadd.f32 %v799, %v997
        %v1072 = vadd.f32 %v801, %v999
        %v1073 = vadd.f32 %v804, %v1002
        %v1074 = vadd.f32 %v806, %v1004
        %v1075 = vadd.f32 %v809, %v1007
        %v1076 = vadd.f32 %v811, %v1009
        %v1077 = vadd.f32 %v814, %v1012
        %v1078 = vadd.f32 %v816, %v1014
        %v1079 = vadd.f32 %v819, %v1017
        %v1080 = vadd.f32 %v821, %v1019
        %v1081 = vadd.f32 %v824, %v1022
        %v1082 = vadd.f32 %v826, %v1024
        %v1083 = vadd.f32 %v829, %v1027
        %v1084 = vadd.f32 %v831, %v1029
        %v1085 = vadd.f32 %v834, %v1032
        %v1086 = vadd.f32 %v836, %v1034
        %v1087 = vadd.f32 %v839, %v1037
        %v1088 = vadd.f32 %v841, %v1039
        %v1089 = vadd.f32 %v844, %v1042
        %v1090 = vadd.f32 %v846, %v1044
        %v1091 = vadd.f32 %v849, %v1047
        %v1092 = vadd.f32 %v851, %v1049
        %v1093 = vadd.f32 %v854, %v1052
        %v1094 = vadd.f32 %v856, %v1054
        %v1095 = vadd.f32 %v859, %v1057
        %v1096 = vadd.f32 %v861, %v1059
        %v1097 = vld [vmem:[%s255 + $0x8] sm:$0xe]
        %v1098 = vld [vmem:[%s255 + $0xc] sm:$0xf]
        %v1099 = vld [vmem:[%s255 + $0x10] sm:$0xf]
        %v1100 = vld [vmem:[%s255 + $0x14] sm:$0xf]
        %v1101 = vld [vmem:[%s255 + $0x18] sm:$0xf]
        %v1102 = vld [vmem:[%s255 + $0x1c] sm:$0xf]
        %v1103 = vld [vmem:[%s255 + $0x20] sm:$0xf]
        %v1104 = vld [vmem:[%s255 + $0x24] sm:$0xf]
        %v1105 = vld [vmem:[%s255 + $0x28] sm:$0xf]
        %v1106 = vld [vmem:[%s255 + $0x2c] sm:$0xf]
        %v1107 = vld [vmem:[%s255 + $0x30] sm:$0xf]
        %v1108 = vld [vmem:[%s255 + $0x34] sm:$0xf]
        %v1109 = vld [vmem:[%s255 + $0x38] sm:$0xf]
        %v1110 = vld [vmem:[%s255 + $0x3c] sm:$0xf]
        %v1111 = vld [vmem:[%s255 + $0x40] sm:$0xf]
        %v1112 = vld [vmem:[%s255 + $0x44] sm:$0xf]
        %v1113 = vld [vmem:[%s255 + $0x48] sm:$0xf]
        %v1114 = vld [vmem:[%s255 + $0x4c] sm:$0xf]
        %v1115 = vld [vmem:[%s255 + $0x50] sm:$0xf]
        %v1116 = vld [vmem:[%s255 + $0x54] sm:$0xf]
        %v1117 = vld [vmem:[%s255 + $0x58] sm:$0xf]
        %v1118 = vld [vmem:[%s255 + $0x5c] sm:$0xf]
        %v1119 = vld [vmem:[%s255 + $0x60] sm:$0xf]
        %v1120 = vld [vmem:[%s255 + $0x64] sm:$0xf]
        %v1121 = vld [vmem:[%s255 + $0x68] sm:$0xf]
        %v1122 = vld [vmem:[%s255 + $0x6c] sm:$0xf]
        %v1123 = vld [vmem:[%s255 + $0x70] sm:$0xf]
        %v1124 = vld [vmem:[%s255 + $0x74] sm:$0xf]
        %v1125 = vld [vmem:[%s255 + $0x78] sm:$0xf]
        %v1126 = vld [vmem:[%s255 + $0x7c] sm:$0xf]
        %v1127 = vld [vmem:[%s255 + $0x80] sm:$0xf]
        %v1128 = vld [vmem:[%s255 + $0x84] sm:$0xf]
        %v1129 = vld [vmem:[%s255 + $0x88] sm:$0xf]
        %v1130 = vld [vmem:[%s255 + $0x8c] sm:$0xf]
        %v1131 = vld [vmem:[%s255 + $0x90] sm:$0xf]
        %v1132 = vld [vmem:[%s255 + $0x94] sm:$0xf]
        %v1133 = vld [vmem:[%s255 + $0x98] sm:$0x1]
        %v1171 = vunpack.c.l.b16 %v1097
        %v1172 = vunpack.c.l.b16 %v1098
        %v1173 = vunpack.c.l.b16 %v1099
        %v1174 = vunpack.c.l.b16 %v1100
        %v1175 = vunpack.c.l.b16 %v1101
        %v1176 = vunpack.c.l.b16 %v1102
        %v1177 = vunpack.c.l.b16 %v1103
        %v1178 = vunpack.c.l.b16 %v1104
        %v1179 = vunpack.c.l.b16 %v1105
        %v1180 = vunpack.c.l.b16 %v1106
        %v1181 = vunpack.c.l.b16 %v1107
        %v1182 = vunpack.c.l.b16 %v1108
        %v1183 = vunpack.c.l.b16 %v1109
        %v1184 = vunpack.c.l.b16 %v1110
        %v1185 = vunpack.c.l.b16 %v1111
        %v1186 = vunpack.c.l.b16 %v1112
        %v1187 = vunpack.c.l.b16 %v1113
        %v1188 = vunpack.c.l.b16 %v1114
        %v1189 = vunpack.c.l.b16 %v1115
        %v1190 = vunpack.c.l.b16 %v1116
        %v1191 = vunpack.c.l.b16 %v1117
        %v1192 = vunpack.c.l.b16 %v1118
        %v1193 = vunpack.c.l.b16 %v1119
        %v1194 = vunpack.c.l.b16 %v1120
        %v1195 = vunpack.c.l.b16 %v1121
        %v1196 = vunpack.c.l.b16 %v1122
        %v1197 = vunpack.c.l.b16 %v1123
        %v1198 = vunpack.c.l.b16 %v1124
        %v1199 = vunpack.c.l.b16 %v1125
        %v1200 = vunpack.c.l.b16 %v1126
        %v1201 = vunpack.c.l.b16 %v1127
        %v1202 = vunpack.c.l.b16 %v1128
        %v1203 = vunpack.c.l.b16 %v1129
        %v1204 = vunpack.c.l.b16 %v1130
        %v1205 = vunpack.c.l.b16 %v1131
        %v1206 = vunpack.c.l.b16 %v1132
        %v1207 = vunpack.c.l.b16 %v1133
        %v1208 = vpack.c.b16 %v1172, %v1171
        %v1209 = vpack.c.b16 %v1174, %v1173
        %v1210 = vpack.c.b16 %v1176, %v1175
        %v1211 = vpack.c.b16 %v1178, %v1177
        %v1212 = vpack.c.b16 %v1180, %v1179
        %v1213 = vpack.c.b16 %v1182, %v1181
        %v1214 = vpack.c.b16 %v1184, %v1183
        %v1215 = vpack.c.b16 %v1186, %v1185
        %v1216 = vpack.c.b16 %v1188, %v1187
        %v1217 = vpack.c.b16 %v1190, %v1189
        %v1218 = vpack.c.b16 %v1192, %v1191
        %v1219 = vpack.c.b16 %v1194, %v1193
        %v1220 = vpack.c.b16 %v1196, %v1195
        %v1221 = vpack.c.b16 %v1198, %v1197
        %v1222 = vpack.c.b16 %v1200, %v1199
        %v1223 = vpack.c.b16 %v1202, %v1201
        %v1224 = vpack.c.b16 %v1204, %v1203
        %v1225 = vpack.c.b16 %v1206, %v1205
        %v1226 = vpack.c.b16 %v1207, %v1207
        %v1227 = vrot.slane %v1208, 1
        %v1228 = vrot.slane %v1209, 1
        %v1229 = vsel %vm867, %v1227, %v1228
        %v1230 = vrot.slane %v1210, 1
        %v1231 = vsel %vm867, %v1228, %v1230
        %v1232 = vrot.slane %v1211, 1
        %v1233 = vsel %vm867, %v1230, %v1232
        %v1234 = vrot.slane %v1212, 1
        %v1235 = vsel %vm867, %v1232, %v1234
        %v1236 = vrot.slane %v1213, 1
        %v1237 = vsel %vm867, %v1234, %v1236
        %v1238 = vrot.slane %v1214, 1
        %v1239 = vsel %vm867, %v1236, %v1238
        %v1240 = vrot.slane %v1215, 1
        %v1241 = vsel %vm867, %v1238, %v1240
        %v1242 = vrot.slane %v1216, 1
        %v1243 = vsel %vm867, %v1240, %v1242
        %v1244 = vrot.slane %v1217, 1
        %v1245 = vsel %vm867, %v1242, %v1244
        %v1246 = vrot.slane %v1218, 1
        %v1247 = vsel %vm867, %v1244, %v1246
        %v1248 = vrot.slane %v1219, 1
        %v1249 = vsel %vm867, %v1246, %v1248
        %v1250 = vrot.slane %v1220, 1
        %v1251 = vsel %vm867, %v1248, %v1250
        %v1252 = vrot.slane %v1221, 1
        %v1253 = vsel %vm867, %v1250, %v1252
        %v1254 = vrot.slane %v1222, 1
        %v1255 = vsel %vm867, %v1252, %v1254
        %v1256 = vrot.slane %v1223, 1
        %v1257 = vsel %vm867, %v1254, %v1256
        %v1258 = vrot.slane %v1224, 1
        %v1259 = vsel %vm867, %v1256, %v1258
        %v1260 = vrot.slane %v1225, 1
        %v1261 = vsel %vm867, %v1258, %v1260
        %v1262 = vrot.slane %v1226, 1
        %v1263 = vsel %vm867, %v1260, %v1262
        %v1265 = vsel %vm564, %v1229, 0
        %v1268 = vsel %vm564, %v1231, 0
        %v1271 = vsel %vm564, %v1233, 0
        %v1274 = vsel %vm564, %v1235, 0
        %v1277 = vsel %vm564, %v1237, 0
        %v1280 = vsel %vm564, %v1239, 0
        %v1283 = vsel %vm564, %v1241, 0
        %v1286 = vsel %vm564, %v1243, 0
        %v1289 = vsel %vm564, %v1245, 0
        %v1292 = vsel %vm564, %v1247, 0
        %v1295 = vsel %vm564, %v1249, 0
        %v1298 = vsel %vm564, %v1251, 0
        %v1301 = vsel %vm564, %v1253, 0
        %v1304 = vsel %vm564, %v1255, 0
        %v1307 = vsel %vm564, %v1257, 0
        %v1310 = vsel %vm564, %v1259, 0
        %v1313 = vsel %vm564, %v1261, 0
        %v1316 = vsel %vm564, %v1263, 0
        %v1319 = vand.u32 %v273, %v622
        %1321 = vmatpush.bf16.msra.mxu0 0
        %1322 = vmatpush.bf16.msra.mxu0 0
        %1323 = vmatpush.bf16.msra.mxu0 0
        %1324 = vmatpush.bf16.msra.mxu0 0
        %1325 = vmatpush.bf16.msra.mxu0 0
        %1326 = vmatpush.bf16.msra.mxu0 0
        %1327 = vmatpush.bf16.msra.mxu0 0
        %1328 = vmatpush.bf16.msra.mxu0 %v1319
        %1329 = vmatmul.bf16.gmra.mxu0 %v1265
        %v1330 = vpop.f32.mrf.mxu0
        %v1331 = vadd.f32 0.0, %v1330
        %v1332 = vpop.f32.mrf.mxu0
        %v1333 = vadd.f32 0.0, %v1332
        %1334 = vmatmul.bf16.gmra.mxu0 %v1268
        %v1335 = vpop.f32.mrf.mxu0
        %v1336 = vadd.f32 0.0, %v1335
        %v1337 = vpop.f32.mrf.mxu0
        %v1338 = vadd.f32 0.0, %v1337
        %1339 = vmatmul.bf16.gmra.mxu0 %v1271
        %v1340 = vpop.f32.mrf.mxu0
        %v1341 = vadd.f32 0.0, %v1340
        %v1342 = vpop.f32.mrf.mxu0
        %v1343 = vadd.f32 0.0, %v1342
        %1344 = vmatmul.bf16.gmra.mxu0 %v1274
        %v1345 = vpop.f32.mrf.mxu0
        %v1346 = vadd.f32 0.0, %v1345
        %v1347 = vpop.f32.mrf.mxu0
        %v1348 = vadd.f32 0.0, %v1347
        %1349 = vmatmul.bf16.gmra.mxu0 %v1277
        %v1350 = vpop.f32.mrf.mxu0
        %v1351 = vadd.f32 0.0, %v1350
        %v1352 = vpop.f32.mrf.mxu0
        %v1353 = vadd.f32 0.0, %v1352
        %1354 = vmatmul.bf16.gmra.mxu0 %v1280
        %v1355 = vpop.f32.mrf.mxu0
        %v1356 = vadd.f32 0.0, %v1355
        %v1357 = vpop.f32.mrf.mxu0
        %v1358 = vadd.f32 0.0, %v1357
        %1359 = vmatmul.bf16.gmra.mxu0 %v1283
        %v1360 = vpop.f32.mrf.mxu0
        %v1361 = vadd.f32 0.0, %v1360
        %v1362 = vpop.f32.mrf.mxu0
        %v1363 = vadd.f32 0.0, %v1362
        %1364 = vmatmul.bf16.gmra.mxu0 %v1286
        %v1365 = vpop.f32.mrf.mxu0
        %v1366 = vadd.f32 0.0, %v1365
        %v1367 = vpop.f32.mrf.mxu0
        %v1368 = vadd.f32 0.0, %v1367
        %1369 = vmatmul.bf16.gmra.mxu0 %v1289
        %v1370 = vpop.f32.mrf.mxu0
        %v1371 = vadd.f32 0.0, %v1370
        %v1372 = vpop.f32.mrf.mxu0
        %v1373 = vadd.f32 0.0, %v1372
        %1374 = vmatmul.bf16.gmra.mxu0 %v1292
        %v1375 = vpop.f32.mrf.mxu0
        %v1376 = vadd.f32 0.0, %v1375
        %v1377 = vpop.f32.mrf.mxu0
        %v1378 = vadd.f32 0.0, %v1377
        %1379 = vmatmul.bf16.gmra.mxu0 %v1295
        %v1380 = vpop.f32.mrf.mxu0
        %v1381 = vadd.f32 0.0, %v1380
        %v1382 = vpop.f32.mrf.mxu0
        %v1383 = vadd.f32 0.0, %v1382
        %1384 = vmatmul.bf16.gmra.mxu0 %v1298
        %v1385 = vpop.f32.mrf.mxu0
        %v1386 = vadd.f32 0.0, %v1385
        %v1387 = vpop.f32.mrf.mxu0
        %v1388 = vadd.f32 0.0, %v1387
        %1389 = vmatmul.bf16.gmra.mxu0 %v1301
        %v1390 = vpop.f32.mrf.mxu0
        %v1391 = vadd.f32 0.0, %v1390
        %v1392 = vpop.f32.mrf.mxu0
        %v1393 = vadd.f32 0.0, %v1392
        %1394 = vmatmul.bf16.gmra.mxu0 %v1304
        %v1395 = vpop.f32.mrf.mxu0
        %v1396 = vadd.f32 0.0, %v1395
        %v1397 = vpop.f32.mrf.mxu0
        %v1398 = vadd.f32 0.0, %v1397
        %1399 = vmatmul.bf16.gmra.mxu0 %v1307
        %v1400 = vpop.f32.mrf.mxu0
        %v1401 = vadd.f32 0.0, %v1400
        %v1402 = vpop.f32.mrf.mxu0
        %v1403 = vadd.f32 0.0, %v1402
        %1404 = vmatmul.bf16.gmra.mxu0 %v1310
        %v1405 = vpop.f32.mrf.mxu0
        %v1406 = vadd.f32 0.0, %v1405
        %v1407 = vpop.f32.mrf.mxu0
        %v1408 = vadd.f32 0.0, %v1407
        %1409 = vmatmul.bf16.gmra.mxu0 %v1313
        %v1410 = vpop.f32.mrf.mxu0
        %v1411 = vadd.f32 0.0, %v1410
        %v1412 = vpop.f32.mrf.mxu0
        %v1413 = vadd.f32 0.0, %v1412
        %1414 = vmatmul.bf16.gmra.mxu0 %v1316
        %v1415 = vpop.f32.mrf.mxu0
        %v1416 = vadd.f32 0.0, %v1415
        %v1417 = vpop.f32.mrf.mxu0
        %v1418 = vadd.f32 0.0, %v1417
        %1419 = vdwg.mxu0
        %v1420 = vadd.f32 %v1061, %v1331
        %v1421 = vadd.f32 %v1062, %v1333
        %v1422 = vadd.f32 %v1063, %v1336
        %v1423 = vadd.f32 %v1064, %v1338
        %v1424 = vadd.f32 %v1065, %v1341
        %v1425 = vadd.f32 %v1066, %v1343
        %v1426 = vadd.f32 %v1067, %v1346
        %v1427 = vadd.f32 %v1068, %v1348
        %v1428 = vadd.f32 %v1069, %v1351
        %v1429 = vadd.f32 %v1070, %v1353
        %v1430 = vadd.f32 %v1071, %v1356
        %v1431 = vadd.f32 %v1072, %v1358
        %v1432 = vadd.f32 %v1073, %v1361
        %v1433 = vadd.f32 %v1074, %v1363
        %v1434 = vadd.f32 %v1075, %v1366
        %v1435 = vadd.f32 %v1076, %v1368
        %v1436 = vadd.f32 %v1077, %v1371
        %v1437 = vadd.f32 %v1078, %v1373
        %v1438 = vadd.f32 %v1079, %v1376
        %v1439 = vadd.f32 %v1080, %v1378
        %v1440 = vadd.f32 %v1081, %v1381
        %v1441 = vadd.f32 %v1082, %v1383
        %v1442 = vadd.f32 %v1083, %v1386
        %v1443 = vadd.f32 %v1084, %v1388
        %v1444 = vadd.f32 %v1085, %v1391
        %v1445 = vadd.f32 %v1086, %v1393
        %v1446 = vadd.f32 %v1087, %v1396
        %v1447 = vadd.f32 %v1088, %v1398
        %v1448 = vadd.f32 %v1089, %v1401
        %v1449 = vadd.f32 %v1090, %v1403
        %v1450 = vadd.f32 %v1091, %v1406
        %v1451 = vadd.f32 %v1092, %v1408
        %v1452 = vadd.f32 %v1093, %v1411
        %v1453 = vadd.f32 %v1094, %v1413
        %v1454 = vadd.f32 %v1095, %v1416
        %v1455 = vadd.f32 %v1096, %v1418
        %v1456 = vld [vmem:[%s255 + $0x98] sm:$0x3]
        %v1458 = vunpack.c.l.b16 %v1456
        %v1459 = vpack.c.b16 %v1458, %v1458
        %vm1460 = vsmask.f32 6400
        %v1462 = vshrl.u32 %v1208, 16
        %v1464 = vrot.slane %v1462, 1
        %v1465 = vshll.u32 %v1208, 16
        %v1467 = vrot.slane %v1465, 2
        %v1468 = vor.u32 %v1464, %v1467
        %v1470 = vshrl.u32 %v1209, 16
        %v1472 = vrot.slane %v1470, 1
        %v1473 = vshll.u32 %v1209, 16
        %v1475 = vrot.slane %v1473, 2
        %v1476 = vor.u32 %v1472, %v1475
        %v1477 = vsel %vm1460, %v1468, %v1476
        %v1479 = vshrl.u32 %v1210, 16
        %v1481 = vrot.slane %v1479, 1
        %v1482 = vshll.u32 %v1210, 16
        %v1484 = vrot.slane %v1482, 2
        %v1485 = vor.u32 %v1481, %v1484
        %v1486 = vsel %vm1460, %v1476, %v1485
        %v1488 = vshrl.u32 %v1211, 16
        %v1490 = vrot.slane %v1488, 1
        %v1491 = vshll.u32 %v1211, 16
        %v1493 = vrot.slane %v1491, 2
        %v1494 = vor.u32 %v1490, %v1493
        %v1495 = vsel %vm1460, %v1485, %v1494
        %v1497 = vshrl.u32 %v1212, 16
        %v1499 = vrot.slane %v1497, 1
        %v1500 = vshll.u32 %v1212, 16
        %v1502 = vrot.slane %v1500, 2
        %v1503 = vor.u32 %v1499, %v1502
        %v1504 = vsel %vm1460, %v1494, %v1503
        %v1506 = vshrl.u32 %v1213, 16
        %v1508 = vrot.slane %v1506, 1
        %v1509 = vshll.u32 %v1213, 16
        %v1511 = vrot.slane %v1509, 2
        %v1512 = vor.u32 %v1508, %v1511
        %v1513 = vsel %vm1460, %v1503, %v1512
        %v1515 = vshrl.u32 %v1214, 16
        %v1517 = vrot.slane %v1515, 1
        %v1518 = vshll.u32 %v1214, 16
        %v1520 = vrot.slane %v1518, 2
        %v1521 = vor.u32 %v1517, %v1520
        %v1522 = vsel %vm1460, %v1512, %v1521
        %v1524 = vshrl.u32 %v1215, 16
        %v1526 = vrot.slane %v1524, 1
        %v1527 = vshll.u32 %v1215, 16
        %v1529 = vrot.slane %v1527, 2
        %v1530 = vor.u32 %v1526, %v1529
        %v1531 = vsel %vm1460, %v1521, %v1530
        %v1533 = vshrl.u32 %v1216, 16
        %v1535 = vrot.slane %v1533, 1
        %v1536 = vshll.u32 %v1216, 16
        %v1538 = vrot.slane %v1536, 2
        %v1539 = vor.u32 %v1535, %v1538
        %v1540 = vsel %vm1460, %v1530, %v1539
        %v1542 = vshrl.u32 %v1217, 16
        %v1544 = vrot.slane %v1542, 1
        %v1545 = vshll.u32 %v1217, 16
        %v1547 = vrot.slane %v1545, 2
        %v1548 = vor.u32 %v1544, %v1547
        %v1549 = vsel %vm1460, %v1539, %v1548
        %v1551 = vshrl.u32 %v1218, 16
        %v1553 = vrot.slane %v1551, 1
        %v1554 = vshll.u32 %v1218, 16
        %v1556 = vrot.slane %v1554, 2
        %v1557 = vor.u32 %v1553, %v1556
        %v1558 = vsel %vm1460, %v1548, %v1557
        %v1560 = vshrl.u32 %v1219, 16
        %v1562 = vrot.slane %v1560, 1
        %v1563 = vshll.u32 %v1219, 16
        %v1565 = vrot.slane %v1563, 2
        %v1566 = vor.u32 %v1562, %v1565
        %v1567 = vsel %vm1460, %v1557, %v1566
        %v1569 = vshrl.u32 %v1220, 16
        %v1571 = vrot.slane %v1569, 1
        %v1572 = vshll.u32 %v1220, 16
        %v1574 = vrot.slane %v1572, 2
        %v1575 = vor.u32 %v1571, %v1574
        %v1576 = vsel %vm1460, %v1566, %v1575
        %v1578 = vshrl.u32 %v1221, 16
        %v1580 = vrot.slane %v1578, 1
        %v1581 = vshll.u32 %v1221, 16
        %v1583 = vrot.slane %v1581, 2
        %v1584 = vor.u32 %v1580, %v1583
        %v1585 = vsel %vm1460, %v1575, %v1584
        %v1587 = vshrl.u32 %v1222, 16
        %v1589 = vrot.slane %v1587, 1
        %v1590 = vshll.u32 %v1222, 16
        %v1592 = vrot.slane %v1590, 2
        %v1593 = vor.u32 %v1589, %v1592
        %v1594 = vsel %vm1460, %v1584, %v1593
        %v1596 = vshrl.u32 %v1223, 16
        %v1598 = vrot.slane %v1596, 1
        %v1599 = vshll.u32 %v1223, 16
        %v1601 = vrot.slane %v1599, 2
        %v1602 = vor.u32 %v1598, %v1601
        %v1603 = vsel %vm1460, %v1593, %v1602
        %v1605 = vshrl.u32 %v1224, 16
        %v1607 = vrot.slane %v1605, 1
        %v1608 = vshll.u32 %v1224, 16
        %v1610 = vrot.slane %v1608, 2
        %v1611 = vor.u32 %v1607, %v1610
        %v1612 = vsel %vm1460, %v1602, %v1611
        %v1614 = vshrl.u32 %v1225, 16
        %v1616 = vrot.slane %v1614, 1
        %v1617 = vshll.u32 %v1225, 16
        %v1619 = vrot.slane %v1617, 2
        %v1620 = vor.u32 %v1616, %v1619
        %v1621 = vsel %vm1460, %v1611, %v1620
        %v1623 = vshrl.u32 %v1459, 16
        %v1625 = vrot.slane %v1623, 1
        %v1626 = vshll.u32 %v1459, 16
        %v1628 = vrot.slane %v1626, 2
        %v1629 = vor.u32 %v1625, %v1628
        %v1630 = vsel %vm1460, %v1620, %v1629
        %v1632 = vsel %vm564, %v1477, 0
        %v1635 = vsel %vm564, %v1486, 0
        %v1638 = vsel %vm564, %v1495, 0
        %v1641 = vsel %vm564, %v1504, 0
        %v1644 = vsel %vm564, %v1513, 0
        %v1647 = vsel %vm564, %v1522, 0
        %v1650 = vsel %vm564, %v1531, 0
        %v1653 = vsel %vm564, %v1540, 0
        %v1656 = vsel %vm564, %v1549, 0
        %v1659 = vsel %vm564, %v1558, 0
        %v1662 = vsel %vm564, %v1567, 0
        %v1665 = vsel %vm564, %v1576, 0
        %v1668 = vsel %vm564, %v1585, 0
        %v1671 = vsel %vm564, %v1594, 0
        %v1674 = vsel %vm564, %v1603, 0
        %v1677 = vsel %vm564, %v1612, 0
        %v1680 = vsel %vm564, %v1621, 0
        %v1683 = vsel %vm564, %v1630, 0
        %v1686 = vand.u32 %v275, %v622
        %1688 = vmatpush.bf16.msra.mxu0 0
        %1689 = vmatpush.bf16.msra.mxu0 0
        %1690 = vmatpush.bf16.msra.mxu0 0
        %1691 = vmatpush.bf16.msra.mxu0 0
        %1692 = vmatpush.bf16.msra.mxu0 0
        %1693 = vmatpush.bf16.msra.mxu0 0
        %1694 = vmatpush.bf16.msra.mxu0 0
        %1695 = vmatpush.bf16.msra.mxu0 %v1686
        %1696 = vmatmul.bf16.gmra.mxu0 %v1632
        %v1697 = vpop.f32.mrf.mxu0
        %v1698 = vadd.f32 0.0, %v1697
        %v1699 = vpop.f32.mrf.mxu0
        %v1700 = vadd.f32 0.0, %v1699
        %1701 = vmatmul.bf16.gmra.mxu0 %v1635
        %v1702 = vpop.f32.mrf.mxu0
        %v1703 = vadd.f32 0.0, %v1702
        %v1704 = vpop.f32.mrf.mxu0
        %v1705 = vadd.f32 0.0, %v1704
        %1706 = vmatmul.bf16.gmra.mxu0 %v1638
        %v1707 = vpop.f32.mrf.mxu0
        %v1708 = vadd.f32 0.0, %v1707
        %v1709 = vpop.f32.mrf.mxu0
        %v1710 = vadd.f32 0.0, %v1709
        %1711 = vmatmul.bf16.gmra.mxu0 %v1641
        %v1712 = vpop.f32.mrf.mxu0
        %v1713 = vadd.f32 0.0, %v1712
        %v1714 = vpop.f32.mrf.mxu0
        %v1715 = vadd.f32 0.0, %v1714
        %1716 = vmatmul.bf16.gmra.mxu0 %v1644
        %v1717 = vpop.f32.mrf.mxu0
        %v1718 = vadd.f32 0.0, %v1717
        %v1719 = vpop.f32.mrf.mxu0
        %v1720 = vadd.f32 0.0, %v1719
        %1721 = vmatmul.bf16.gmra.mxu0 %v1647
        %v1722 = vpop.f32.mrf.mxu0
        %v1723 = vadd.f32 0.0, %v1722
        %v1724 = vpop.f32.mrf.mxu0
        %v1725 = vadd.f32 0.0, %v1724
        %1726 = vmatmul.bf16.gmra.mxu0 %v1650
        %v1727 = vpop.f32.mrf.mxu0
        %v1728 = vadd.f32 0.0, %v1727
        %v1729 = vpop.f32.mrf.mxu0
        %v1730 = vadd.f32 0.0, %v1729
        %1731 = vmatmul.bf16.gmra.mxu0 %v1653
        %v1732 = vpop.f32.mrf.mxu0
        %v1733 = vadd.f32 0.0, %v1732
        %v1734 = vpop.f32.mrf.mxu0
        %v1735 = vadd.f32 0.0, %v1734
        %1736 = vmatmul.bf16.gmra.mxu0 %v1656
        %v1737 = vpop.f32.mrf.mxu0
        %v1738 = vadd.f32 0.0, %v1737
        %v1739 = vpop.f32.mrf.mxu0
        %v1740 = vadd.f32 0.0, %v1739
        %1741 = vmatmul.bf16.gmra.mxu0 %v1659
        %v1742 = vpop.f32.mrf.mxu0
        %v1743 = vadd.f32 0.0, %v1742
        %v1744 = vpop.f32.mrf.mxu0
        %v1745 = vadd.f32 0.0, %v1744
        %1746 = vmatmul.bf16.gmra.mxu0 %v1662
        %v1747 = vpop.f32.mrf.mxu0
        %v1748 = vadd.f32 0.0, %v1747
        %v1749 = vpop.f32.mrf.mxu0
        %v1750 = vadd.f32 0.0, %v1749
        %1751 = vmatmul.bf16.gmra.mxu0 %v1665
        %v1752 = vpop.f32.mrf.mxu0
        %v1753 = vadd.f32 0.0, %v1752
        %v1754 = vpop.f32.mrf.mxu0
        %v1755 = vadd.f32 0.0, %v1754
        %1756 = vmatmul.bf16.gmra.mxu0 %v1668
        %v1757 = vpop.f32.mrf.mxu0
        %v1758 = vadd.f32 0.0, %v1757
        %v1759 = vpop.f32.mrf.mxu0
        %v1760 = vadd.f32 0.0, %v1759
        %1761 = vmatmul.bf16.gmra.mxu0 %v1671
        %v1762 = vpop.f32.mrf.mxu0
        %v1763 = vadd.f32 0.0, %v1762
        %v1764 = vpop.f32.mrf.mxu0
        %v1765 = vadd.f32 0.0, %v1764
        %1766 = vmatmul.bf16.gmra.mxu0 %v1674
        %v1767 = vpop.f32.mrf.mxu0
        %v1768 = vadd.f32 0.0, %v1767
        %v1769 = vpop.f32.mrf.mxu0
        %v1770 = vadd.f32 0.0, %v1769
        %1771 = vmatmul.bf16.gmra.mxu0 %v1677
        %v1772 = vpop.f32.mrf.mxu0
        %v1773 = vadd.f32 0.0, %v1772
        %v1774 = vpop.f32.mrf.mxu0
        %v1775 = vadd.f32 0.0, %v1774
        %1776 = vmatmul.bf16.gmra.mxu0 %v1680
        %v1777 = vpop.f32.mrf.mxu0
        %v1778 = vadd.f32 0.0, %v1777
        %v1779 = vpop.f32.mrf.mxu0
        %v1780 = vadd.f32 0.0, %v1779
        %1781 = vmatmul.bf16.gmra.mxu0 %v1683
        %v1782 = vpop.f32.mrf.mxu0
        %v1783 = vadd.f32 0.0, %v1782
        %v1784 = vpop.f32.mrf.mxu0
        %v1785 = vadd.f32 0.0, %v1784
        %1786 = vdwg.mxu0
        %v1787 = vadd.f32 %v1420, %v1698
        %v1788 = vadd.f32 %v1421, %v1700
        %v1789 = vadd.f32 %v1422, %v1703
        %v1790 = vadd.f32 %v1423, %v1705
        %v1791 = vadd.f32 %v1424, %v1708
        %v1792 = vadd.f32 %v1425, %v1710
        %v1793 = vadd.f32 %v1426, %v1713
        %v1794 = vadd.f32 %v1427, %v1715
        %v1795 = vadd.f32 %v1428, %v1718
        %v1796 = vadd.f32 %v1429, %v1720
        %v1797 = vadd.f32 %v1430, %v1723
        %v1798 = vadd.f32 %v1431, %v1725
        %v1799 = vadd.f32 %v1432, %v1728
        %v1800 = vadd.f32 %v1433, %v1730
        %v1801 = vadd.f32 %v1434, %v1733
        %v1802 = vadd.f32 %v1435, %v1735
        %v1803 = vadd.f32 %v1436, %v1738
        %v1804 = vadd.f32 %v1437, %v1740
        %v1805 = vadd.f32 %v1438, %v1743
        %v1806 = vadd.f32 %v1439, %v1745
        %v1807 = vadd.f32 %v1440, %v1748
        %v1808 = vadd.f32 %v1441, %v1750
        %v1809 = vadd.f32 %v1442, %v1753
        %v1810 = vadd.f32 %v1443, %v1755
        %v1811 = vadd.f32 %v1444, %v1758
        %v1812 = vadd.f32 %v1445, %v1760
        %v1813 = vadd.f32 %v1446, %v1763
        %v1814 = vadd.f32 %v1447, %v1765
        %v1815 = vadd.f32 %v1448, %v1768
        %v1816 = vadd.f32 %v1449, %v1770
        %v1817 = vadd.f32 %v1450, %v1773
        %v1818 = vadd.f32 %v1451, %v1775
        %v1819 = vadd.f32 %v1452, %v1778
        %v1820 = vadd.f32 %v1453, %v1780
        %v1821 = vadd.f32 %v1454, %v1783
        %v1822 = vadd.f32 %v1455, %v1785
        %v1823 = vld [vmem:[%s255 + $0x8] sm:$0xc]
        %v1825 = vunpack.c.l.b16 %v1823
        %v1826 = vpack.c.b16 %v1172, %v1825
        %vm1827 = vcmask 1045504
        %v1828 = vrot.slane %v1826, 2
        %v1829 = vrot.slane %v1209, 2
        %v1830 = vsel %vm1827, %v1828, %v1829
        %v1831 = vrot.slane %v1210, 2
        %v1832 = vsel %vm1827, %v1829, %v1831
        %v1833 = vrot.slane %v1211, 2
        %v1834 = vsel %vm1827, %v1831, %v1833
        %v1835 = vrot.slane %v1212, 2
        %v1836 = vsel %vm1827, %v1833, %v1835
        %v1837 = vrot.slane %v1213, 2
        %v1838 = vsel %vm1827, %v1835, %v1837
        %v1839 = vrot.slane %v1214, 2
        %v1840 = vsel %vm1827, %v1837, %v1839
        %v1841 = vrot.slane %v1215, 2
        %v1842 = vsel %vm1827, %v1839, %v1841
        %v1843 = vrot.slane %v1216, 2
        %v1844 = vsel %vm1827, %v1841, %v1843
        %v1845 = vrot.slane %v1217, 2
        %v1846 = vsel %vm1827, %v1843, %v1845
        %v1847 = vrot.slane %v1218, 2
        %v1848 = vsel %vm1827, %v1845, %v1847
        %v1849 = vrot.slane %v1219, 2
        %v1850 = vsel %vm1827, %v1847, %v1849
        %v1851 = vrot.slane %v1220, 2
        %v1852 = vsel %vm1827, %v1849, %v1851
        %v1853 = vrot.slane %v1221, 2
        %v1854 = vsel %vm1827, %v1851, %v1853
        %v1855 = vrot.slane %v1222, 2
        %v1856 = vsel %vm1827, %v1853, %v1855
        %v1857 = vrot.slane %v1223, 2
        %v1858 = vsel %vm1827, %v1855, %v1857
        %v1859 = vrot.slane %v1224, 2
        %v1860 = vsel %vm1827, %v1857, %v1859
        %v1861 = vrot.slane %v1225, 2
        %v1862 = vsel %vm1827, %v1859, %v1861
        %v1863 = vrot.slane %v1459, 2
        %v1864 = vsel %vm1827, %v1861, %v1863
        %v1866 = vsel %vm564, %v1830, 0
        %v1869 = vsel %vm564, %v1832, 0
        %v1872 = vsel %vm564, %v1834, 0
        %v1875 = vsel %vm564, %v1836, 0
        %v1878 = vsel %vm564, %v1838, 0
        %v1881 = vsel %vm564, %v1840, 0
        %v1884 = vsel %vm564, %v1842, 0
        %v1887 = vsel %vm564, %v1844, 0
        %v1890 = vsel %vm564, %v1846, 0
        %v1893 = vsel %vm564, %v1848, 0
        %v1896 = vsel %vm564, %v1850, 0
        %v1899 = vsel %vm564, %v1852, 0
        %v1902 = vsel %vm564, %v1854, 0
        %v1905 = vsel %vm564, %v1856, 0
        %v1908 = vsel %vm564, %v1858, 0
        %v1911 = vsel %vm564, %v1860, 0
        %v1914 = vsel %vm564, %v1862, 0
        %v1917 = vsel %vm564, %v1864, 0
        %v1920 = vand.u32 %v277, %v622
        %1922 = vmatpush.bf16.msra.mxu0 0
        %1923 = vmatpush.bf16.msra.mxu0 0
        %1924 = vmatpush.bf16.msra.mxu0 0
        %1925 = vmatpush.bf16.msra.mxu0 0
        %1926 = vmatpush.bf16.msra.mxu0 0
        %1927 = vmatpush.bf16.msra.mxu0 0
        %1928 = vmatpush.bf16.msra.mxu0 0
        %1929 = vmatpush.bf16.msra.mxu0 %v1920
        %1930 = vmatmul.bf16.gmra.mxu0 %v1866
        %v1931 = vpop.f32.mrf.mxu0
        %v1932 = vadd.f32 0.0, %v1931
        %v1933 = vpop.f32.mrf.mxu0
        %v1934 = vadd.f32 0.0, %v1933
        %1935 = vmatmul.bf16.gmra.mxu0 %v1869
        %v1936 = vpop.f32.mrf.mxu0
        %v1937 = vadd.f32 0.0, %v1936
        %v1938 = vpop.f32.mrf.mxu0
        %v1939 = vadd.f32 0.0, %v1938
        %1940 = vmatmul.bf16.gmra.mxu0 %v1872
        %v1941 = vpop.f32.mrf.mxu0
        %v1942 = vadd.f32 0.0, %v1941
        %v1943 = vpop.f32.mrf.mxu0
        %v1944 = vadd.f32 0.0, %v1943
        %1945 = vmatmul.bf16.gmra.mxu0 %v1875
        %v1946 = vpop.f32.mrf.mxu0
        %v1947 = vadd.f32 0.0, %v1946
        %v1948 = vpop.f32.mrf.mxu0
        %v1949 = vadd.f32 0.0, %v1948
        %1950 = vmatmul.bf16.gmra.mxu0 %v1878
        %v1951 = vpop.f32.mrf.mxu0
        %v1952 = vadd.f32 0.0, %v1951
        %v1953 = vpop.f32.mrf.mxu0
        %v1954 = vadd.f32 0.0, %v1953
        %1955 = vmatmul.bf16.gmra.mxu0 %v1881
        %v1956 = vpop.f32.mrf.mxu0
        %v1957 = vadd.f32 0.0, %v1956
        %v1958 = vpop.f32.mrf.mxu0
        %v1959 = vadd.f32 0.0, %v1958
        %1960 = vmatmul.bf16.gmra.mxu0 %v1884
        %v1961 = vpop.f32.mrf.mxu0
        %v1962 = vadd.f32 0.0, %v1961
        %v1963 = vpop.f32.mrf.mxu0
        %v1964 = vadd.f32 0.0, %v1963
        %1965 = vmatmul.bf16.gmra.mxu0 %v1887
        %v1966 = vpop.f32.mrf.mxu0
        %v1967 = vadd.f32 0.0, %v1966
        %v1968 = vpop.f32.mrf.mxu0
        %v1969 = vadd.f32 0.0, %v1968
        %1970 = vmatmul.bf16.gmra.mxu0 %v1890
        %v1971 = vpop.f32.mrf.mxu0
        %v1972 = vadd.f32 0.0, %v1971
        %v1973 = vpop.f32.mrf.mxu0
        %v1974 = vadd.f32 0.0, %v1973
        %1975 = vmatmul.bf16.gmra.mxu0 %v1893
        %v1976 = vpop.f32.mrf.mxu0
        %v1977 = vadd.f32 0.0, %v1976
        %v1978 = vpop.f32.mrf.mxu0
        %v1979 = vadd.f32 0.0, %v1978
        %1980 = vmatmul.bf16.gmra.mxu0 %v1896
        %v1981 = vpop.f32.mrf.mxu0
        %v1982 = vadd.f32 0.0, %v1981
        %v1983 = vpop.f32.mrf.mxu0
        %v1984 = vadd.f32 0.0, %v1983
        %1985 = vmatmul.bf16.gmra.mxu0 %v1899
        %v1986 = vpop.f32.mrf.mxu0
        %v1987 = vadd.f32 0.0, %v1986
        %v1988 = vpop.f32.mrf.mxu0
        %v1989 = vadd.f32 0.0, %v1988
        %1990 = vmatmul.bf16.gmra.mxu0 %v1902
        %v1991 = vpop.f32.mrf.mxu0
        %v1992 = vadd.f32 0.0, %v1991
        %v1993 = vpop.f32.mrf.mxu0
        %v1994 = vadd.f32 0.0, %v1993
        %1995 = vmatmul.bf16.gmra.mxu0 %v1905
        %v1996 = vpop.f32.mrf.mxu0
        %v1997 = vadd.f32 0.0, %v1996
        %v1998 = vpop.f32.mrf.mxu0
        %v1999 = vadd.f32 0.0, %v1998
        %2000 = vmatmul.bf16.gmra.mxu0 %v1908
        %v2001 = vpop.f32.mrf.mxu0
        %v2002 = vadd.f32 0.0, %v2001
        %v2003 = vpop.f32.mrf.mxu0
        %v2004 = vadd.f32 0.0, %v2003
        %2005 = vmatmul.bf16.gmra.mxu0 %v1911
        %v2006 = vpop.f32.mrf.mxu0
        %v2007 = vadd.f32 0.0, %v2006
        %v2008 = vpop.f32.mrf.mxu0
        %v2009 = vadd.f32 0.0, %v2008
        %2010 = vmatmul.bf16.gmra.mxu0 %v1914
        %v2011 = vpop.f32.mrf.mxu0
        %v2012 = vadd.f32 0.0, %v2011
        %v2013 = vpop.f32.mrf.mxu0
        %v2014 = vadd.f32 0.0, %v2013
        %2015 = vmatmul.bf16.gmra.mxu0 %v1917
        %v2016 = vpop.f32.mrf.mxu0
        %v2017 = vadd.f32 0.0, %v2016
        %v2018 = vpop.f32.mrf.mxu0
        %v2019 = vadd.f32 0.0, %v2018
        %2020 = vdwg.mxu0
        %v2021 = vadd.f32 %v1787, %v1932
        %v2022 = vadd.f32 %v1788, %v1934
        %v2023 = vadd.f32 %v1789, %v1937
        %v2024 = vadd.f32 %v1790, %v1939
        %v2025 = vadd.f32 %v1791, %v1942
        %v2026 = vadd.f32 %v1792, %v1944
        %v2027 = vadd.f32 %v1793, %v1947
        %v2028 = vadd.f32 %v1794, %v1949
        %v2029 = vadd.f32 %v1795, %v1952
        %v2030 = vadd.f32 %v1796, %v1954
        %v2031 = vadd.f32 %v1797, %v1957
        %v2032 = vadd.f32 %v1798, %v1959
        %v2033 = vadd.f32 %v1799, %v1962
        %v2034 = vadd.f32 %v1800, %v1964
        %v2035 = vadd.f32 %v1801, %v1967
        %v2036 = vadd.f32 %v1802, %v1969
        %v2037 = vadd.f32 %v1803, %v1972
        %v2038 = vadd.f32 %v1804, %v1974
        %v2039 = vadd.f32 %v1805, %v1977
        %v2040 = vadd.f32 %v1806, %v1979
        %v2041 = vadd.f32 %v1807, %v1982
        %v2042 = vadd.f32 %v1808, %v1984
        %v2043 = vadd.f32 %v1809, %v1987
        %v2044 = vadd.f32 %v1810, %v1989
        %v2045 = vadd.f32 %v1811, %v1992
        %v2046 = vadd.f32 %v1812, %v1994
        %v2047 = vadd.f32 %v1813, %v1997
        %v2048 = vadd.f32 %v1814, %v1999
        %v2049 = vadd.f32 %v1815, %v2002
        %v2050 = vadd.f32 %v1816, %v2004
        %v2051 = vadd.f32 %v1817, %v2007
        %v2052 = vadd.f32 %v1818, %v2009
        %v2053 = vadd.f32 %v1819, %v2012
        %v2054 = vadd.f32 %v1820, %v2014
        %v2055 = vadd.f32 %v1821, %v2017
        %v2056 = vadd.f32 %v1822, %v2019
        %v2057 = vld [vmem:[%s255 + $0x10] sm:$0xc]
        %v2058 = vld [vmem:[%s255 + $0x14] sm:$0xf]
        %v2059 = vld [vmem:[%s255 + $0x18] sm:$0xf]
        %v2060 = vld [vmem:[%s255 + $0x1c] sm:$0xf]
        %v2061 = vld [vmem:[%s255 + $0x20] sm:$0xf]
        %v2062 = vld [vmem:[%s255 + $0x24] sm:$0xf]
        %v2063 = vld [vmem:[%s255 + $0x28] sm:$0xf]
        %v2064 = vld [vmem:[%s255 + $0x2c] sm:$0xf]
        %v2065 = vld [vmem:[%s255 + $0x30] sm:$0xf]
        %v2066 = vld [vmem:[%s255 + $0x34] sm:$0xf]
        %v2067 = vld [vmem:[%s255 + $0x38] sm:$0xf]
        %v2068 = vld [vmem:[%s255 + $0x3c] sm:$0xf]
        %v2069 = vld [vmem:[%s255 + $0x40] sm:$0xf]
        %v2070 = vld [vmem:[%s255 + $0x44] sm:$0xf]
        %v2071 = vld [vmem:[%s255 + $0x48] sm:$0xf]
        %v2072 = vld [vmem:[%s255 + $0x4c] sm:$0xf]
        %v2073 = vld [vmem:[%s255 + $0x50] sm:$0xf]
        %v2074 = vld [vmem:[%s255 + $0x54] sm:$0xf]
        %v2075 = vld [vmem:[%s255 + $0x58] sm:$0xf]
        %v2076 = vld [vmem:[%s255 + $0x5c] sm:$0xf]
        %v2077 = vld [vmem:[%s255 + $0x60] sm:$0xf]
        %v2078 = vld [vmem:[%s255 + $0x64] sm:$0xf]
        %v2079 = vld [vmem:[%s255 + $0x68] sm:$0xf]
        %v2080 = vld [vmem:[%s255 + $0x6c] sm:$0xf]
        %v2081 = vld [vmem:[%s255 + $0x70] sm:$0xf]
        %v2082 = vld [vmem:[%s255 + $0x74] sm:$0xf]
        %v2083 = vld [vmem:[%s255 + $0x78] sm:$0xf]
        %v2084 = vld [vmem:[%s255 + $0x7c] sm:$0xf]
        %v2085 = vld [vmem:[%s255 + $0x80] sm:$0xf]
        %v2086 = vld [vmem:[%s255 + $0x84] sm:$0xf]
        %v2087 = vld [vmem:[%s255 + $0x88] sm:$0xf]
        %v2088 = vld [vmem:[%s255 + $0x8c] sm:$0xf]
        %v2089 = vld [vmem:[%s255 + $0x90] sm:$0xf]
        %v2090 = vld [vmem:[%s255 + $0x94] sm:$0xf]
        %v2091 = vld [vmem:[%s255 + $0x98] sm:$0xf]
        %v2092 = vld [vmem:[%s255 + $0x9c] sm:$0xf]
        %v2093 = vld [vmem:[%s255 + $0xa0] sm:$0x3]
        %v2131 = vunpack.c.l.b16 %v2057
        %v2132 = vunpack.c.l.b16 %v2058
        %v2133 = vunpack.c.l.b16 %v2059
        %v2134 = vunpack.c.l.b16 %v2060
        %v2135 = vunpack.c.l.b16 %v2061
        %v2136 = vunpack.c.l.b16 %v2062
        %v2137 = vunpack.c.l.b16 %v2063
        %v2138 = vunpack.c.l.b16 %v2064
        %v2139 = vunpack.c.l.b16 %v2065
        %v2140 = vunpack.c.l.b16 %v2066
        %v2141 = vunpack.c.l.b16 %v2067
        %v2142 = vunpack.c.l.b16 %v2068
        %v2143 = vunpack.c.l.b16 %v2069
        %v2144 = vunpack.c.l.b16 %v2070
        %v2145 = vunpack.c.l.b16 %v2071
        %v2146 = vunpack.c.l.b16 %v2072
        %v2147 = vunpack.c.l.b16 %v2073
        %v2148 = vunpack.c.l.b16 %v2074
        %v2149 = vunpack.c.l.b16 %v2075
        %v2150 = vunpack.c.l.b16 %v2076
        %v2151 = vunpack.c.l.b16 %v2077
        %v2152 = vunpack.c.l.b16 %v2078
        %v2153 = vunpack.c.l.b16 %v2079
        %v2154 = vunpack.c.l.b16 %v2080
        %v2155 = vunpack.c.l.b16 %v2081
        %v2156 = vunpack.c.l.b16 %v2082
        %v2157 = vunpack.c.l.b16 %v2083
        %v2158 = vunpack.c.l.b16 %v2084
        %v2159 = vunpack.c.l.b16 %v2085
        %v2160 = vunpack.c.l.b16 %v2086
        %v2161 = vunpack.c.l.b16 %v2087
        %v2162 = vunpack.c.l.b16 %v2088
        %v2163 = vunpack.c.l.b16 %v2089
        %v2164 = vunpack.c.l.b16 %v2090
        %v2165 = vunpack.c.l.b16 %v2091
        %v2166 = vunpack.c.l.b16 %v2092
        %v2167 = vunpack.c.l.b16 %v2093
        %v2168 = vpack.c.b16 %v2132, %v2131
        %v2169 = vpack.c.b16 %v2134, %v2133
        %v2170 = vpack.c.b16 %v2136, %v2135
        %v2171 = vpack.c.b16 %v2138, %v2137
        %v2172 = vpack.c.b16 %v2140, %v2139
        %v2173 = vpack.c.b16 %v2142, %v2141
        %v2174 = vpack.c.b16 %v2144, %v2143
        %v2175 = vpack.c.b16 %v2146, %v2145
        %v2176 = vpack.c.b16 %v2148, %v2147
        %v2177 = vpack.c.b16 %v2150, %v2149
        %v2178 = vpack.c.b16 %v2152, %v2151
        %v2179 = vpack.c.b16 %v2154, %v2153
        %v2180 = vpack.c.b16 %v2156, %v2155
        %v2181 = vpack.c.b16 %v2158, %v2157
        %v2182 = vpack.c.b16 %v2160, %v2159
        %v2183 = vpack.c.b16 %v2162, %v2161
        %v2184 = vpack.c.b16 %v2164, %v2163
        %v2185 = vpack.c.b16 %v2166, %v2165
        %v2186 = vpack.c.b16 %v2167, %v2167
        %v2187 = vrot.slane %v2168, 2
        %v2188 = vrot.slane %v2169, 2
        %v2189 = vsel %vm1827, %v2187, %v2188
        %v2190 = vrot.slane %v2170, 2
        %v2191 = vsel %vm1827, %v2188, %v2190
        %v2192 = vrot.slane %v2171, 2
        %v2193 = vsel %vm1827, %v2190, %v2192
        %v2194 = vrot.slane %v2172, 2
        %v2195 = vsel %vm1827, %v2192, %v2194
        %v2196 = vrot.slane %v2173, 2
        %v2197 = vsel %vm1827, %v2194, %v2196
        %v2198 = vrot.slane %v2174, 2
        %v2199 = vsel %vm1827, %v2196, %v2198
        %v2200 = vrot.slane %v2175, 2
        %v2201 = vsel %vm1827, %v2198, %v2200
        %v2202 = vrot.slane %v2176, 2
        %v2203 = vsel %vm1827, %v2200, %v2202
        %v2204 = vrot.slane %v2177, 2
        %v2205 = vsel %vm1827, %v2202, %v2204
        %v2206 = vrot.slane %v2178, 2
        %v2207 = vsel %vm1827, %v2204, %v2206
        %v2208 = vrot.slane %v2179, 2
        %v2209 = vsel %vm1827, %v2206, %v2208
        %v2210 = vrot.slane %v2180, 2
        %v2211 = vsel %vm1827, %v2208, %v2210
        %v2212 = vrot.slane %v2181, 2
        %v2213 = vsel %vm1827, %v2210, %v2212
        %v2214 = vrot.slane %v2182, 2
        %v2215 = vsel %vm1827, %v2212, %v2214
        %v2216 = vrot.slane %v2183, 2
        %v2217 = vsel %vm1827, %v2214, %v2216
        %v2218 = vrot.slane %v2184, 2
        %v2219 = vsel %vm1827, %v2216, %v2218
        %v2220 = vrot.slane %v2185, 2
        %v2221 = vsel %vm1827, %v2218, %v2220
        %v2222 = vrot.slane %v2186, 2
        %v2223 = vsel %vm1827, %v2220, %v2222
        %v2225 = vsel %vm564, %v2189, 0
        %v2228 = vsel %vm564, %v2191, 0
        %v2231 = vsel %vm564, %v2193, 0
        %v2234 = vsel %vm564, %v2195, 0
        %v2237 = vsel %vm564, %v2197, 0
        %v2240 = vsel %vm564, %v2199, 0
        %v2243 = vsel %vm564, %v2201, 0
        %v2246 = vsel %vm564, %v2203, 0
        %v2249 = vsel %vm564, %v2205, 0
        %v2252 = vsel %vm564, %v2207, 0
        %v2255 = vsel %vm564, %v2209, 0
        %v2258 = vsel %vm564, %v2211, 0
        %v2261 = vsel %vm564, %v2213, 0
        %v2264 = vsel %vm564, %v2215, 0
        %v2267 = vsel %vm564, %v2217, 0
        %v2270 = vsel %vm564, %v2219, 0
        %v2273 = vsel %vm564, %v2221, 0
        %v2276 = vsel %vm564, %v2223, 0
        %v2279 = vand.u32 %v279, %v622
        %2281 = vmatpush.bf16.msra.mxu0 0
        %2282 = vmatpush.bf16.msra.mxu0 0
        %2283 = vmatpush.bf16.msra.mxu0 0
        %2284 = vmatpush.bf16.msra.mxu0 0
        %2285 = vmatpush.bf16.msra.mxu0 0
        %2286 = vmatpush.bf16.msra.mxu0 0
        %2287 = vmatpush.bf16.msra.mxu0 0
        %2288 = vmatpush.bf16.msra.mxu0 %v2279
        %2289 = vmatmul.bf16.gmra.mxu0 %v2225
        %v2290 = vpop.f32.mrf.mxu0
        %v2291 = vadd.f32 0.0, %v2290
        %v2292 = vpop.f32.mrf.mxu0
        %v2293 = vadd.f32 0.0, %v2292
        %2294 = vmatmul.bf16.gmra.mxu0 %v2228
        %v2295 = vpop.f32.mrf.mxu0
        %v2296 = vadd.f32 0.0, %v2295
        %v2297 = vpop.f32.mrf.mxu0
        %v2298 = vadd.f32 0.0, %v2297
        %2299 = vmatmul.bf16.gmra.mxu0 %v2231
        %v2300 = vpop.f32.mrf.mxu0
        %v2301 = vadd.f32 0.0, %v2300
        %v2302 = vpop.f32.mrf.mxu0
        %v2303 = vadd.f32 0.0, %v2302
        %2304 = vmatmul.bf16.gmra.mxu0 %v2234
        %v2305 = vpop.f32.mrf.mxu0
        %v2306 = vadd.f32 0.0, %v2305
        %v2307 = vpop.f32.mrf.mxu0
        %v2308 = vadd.f32 0.0, %v2307
        %2309 = vmatmul.bf16.gmra.mxu0 %v2237
        %v2310 = vpop.f32.mrf.mxu0
        %v2311 = vadd.f32 0.0, %v2310
        %v2312 = vpop.f32.mrf.mxu0
        %v2313 = vadd.f32 0.0, %v2312
        %2314 = vmatmul.bf16.gmra.mxu0 %v2240
        %v2315 = vpop.f32.mrf.mxu0
        %v2316 = vadd.f32 0.0, %v2315
        %v2317 = vpop.f32.mrf.mxu0
        %v2318 = vadd.f32 0.0, %v2317
        %2319 = vmatmul.bf16.gmra.mxu0 %v2243
        %v2320 = vpop.f32.mrf.mxu0
        %v2321 = vadd.f32 0.0, %v2320
        %v2322 = vpop.f32.mrf.mxu0
        %v2323 = vadd.f32 0.0, %v2322
        %2324 = vmatmul.bf16.gmra.mxu0 %v2246
        %v2325 = vpop.f32.mrf.mxu0
        %v2326 = vadd.f32 0.0, %v2325
        %v2327 = vpop.f32.mrf.mxu0
        %v2328 = vadd.f32 0.0, %v2327
        %2329 = vmatmul.bf16.gmra.mxu0 %v2249
        %v2330 = vpop.f32.mrf.mxu0
        %v2331 = vadd.f32 0.0, %v2330
        %v2332 = vpop.f32.mrf.mxu0
        %v2333 = vadd.f32 0.0, %v2332
        %2334 = vmatmul.bf16.gmra.mxu0 %v2252
        %v2335 = vpop.f32.mrf.mxu0
        %v2336 = vadd.f32 0.0, %v2335
        %v2337 = vpop.f32.mrf.mxu0
        %v2338 = vadd.f32 0.0, %v2337
        %2339 = vmatmul.bf16.gmra.mxu0 %v2255
        %v2340 = vpop.f32.mrf.mxu0
        %v2341 = vadd.f32 0.0, %v2340
        %v2342 = vpop.f32.mrf.mxu0
        %v2343 = vadd.f32 0.0, %v2342
        %2344 = vmatmul.bf16.gmra.mxu0 %v2258
        %v2345 = vpop.f32.mrf.mxu0
        %v2346 = vadd.f32 0.0, %v2345
        %v2347 = vpop.f32.mrf.mxu0
        %v2348 = vadd.f32 0.0, %v2347
        %2349 = vmatmul.bf16.gmra.mxu0 %v2261
        %v2350 = vpop.f32.mrf.mxu0
        %v2351 = vadd.f32 0.0, %v2350
        %v2352 = vpop.f32.mrf.mxu0
        %v2353 = vadd.f32 0.0, %v2352
        %2354 = vmatmul.bf16.gmra.mxu0 %v2264
        %v2355 = vpop.f32.mrf.mxu0
        %v2356 = vadd.f32 0.0, %v2355
        %v2357 = vpop.f32.mrf.mxu0
        %v2358 = vadd.f32 0.0, %v2357
        %2359 = vmatmul.bf16.gmra.mxu0 %v2267
        %v2360 = vpop.f32.mrf.mxu0
        %v2361 = vadd.f32 0.0, %v2360
        %v2362 = vpop.f32.mrf.mxu0
        %v2363 = vadd.f32 0.0, %v2362
        %2364 = vmatmul.bf16.gmra.mxu0 %v2270
        %v2365 = vpop.f32.mrf.mxu0
        %v2366 = vadd.f32 0.0, %v2365
        %v2367 = vpop.f32.mrf.mxu0
        %v2368 = vadd.f32 0.0, %v2367
        %2369 = vmatmul.bf16.gmra.mxu0 %v2273
        %v2370 = vpop.f32.mrf.mxu0
        %v2371 = vadd.f32 0.0, %v2370
        %v2372 = vpop.f32.mrf.mxu0
        %v2373 = vadd.f32 0.0, %v2372
        %2374 = vmatmul.bf16.gmra.mxu0 %v2276
        %v2375 = vpop.f32.mrf.mxu0
        %v2376 = vadd.f32 0.0, %v2375
        %v2377 = vpop.f32.mrf.mxu0
        %v2378 = vadd.f32 0.0, %v2377
        %2379 = vdwg.mxu0
        %v2380 = vadd.f32 %v2021, %v2291
        %v2381 = vadd.f32 %v2022, %v2293
        %v2382 = vadd.f32 %v2023, %v2296
        %v2383 = vadd.f32 %v2024, %v2298
        %v2384 = vadd.f32 %v2025, %v2301
        %v2385 = vadd.f32 %v2026, %v2303
        %v2386 = vadd.f32 %v2027, %v2306
        %v2387 = vadd.f32 %v2028, %v2308
        %v2388 = vadd.f32 %v2029, %v2311
        %v2389 = vadd.f32 %v2030, %v2313
        %v2390 = vadd.f32 %v2031, %v2316
        %v2391 = vadd.f32 %v2032, %v2318
        %v2392 = vadd.f32 %v2033, %v2321
        %v2393 = vadd.f32 %v2034, %v2323
        %v2394 = vadd.f32 %v2035, %v2326
        %v2395 = vadd.f32 %v2036, %v2328
        %v2396 = vadd.f32 %v2037, %v2331
        %v2397 = vadd.f32 %v2038, %v2333
        %v2398 = vadd.f32 %v2039, %v2336
        %v2399 = vadd.f32 %v2040, %v2338
        %v2400 = vadd.f32 %v2041, %v2341
        %v2401 = vadd.f32 %v2042, %v2343
        %v2402 = vadd.f32 %v2043, %v2346
        %v2403 = vadd.f32 %v2044, %v2348
        %v2404 = vadd.f32 %v2045, %v2351
        %v2405 = vadd.f32 %v2046, %v2353
        %v2406 = vadd.f32 %v2047, %v2356
        %v2407 = vadd.f32 %v2048, %v2358
        %v2408 = vadd.f32 %v2049, %v2361
        %v2409 = vadd.f32 %v2050, %v2363
        %v2410 = vadd.f32 %v2051, %v2366
        %v2411 = vadd.f32 %v2052, %v2368
        %v2412 = vadd.f32 %v2053, %v2371
        %v2413 = vadd.f32 %v2054, %v2373
        %v2414 = vadd.f32 %v2055, %v2376
        %v2415 = vadd.f32 %v2056, %v2378
        %v2416 = vld [vmem:[%s255 + $0xa0] sm:$0x7]
        %v2418 = vunpack.c.l.b16 %v2416
        %v2419 = vpack.c.b16 %v2418, %v2418
        %vm2420 = vsmask.f32 5376
        %v2422 = vshrl.u32 %v2168, 16
        %v2424 = vrot.slane %v2422, 2
        %v2425 = vshll.u32 %v2168, 16
        %v2427 = vrot.slane %v2425, 3
        %v2428 = vor.u32 %v2424, %v2427
        %v2430 = vshrl.u32 %v2169, 16
        %v2432 = vrot.slane %v2430, 2
        %v2433 = vshll.u32 %v2169, 16
        %v2435 = vrot.slane %v2433, 3
        %v2436 = vor.u32 %v2432, %v2435
        %v2437 = vsel %vm2420, %v2428, %v2436
        %v2439 = vshrl.u32 %v2170, 16
        %v2441 = vrot.slane %v2439, 2
        %v2442 = vshll.u32 %v2170, 16
        %v2444 = vrot.slane %v2442, 3
        %v2445 = vor.u32 %v2441, %v2444
        %v2446 = vsel %vm2420, %v2436, %v2445
        %v2448 = vshrl.u32 %v2171, 16
        %v2450 = vrot.slane %v2448, 2
        %v2451 = vshll.u32 %v2171, 16
        %v2453 = vrot.slane %v2451, 3
        %v2454 = vor.u32 %v2450, %v2453
        %v2455 = vsel %vm2420, %v2445, %v2454
        %v2457 = vshrl.u32 %v2172, 16
        %v2459 = vrot.slane %v2457, 2
        %v2460 = vshll.u32 %v2172, 16
        %v2462 = vrot.slane %v2460, 3
        %v2463 = vor.u32 %v2459, %v2462
        %v2464 = vsel %vm2420, %v2454, %v2463
        %v2466 = vshrl.u32 %v2173, 16
        %v2468 = vrot.slane %v2466, 2
        %v2469 = vshll.u32 %v2173, 16
        %v2471 = vrot.slane %v2469, 3
        %v2472 = vor.u32 %v2468, %v2471
        %v2473 = vsel %vm2420, %v2463, %v2472
        %v2475 = vshrl.u32 %v2174, 16
        %v2477 = vrot.slane %v2475, 2
        %v2478 = vshll.u32 %v2174, 16
        %v2480 = vrot.slane %v2478, 3
        %v2481 = vor.u32 %v2477, %v2480
        %v2482 = vsel %vm2420, %v2472, %v2481
        %v2484 = vshrl.u32 %v2175, 16
        %v2486 = vrot.slane %v2484, 2
        %v2487 = vshll.u32 %v2175, 16
        %v2489 = vrot.slane %v2487, 3
        %v2490 = vor.u32 %v2486, %v2489
        %v2491 = vsel %vm2420, %v2481, %v2490
        %v2493 = vshrl.u32 %v2176, 16
        %v2495 = vrot.slane %v2493, 2
        %v2496 = vshll.u32 %v2176, 16
        %v2498 = vrot.slane %v2496, 3
        %v2499 = vor.u32 %v2495, %v2498
        %v2500 = vsel %vm2420, %v2490, %v2499
        %v2502 = vshrl.u32 %v2177, 16
        %v2504 = vrot.slane %v2502, 2
        %v2505 = vshll.u32 %v2177, 16
        %v2507 = vrot.slane %v2505, 3
        %v2508 = vor.u32 %v2504, %v2507
        %v2509 = vsel %vm2420, %v2499, %v2508
        %v2511 = vshrl.u32 %v2178, 16
        %v2513 = vrot.slane %v2511, 2
        %v2514 = vshll.u32 %v2178, 16
        %v2516 = vrot.slane %v2514, 3
        %v2517 = vor.u32 %v2513, %v2516
        %v2518 = vsel %vm2420, %v2508, %v2517
        %v2520 = vshrl.u32 %v2179, 16
        %v2522 = vrot.slane %v2520, 2
        %v2523 = vshll.u32 %v2179, 16
        %v2525 = vrot.slane %v2523, 3
        %v2526 = vor.u32 %v2522, %v2525
        %v2527 = vsel %vm2420, %v2517, %v2526
        %v2529 = vshrl.u32 %v2180, 16
        %v2531 = vrot.slane %v2529, 2
        %v2532 = vshll.u32 %v2180, 16
        %v2534 = vrot.slane %v2532, 3
        %v2535 = vor.u32 %v2531, %v2534
        %v2536 = vsel %vm2420, %v2526, %v2535
        %v2538 = vshrl.u32 %v2181, 16
        %v2540 = vrot.slane %v2538, 2
        %v2541 = vshll.u32 %v2181, 16
        %v2543 = vrot.slane %v2541, 3
        %v2544 = vor.u32 %v2540, %v2543
        %v2545 = vsel %vm2420, %v2535, %v2544
        %v2547 = vshrl.u32 %v2182, 16
        %v2549 = vrot.slane %v2547, 2
        %v2550 = vshll.u32 %v2182, 16
        %v2552 = vrot.slane %v2550, 3
        %v2553 = vor.u32 %v2549, %v2552
        %v2554 = vsel %vm2420, %v2544, %v2553
        %v2556 = vshrl.u32 %v2183, 16
        %v2558 = vrot.slane %v2556, 2
        %v2559 = vshll.u32 %v2183, 16
        %v2561 = vrot.slane %v2559, 3
        %v2562 = vor.u32 %v2558, %v2561
        %v2563 = vsel %vm2420, %v2553, %v2562
        %v2565 = vshrl.u32 %v2184, 16
        %v2567 = vrot.slane %v2565, 2
        %v2568 = vshll.u32 %v2184, 16
        %v2570 = vrot.slane %v2568, 3
        %v2571 = vor.u32 %v2567, %v2570
        %v2572 = vsel %vm2420, %v2562, %v2571
        %v2574 = vshrl.u32 %v2185, 16
        %v2576 = vrot.slane %v2574, 2
        %v2577 = vshll.u32 %v2185, 16
        %v2579 = vrot.slane %v2577, 3
        %v2580 = vor.u32 %v2576, %v2579
        %v2581 = vsel %vm2420, %v2571, %v2580
        %v2583 = vshrl.u32 %v2419, 16
        %v2585 = vrot.slane %v2583, 2
        %v2586 = vshll.u32 %v2419, 16
        %v2588 = vrot.slane %v2586, 3
        %v2589 = vor.u32 %v2585, %v2588
        %v2590 = vsel %vm2420, %v2580, %v2589
        %v2592 = vsel %vm564, %v2437, 0
        %v2595 = vsel %vm564, %v2446, 0
        %v2598 = vsel %vm564, %v2455, 0
        %v2601 = vsel %vm564, %v2464, 0
        %v2604 = vsel %vm564, %v2473, 0
        %v2607 = vsel %vm564, %v2482, 0
        %v2610 = vsel %vm564, %v2491, 0
        %v2613 = vsel %vm564, %v2500, 0
        %v2616 = vsel %vm564, %v2509, 0
        %v2619 = vsel %vm564, %v2518, 0
        %v2622 = vsel %vm564, %v2527, 0
        %v2625 = vsel %vm564, %v2536, 0
        %v2628 = vsel %vm564, %v2545, 0
        %v2631 = vsel %vm564, %v2554, 0
        %v2634 = vsel %vm564, %v2563, 0
        %v2637 = vsel %vm564, %v2572, 0
        %v2640 = vsel %vm564, %v2581, 0
        %v2643 = vsel %vm564, %v2590, 0
        %v2646 = vand.u32 %v281, %v622
        %2648 = vmatpush.bf16.msra.mxu0 0
        %2649 = vmatpush.bf16.msra.mxu0 0
        %2650 = vmatpush.bf16.msra.mxu0 0
        %2651 = vmatpush.bf16.msra.mxu0 0
        %2652 = vmatpush.bf16.msra.mxu0 0
        %2653 = vmatpush.bf16.msra.mxu0 0
        %2654 = vmatpush.bf16.msra.mxu0 0
        %2655 = vmatpush.bf16.msra.mxu0 %v2646
        %2656 = vmatmul.bf16.gmra.mxu0 %v2592
        %v2657 = vpop.f32.mrf.mxu0
        %v2658 = vadd.f32 0.0, %v2657
        %v2659 = vpop.f32.mrf.mxu0
        %v2660 = vadd.f32 0.0, %v2659
        %2661 = vmatmul.bf16.gmra.mxu0 %v2595
        %v2662 = vpop.f32.mrf.mxu0
        %v2663 = vadd.f32 0.0, %v2662
        %v2664 = vpop.f32.mrf.mxu0
        %v2665 = vadd.f32 0.0, %v2664
        %2666 = vmatmul.bf16.gmra.mxu0 %v2598
        %v2667 = vpop.f32.mrf.mxu0
        %v2668 = vadd.f32 0.0, %v2667
        %v2669 = vpop.f32.mrf.mxu0
        %v2670 = vadd.f32 0.0, %v2669
        %2671 = vmatmul.bf16.gmra.mxu0 %v2601
        %v2672 = vpop.f32.mrf.mxu0
        %v2673 = vadd.f32 0.0, %v2672
        %v2674 = vpop.f32.mrf.mxu0
        %v2675 = vadd.f32 0.0, %v2674
        %2676 = vmatmul.bf16.gmra.mxu0 %v2604
        %v2677 = vpop.f32.mrf.mxu0
        %v2678 = vadd.f32 0.0, %v2677
        %v2679 = vpop.f32.mrf.mxu0
        %v2680 = vadd.f32 0.0, %v2679
        %2681 = vmatmul.bf16.gmra.mxu0 %v2607
        %v2682 = vpop.f32.mrf.mxu0
        %v2683 = vadd.f32 0.0, %v2682
        %v2684 = vpop.f32.mrf.mxu0
        %v2685 = vadd.f32 0.0, %v2684
        %2686 = vmatmul.bf16.gmra.mxu0 %v2610
        %v2687 = vpop.f32.mrf.mxu0
        %v2688 = vadd.f32 0.0, %v2687
        %v2689 = vpop.f32.mrf.mxu0
        %v2690 = vadd.f32 0.0, %v2689
        %2691 = vmatmul.bf16.gmra.mxu0 %v2613
        %v2692 = vpop.f32.mrf.mxu0
        %v2693 = vadd.f32 0.0, %v2692
        %v2694 = vpop.f32.mrf.mxu0
        %v2695 = vadd.f32 0.0, %v2694
        %2696 = vmatmul.bf16.gmra.mxu0 %v2616
        %v2697 = vpop.f32.mrf.mxu0
        %v2698 = vadd.f32 0.0, %v2697
        %v2699 = vpop.f32.mrf.mxu0
        %v2700 = vadd.f32 0.0, %v2699
        %2701 = vmatmul.bf16.gmra.mxu0 %v2619
        %v2702 = vpop.f32.mrf.mxu0
        %v2703 = vadd.f32 0.0, %v2702
        %v2704 = vpop.f32.mrf.mxu0
        %v2705 = vadd.f32 0.0, %v2704
        %2706 = vmatmul.bf16.gmra.mxu0 %v2622
        %v2707 = vpop.f32.mrf.mxu0
        %v2708 = vadd.f32 0.0, %v2707
        %v2709 = vpop.f32.mrf.mxu0
        %v2710 = vadd.f32 0.0, %v2709
        %2711 = vmatmul.bf16.gmra.mxu0 %v2625
        %v2712 = vpop.f32.mrf.mxu0
        %v2713 = vadd.f32 0.0, %v2712
        %v2714 = vpop.f32.mrf.mxu0
        %v2715 = vadd.f32 0.0, %v2714
        %2716 = vmatmul.bf16.gmra.mxu0 %v2628
        %v2717 = vpop.f32.mrf.mxu0
        %v2718 = vadd.f32 0.0, %v2717
        %v2719 = vpop.f32.mrf.mxu0
        %v2720 = vadd.f32 0.0, %v2719
        %2721 = vmatmul.bf16.gmra.mxu0 %v2631
        %v2722 = vpop.f32.mrf.mxu0
        %v2723 = vadd.f32 0.0, %v2722
        %v2724 = vpop.f32.mrf.mxu0
        %v2725 = vadd.f32 0.0, %v2724
        %2726 = vmatmul.bf16.gmra.mxu0 %v2634
        %v2727 = vpop.f32.mrf.mxu0
        %v2728 = vadd.f32 0.0, %v2727
        %v2729 = vpop.f32.mrf.mxu0
        %v2730 = vadd.f32 0.0, %v2729
        %2731 = vmatmul.bf16.gmra.mxu0 %v2637
        %v2732 = vpop.f32.mrf.mxu0
        %v2733 = vadd.f32 0.0, %v2732
        %v2734 = vpop.f32.mrf.mxu0
        %v2735 = vadd.f32 0.0, %v2734
        %2736 = vmatmul.bf16.gmra.mxu0 %v2640
        %v2737 = vpop.f32.mrf.mxu0
        %v2738 = vadd.f32 0.0, %v2737
        %v2739 = vpop.f32.mrf.mxu0
        %v2740 = vadd.f32 0.0, %v2739
        %2741 = vmatmul.bf16.gmra.mxu0 %v2643
        %v2742 = vpop.f32.mrf.mxu0
        %v2743 = vadd.f32 0.0, %v2742
        %v2744 = vpop.f32.mrf.mxu0
        %v2745 = vadd.f32 0.0, %v2744
        %2746 = vdwg.mxu0
        %v2747 = vadd.f32 %v2380, %v2658
        %v2748 = vadd.f32 %v2381, %v2660
        %v2749 = vadd.f32 %v2382, %v2663
        %v2750 = vadd.f32 %v2383, %v2665
        %v2751 = vadd.f32 %v2384, %v2668
        %v2752 = vadd.f32 %v2385, %v2670
        %v2753 = vadd.f32 %v2386, %v2673
        %v2754 = vadd.f32 %v2387, %v2675
        %v2755 = vadd.f32 %v2388, %v2678
        %v2756 = vadd.f32 %v2389, %v2680
        %v2757 = vadd.f32 %v2390, %v2683
        %v2758 = vadd.f32 %v2391, %v2685
        %v2759 = vadd.f32 %v2392, %v2688
        %v2760 = vadd.f32 %v2393, %v2690
        %v2761 = vadd.f32 %v2394, %v2693
        %v2762 = vadd.f32 %v2395, %v2695
        %v2763 = vadd.f32 %v2396, %v2698
        %v2764 = vadd.f32 %v2397, %v2700
        %v2765 = vadd.f32 %v2398, %v2703
        %v2766 = vadd.f32 %v2399, %v2705
        %v2767 = vadd.f32 %v2400, %v2708
        %v2768 = vadd.f32 %v2401, %v2710
        %v2769 = vadd.f32 %v2402, %v2713
        %v2770 = vadd.f32 %v2403, %v2715
        %v2771 = vadd.f32 %v2404, %v2718
        %v2772 = vadd.f32 %v2405, %v2720
        %v2773 = vadd.f32 %v2406, %v2723
        %v2774 = vadd.f32 %v2407, %v2725
        %v2775 = vadd.f32 %v2408, %v2728
        %v2776 = vadd.f32 %v2409, %v2730
        %v2777 = vadd.f32 %v2410, %v2733
        %v2778 = vadd.f32 %v2411, %v2735
        %v2779 = vadd.f32 %v2412, %v2738
        %v2780 = vadd.f32 %v2413, %v2740
        %v2781 = vadd.f32 %v2414, %v2743
        %v2782 = vadd.f32 %v2415, %v2745
        %v2783 = vld [vmem:[%s255 + $0x10] sm:$0x8]
        %v2785 = vunpack.c.l.b16 %v2783
        %v2786 = vpack.c.b16 %v2132, %v2785
        %vm2787 = vcmask 1044480
        %v2788 = vrot.slane %v2786, 3
        %v2789 = vrot.slane %v2169, 3
        %v2790 = vsel %vm2787, %v2788, %v2789
        %v2791 = vrot.slane %v2170, 3
        %v2792 = vsel %vm2787, %v2789, %v2791
        %v2793 = vrot.slane %v2171, 3
        %v2794 = vsel %vm2787, %v2791, %v2793
        %v2795 = vrot.slane %v2172, 3
        %v2796 = vsel %vm2787, %v2793, %v2795
        %v2797 = vrot.slane %v2173, 3
        %v2798 = vsel %vm2787, %v2795, %v2797
        %v2799 = vrot.slane %v2174, 3
        %v2800 = vsel %vm2787, %v2797, %v2799
        %v2801 = vrot.slane %v2175, 3
        %v2802 = vsel %vm2787, %v2799, %v2801
        %v2803 = vrot.slane %v2176, 3
        %v2804 = vsel %vm2787, %v2801, %v2803
        %v2805 = vrot.slane %v2177, 3
        %v2806 = vsel %vm2787, %v2803, %v2805
        %v2807 = vrot.slane %v2178, 3
        %v2808 = vsel %vm2787, %v2805, %v2807
        %v2809 = vrot.slane %v2179, 3
        %v2810 = vsel %vm2787, %v2807, %v2809
        %v2811 = vrot.slane %v2180, 3
        %v2812 = vsel %vm2787, %v2809, %v2811
        %v2813 = vrot.slane %v2181, 3
        %v2814 = vsel %vm2787, %v2811, %v2813
        %v2815 = vrot.slane %v2182, 3
        %v2816 = vsel %vm2787, %v2813, %v2815
        %v2817 = vrot.slane %v2183, 3
        %v2818 = vsel %vm2787, %v2815, %v2817
        %v2819 = vrot.slane %v2184, 3
        %v2820 = vsel %vm2787, %v2817, %v2819
        %v2821 = vrot.slane %v2185, 3
        %v2822 = vsel %vm2787, %v2819, %v2821
        %v2823 = vrot.slane %v2419, 3
        %v2824 = vsel %vm2787, %v2821, %v2823
        %v2826 = vsel %vm564, %v2790, 0
        %v2829 = vsel %vm564, %v2792, 0
        %v2832 = vsel %vm564, %v2794, 0
        %v2835 = vsel %vm564, %v2796, 0
        %v2838 = vsel %vm564, %v2798, 0
        %v2841 = vsel %vm564, %v2800, 0
        %v2844 = vsel %vm564, %v2802, 0
        %v2847 = vsel %vm564, %v2804, 0
        %v2850 = vsel %vm564, %v2806, 0
        %v2853 = vsel %vm564, %v2808, 0
        %v2856 = vsel %vm564, %v2810, 0
        %v2859 = vsel %vm564, %v2812, 0
        %v2862 = vsel %vm564, %v2814, 0
        %v2865 = vsel %vm564, %v2816, 0
        %v2868 = vsel %vm564, %v2818, 0
        %v2871 = vsel %vm564, %v2820, 0
        %v2874 = vsel %vm564, %v2822, 0
        %v2877 = vsel %vm564, %v2824, 0
        %v2880 = vand.u32 %v283, %v622
        %2882 = vmatpush.bf16.msra.mxu0 0
        %2883 = vmatpush.bf16.msra.mxu0 0
        %2884 = vmatpush.bf16.msra.mxu0 0
        %2885 = vmatpush.bf16.msra.mxu0 0
        %2886 = vmatpush.bf16.msra.mxu0 0
        %2887 = vmatpush.bf16.msra.mxu0 0
        %2888 = vmatpush.bf16.msra.mxu0 0
        %2889 = vmatpush.bf16.msra.mxu0 %v2880
        %2890 = vmatmul.bf16.gmra.mxu0 %v2826
        %v2891 = vpop.f32.mrf.mxu0
        %v2892 = vadd.f32 0.0, %v2891
        %v2893 = vpop.f32.mrf.mxu0
        %v2894 = vadd.f32 0.0, %v2893
        %2895 = vmatmul.bf16.gmra.mxu0 %v2829
        %v2896 = vpop.f32.mrf.mxu0
        %v2897 = vadd.f32 0.0, %v2896
        %v2898 = vpop.f32.mrf.mxu0
        %v2899 = vadd.f32 0.0, %v2898
        %2900 = vmatmul.bf16.gmra.mxu0 %v2832
        %v2901 = vpop.f32.mrf.mxu0
        %v2902 = vadd.f32 0.0, %v2901
        %v2903 = vpop.f32.mrf.mxu0
        %v2904 = vadd.f32 0.0, %v2903
        %2905 = vmatmul.bf16.gmra.mxu0 %v2835
        %v2906 = vpop.f32.mrf.mxu0
        %v2907 = vadd.f32 0.0, %v2906
        %v2908 = vpop.f32.mrf.mxu0
        %v2909 = vadd.f32 0.0, %v2908
        %2910 = vmatmul.bf16.gmra.mxu0 %v2838
        %v2911 = vpop.f32.mrf.mxu0
        %v2912 = vadd.f32 0.0, %v2911
        %v2913 = vpop.f32.mrf.mxu0
        %v2914 = vadd.f32 0.0, %v2913
        %2915 = vmatmul.bf16.gmra.mxu0 %v2841
        %v2916 = vpop.f32.mrf.mxu0
        %v2917 = vadd.f32 0.0, %v2916
        %v2918 = vpop.f32.mrf.mxu0
        %v2919 = vadd.f32 0.0, %v2918
        %2920 = vmatmul.bf16.gmra.mxu0 %v2844
        %v2921 = vpop.f32.mrf.mxu0
        %v2922 = vadd.f32 0.0, %v2921
        %v2923 = vpop.f32.mrf.mxu0
        %v2924 = vadd.f32 0.0, %v2923
        %2925 = vmatmul.bf16.gmra.mxu0 %v2847
        %v2926 = vpop.f32.mrf.mxu0
        %v2927 = vadd.f32 0.0, %v2926
        %v2928 = vpop.f32.mrf.mxu0
        %v2929 = vadd.f32 0.0, %v2928
        %2930 = vmatmul.bf16.gmra.mxu0 %v2850
        %v2931 = vpop.f32.mrf.mxu0
        %v2932 = vadd.f32 0.0, %v2931
        %v2933 = vpop.f32.mrf.mxu0
        %v2934 = vadd.f32 0.0, %v2933
        %2935 = vmatmul.bf16.gmra.mxu0 %v2853
        %v2936 = vpop.f32.mrf.mxu0
        %v2937 = vadd.f32 0.0, %v2936
        %v2938 = vpop.f32.mrf.mxu0
        %v2939 = vadd.f32 0.0, %v2938
        %2940 = vmatmul.bf16.gmra.mxu0 %v2856
        %v2941 = vpop.f32.mrf.mxu0
        %v2942 = vadd.f32 0.0, %v2941
        %v2943 = vpop.f32.mrf.mxu0
        %v2944 = vadd.f32 0.0, %v2943
        %2945 = vmatmul.bf16.gmra.mxu0 %v2859
        %v2946 = vpop.f32.mrf.mxu0
        %v2947 = vadd.f32 0.0, %v2946
        %v2948 = vpop.f32.mrf.mxu0
        %v2949 = vadd.f32 0.0, %v2948
        %2950 = vmatmul.bf16.gmra.mxu0 %v2862
        %v2951 = vpop.f32.mrf.mxu0
        %v2952 = vadd.f32 0.0, %v2951
        %v2953 = vpop.f32.mrf.mxu0
        %v2954 = vadd.f32 0.0, %v2953
        %2955 = vmatmul.bf16.gmra.mxu0 %v2865
        %v2956 = vpop.f32.mrf.mxu0
        %v2957 = vadd.f32 0.0, %v2956
        %v2958 = vpop.f32.mrf.mxu0
        %v2959 = vadd.f32 0.0, %v2958
        %2960 = vmatmul.bf16.gmra.mxu0 %v2868
        %v2961 = vpop.f32.mrf.mxu0
        %v2962 = vadd.f32 0.0, %v2961
        %v2963 = vpop.f32.mrf.mxu0
        %v2964 = vadd.f32 0.0, %v2963
        %2965 = vmatmul.bf16.gmra.mxu0 %v2871
        %v2966 = vpop.f32.mrf.mxu0
        %v2967 = vadd.f32 0.0, %v2966
        %v2968 = vpop.f32.mrf.mxu0
        %v2969 = vadd.f32 0.0, %v2968
        %2970 = vmatmul.bf16.gmra.mxu0 %v2874
        %v2971 = vpop.f32.mrf.mxu0
        %v2972 = vadd.f32 0.0, %v2971
        %v2973 = vpop.f32.mrf.mxu0
        %v2974 = vadd.f32 0.0, %v2973
        %2975 = vmatmul.bf16.gmra.mxu0 %v2877
        %v2976 = vpop.f32.mrf.mxu0
        %v2977 = vadd.f32 0.0, %v2976
        %v2978 = vpop.f32.mrf.mxu0
        %v2979 = vadd.f32 0.0, %v2978
        %2980 = vdwg.mxu0
        %v2981 = vadd.f32 %v2747, %v2892
        %v2982 = vadd.f32 %v2748, %v2894
        %v2983 = vadd.f32 %v2749, %v2897
        %v2984 = vadd.f32 %v2750, %v2899
        %v2985 = vadd.f32 %v2751, %v2902
        %v2986 = vadd.f32 %v2752, %v2904
        %v2987 = vadd.f32 %v2753, %v2907
        %v2988 = vadd.f32 %v2754, %v2909
        %v2989 = vadd.f32 %v2755, %v2912
        %v2990 = vadd.f32 %v2756, %v2914
        %v2991 = vadd.f32 %v2757, %v2917
        %v2992 = vadd.f32 %v2758, %v2919
        %v2993 = vadd.f32 %v2759, %v2922
        %v2994 = vadd.f32 %v2760, %v2924
        %v2995 = vadd.f32 %v2761, %v2927
        %v2996 = vadd.f32 %v2762, %v2929
        %v2997 = vadd.f32 %v2763, %v2932
        %v2998 = vadd.f32 %v2764, %v2934
        %v2999 = vadd.f32 %v2765, %v2937
        %v3000 = vadd.f32 %v2766, %v2939
        %v3001 = vadd.f32 %v2767, %v2942
        %v3002 = vadd.f32 %v2768, %v2944
        %v3003 = vadd.f32 %v2769, %v2947
        %v3004 = vadd.f32 %v2770, %v2949
        %v3005 = vadd.f32 %v2771, %v2952
        %v3006 = vadd.f32 %v2772, %v2954
        %v3007 = vadd.f32 %v2773, %v2957
        %v3008 = vadd.f32 %v2774, %v2959
        %v3009 = vadd.f32 %v2775, %v2962
        %v3010 = vadd.f32 %v2776, %v2964
        %v3011 = vadd.f32 %v2777, %v2967
        %v3012 = vadd.f32 %v2778, %v2969
        %v3013 = vadd.f32 %v2779, %v2972
        %v3014 = vadd.f32 %v2780, %v2974
        %v3015 = vadd.f32 %v2781, %v2977
        %v3016 = vadd.f32 %v2782, %v2979
        %v3053 = vrot.slane %v2981, 2
        %v3054 = vrot.slane %v2981, 4
        %v3055 = vrot.slane %v2981, 6
        %v3056 = vrot.slane %v2982, 2
        %v3057 = vrot.slane %v2982, 4
        %v3058 = vrot.slane %v2982, 6
        %v3059 = vrot.slane %v2983, 2
        %v3060 = vrot.slane %v2983, 4
        %v3061 = vrot.slane %v2983, 6
        %v3062 = vrot.slane %v2984, 2
        %v3063 = vrot.slane %v2984, 4
        %v3064 = vrot.slane %v2984, 6
        %v3065 = vrot.slane %v2985, 4
        %v3066 = vrot.slane %v2985, 6
        %v3067 = vrot.slane %v2986, 2
        %v3068 = vrot.slane %v2986, 4
        %v3069 = vrot.slane %v2986, 6
        %v3070 = vrot.slane %v2987, 2
        %v3071 = vrot.slane %v2987, 6
        %v3072 = vrot.slane %v2988, 2
        %v3073 = vrot.slane %v2988, 4
        %v3074 = vrot.slane %v2988, 6
        %v3075 = vrot.slane %v2989, 2
        %v3076 = vrot.slane %v2989, 4
        %v3077 = vrot.slane %v2990, 2
        %v3078 = vrot.slane %v2990, 4
        %v3079 = vrot.slane %v2990, 6
        %v3080 = vrot.slane %v2991, 2
        %v3081 = vrot.slane %v2991, 4
        %v3082 = vrot.slane %v2991, 6
        %v3083 = vrot.slane %v2992, 2
        %v3084 = vrot.slane %v2992, 4
        %v3085 = vrot.slane %v2992, 6
        %v3086 = vrot.slane %v2993, 2
        %v3087 = vrot.slane %v2993, 4
        %v3088 = vrot.slane %v2993, 6
        %v3089 = vrot.slane %v2994, 4
        %v3090 = vrot.slane %v2994, 6
        %v3091 = vrot.slane %v2995, 2
        %v3092 = vrot.slane %v2995, 4
        %v3093 = vrot.slane %v2995, 6
        %v3094 = vrot.slane %v2996, 2
        %v3095 = vrot.slane %v2996, 6
        %v3096 = vrot.slane %v2997, 2
        %v3097 = vrot.slane %v2997, 4
        %v3098 = vrot.slane %v2997, 6
        %v3099 = vrot.slane %v2998, 2
        %v3100 = vrot.slane %v2998, 4
        %v3101 = vrot.slane %v2999, 2
        %v3102 = vrot.slane %v2999, 4
        %v3103 = vrot.slane %v2999, 6
        %v3104 = vrot.slane %v3000, 2
        %v3105 = vrot.slane %v3000, 4
        %v3106 = vrot.slane %v3000, 6
        %v3107 = vrot.slane %v3001, 2
        %v3108 = vrot.slane %v3001, 4
        %v3109 = vrot.slane %v3001, 6
        %v3110 = vrot.slane %v3002, 2
        %v3111 = vrot.slane %v3002, 4
        %v3112 = vrot.slane %v3002, 6
        %v3113 = vrot.slane %v3003, 4
        %v3114 = vrot.slane %v3003, 6
        %v3115 = vrot.slane %v3004, 2
        %v3116 = vrot.slane %v3004, 4
        %v3117 = vrot.slane %v3004, 6
        %v3118 = vrot.slane %v3005, 2
        %v3119 = vrot.slane %v3005, 6
        %v3120 = vrot.slane %v3006, 2
        %v3121 = vrot.slane %v3006, 4
        %v3122 = vrot.slane %v3006, 6
        %v3123 = vrot.slane %v3007, 2
        %v3124 = vrot.slane %v3007, 4
        %v3125 = vrot.slane %v3008, 2
        %v3126 = vrot.slane %v3008, 4
        %v3127 = vrot.slane %v3008, 6
        %v3128 = vrot.slane %v3009, 2
        %v3129 = vrot.slane %v3009, 4
        %v3130 = vrot.slane %v3009, 6
        %v3131 = vrot.slane %v3010, 2
        %v3132 = vrot.slane %v3010, 4
        %v3133 = vrot.slane %v3010, 6
        %v3134 = vrot.slane %v3011, 2
        %v3135 = vrot.slane %v3011, 4
        %v3136 = vrot.slane %v3011, 6
        %v3137 = vrot.slane %v3012, 4
        %v3138 = vrot.slane %v3012, 6
        %v3139 = vrot.slane %v3013, 2
        %v3140 = vrot.slane %v3013, 4
        %v3141 = vrot.slane %v3013, 6
        %v3142 = vrot.slane %v3014, 2
        %v3143 = vrot.slane %v3014, 6
        %v3144 = vrot.slane %v3015, 2
        %v3145 = vrot.slane %v3015, 4
        %v3146 = vrot.slane %v3015, 6
        %v3147 = vrot.slane %v3016, 2
        %v3148 = vrot.slane %v3016, 4
        %v3246 = vperm.slane %v284, 0
        %v3248 = vrot.slane %v3246, 2
        %v3249 = vrot.slane %v3246, 4
        %v3250 = vrot.slane %v3246, 6
        %v3254 = vadd.f32 %v2981, %v3246
        %v3255 = vadd.f32 %v3053, %v3248
        %v3256 = vadd.f32 %v3054, %v3249
        %v3257 = vadd.f32 %v3055, %v3250
        %v3258 = vadd.f32 %v2982, %v3246
        %v3259 = vadd.f32 %v3056, %v3248
        %v3260 = vadd.f32 %v3057, %v3249
        %v3261 = vadd.f32 %v3058, %v3250
        %v3262 = vadd.f32 %v3059, %v3246
        %v3263 = vadd.f32 %v3060, %v3248
        %v3264 = vadd.f32 %v3061, %v3249
        %v3265 = vadd.f32 %v2984, %v3250
        %v3266 = vadd.f32 %v3062, %v3246
        %v3267 = vadd.f32 %v3063, %v3248
        %v3268 = vadd.f32 %v3064, %v3249
        %v3269 = vadd.f32 %v2985, %v3250
        %v3270 = vadd.f32 %v3065, %v3246
        %v3271 = vadd.f32 %v3066, %v3248
        %v3272 = vadd.f32 %v2986, %v3249
        %v3273 = vadd.f32 %v3067, %v3250
        %v3274 = vadd.f32 %v3068, %v3246
        %v3275 = vadd.f32 %v3069, %v3248
        %v3276 = vadd.f32 %v2987, %v3249
        %v3277 = vadd.f32 %v3070, %v3250
        %v3278 = vadd.f32 %v3071, %v3246
        %v3279 = vadd.f32 %v2988, %v3248
        %v3280 = vadd.f32 %v3072, %v3249
        %v3281 = vadd.f32 %v3073, %v3250
        %v3282 = vadd.f32 %v3074, %v3246
        %v3283 = vadd.f32 %v2989, %v3248
        %v3284 = vadd.f32 %v3075, %v3249
        %v3285 = vadd.f32 %v3076, %v3250
        %v3286 = vadd.f32 %v2990, %v3246
        %v3287 = vadd.f32 %v3077, %v3248
        %v3288 = vadd.f32 %v3078, %v3249
        %v3289 = vadd.f32 %v3079, %v3250
        %v3290 = vadd.f32 %v2991, %v3246
        %v3291 = vadd.f32 %v3080, %v3248
        %v3292 = vadd.f32 %v3081, %v3249
        %v3293 = vadd.f32 %v3082, %v3250
        %v3294 = vadd.f32 %v3083, %v3246
        %v3295 = vadd.f32 %v3084, %v3248
        %v3296 = vadd.f32 %v3085, %v3249
        %v3297 = vadd.f32 %v2993, %v3250
        %v3298 = vadd.f32 %v3086, %v3246
        %v3299 = vadd.f32 %v3087, %v3248
        %v3300 = vadd.f32 %v3088, %v3249
        %v3301 = vadd.f32 %v2994, %v3250
        %v3302 = vadd.f32 %v3089, %v3246
        %v3303 = vadd.f32 %v3090, %v3248
        %v3304 = vadd.f32 %v2995, %v3249
        %v3305 = vadd.f32 %v3091, %v3250
        %v3306 = vadd.f32 %v3092, %v3246
        %v3307 = vadd.f32 %v3093, %v3248
        %v3308 = vadd.f32 %v2996, %v3249
        %v3309 = vadd.f32 %v3094, %v3250
        %v3310 = vadd.f32 %v3095, %v3246
        %v3311 = vadd.f32 %v2997, %v3248
        %v3312 = vadd.f32 %v3096, %v3249
        %v3313 = vadd.f32 %v3097, %v3250
        %v3314 = vadd.f32 %v3098, %v3246
        %v3315 = vadd.f32 %v2998, %v3248
        %v3316 = vadd.f32 %v3099, %v3249
        %v3317 = vadd.f32 %v3100, %v3250
        %v3318 = vadd.f32 %v2999, %v3246
        %v3319 = vadd.f32 %v3101, %v3248
        %v3320 = vadd.f32 %v3102, %v3249
        %v3321 = vadd.f32 %v3103, %v3250
        %v3322 = vadd.f32 %v3000, %v3246
        %v3323 = vadd.f32 %v3104, %v3248
        %v3324 = vadd.f32 %v3105, %v3249
        %v3325 = vadd.f32 %v3106, %v3250
        %v3326 = vadd.f32 %v3107, %v3246
        %v3327 = vadd.f32 %v3108, %v3248
        %v3328 = vadd.f32 %v3109, %v3249
        %v3329 = vadd.f32 %v3002, %v3250
        %v3330 = vadd.f32 %v3110, %v3246
        %v3331 = vadd.f32 %v3111, %v3248
        %v3332 = vadd.f32 %v3112, %v3249
        %v3333 = vadd.f32 %v3003, %v3250
        %v3334 = vadd.f32 %v3113, %v3246
        %v3335 = vadd.f32 %v3114, %v3248
        %v3336 = vadd.f32 %v3004, %v3249
        %v3337 = vadd.f32 %v3115, %v3250
        %v3338 = vadd.f32 %v3116, %v3246
        %v3339 = vadd.f32 %v3117, %v3248
        %v3340 = vadd.f32 %v3005, %v3249
        %v3341 = vadd.f32 %v3118, %v3250
        %v3342 = vadd.f32 %v3119, %v3246
        %v3343 = vadd.f32 %v3006, %v3248
        %v3344 = vadd.f32 %v3120, %v3249
        %v3345 = vadd.f32 %v3121, %v3250
        %v3346 = vadd.f32 %v3122, %v3246
        %v3347 = vadd.f32 %v3007, %v3248
        %v3348 = vadd.f32 %v3123, %v3249
        %v3349 = vadd.f32 %v3124, %v3250
        %v3350 = vadd.f32 %v3008, %v3246
        %v3351 = vadd.f32 %v3125, %v3248
        %v3352 = vadd.f32 %v3126, %v3249
        %v3353 = vadd.f32 %v3127, %v3250
        %v3354 = vadd.f32 %v3009, %v3246
        %v3355 = vadd.f32 %v3128, %v3248
        %v3356 = vadd.f32 %v3129, %v3249
        %v3357 = vadd.f32 %v3130, %v3250
        %v3358 = vadd.f32 %v3131, %v3246
        %v3359 = vadd.f32 %v3132, %v3248
        %v3360 = vadd.f32 %v3133, %v3249
        %v3361 = vadd.f32 %v3011, %v3250
        %v3362 = vadd.f32 %v3134, %v3246
        %v3363 = vadd.f32 %v3135, %v3248
        %v3364 = vadd.f32 %v3136, %v3249
        %v3365 = vadd.f32 %v3012, %v3250
        %v3366 = vadd.f32 %v3137, %v3246
        %v3367 = vadd.f32 %v3138, %v3248
        %v3368 = vadd.f32 %v3013, %v3249
        %v3369 = vadd.f32 %v3139, %v3250
        %v3370 = vadd.f32 %v3140, %v3246
        %v3371 = vadd.f32 %v3141, %v3248
        %v3372 = vadd.f32 %v3014, %v3249
        %v3373 = vadd.f32 %v3142, %v3250
        %v3374 = vadd.f32 %v3143, %v3246
        %v3375 = vadd.f32 %v3015, %v3248
        %v3376 = vadd.f32 %v3144, %v3249
        %v3377 = vadd.f32 %v3145, %v3250
        %v3378 = vadd.f32 %v3146, %v3246
        %v3379 = vadd.f32 %v3016, %v3248
        %v3380 = vadd.f32 %v3147, %v3249
        %v3381 = vadd.f32 %v3148, %v3250
        %v3382 = vmax.f32 %v3254, 0.0
        %v3383 = vmax.f32 %v3255, 0.0
        %v3384 = vmax.f32 %v3256, 0.0
        %v3385 = vmax.f32 %v3257, 0.0
        %v3386 = vmax.f32 %v3258, 0.0
        %v3387 = vmax.f32 %v3259, 0.0
        %v3388 = vmax.f32 %v3260, 0.0
        %v3389 = vmax.f32 %v3261, 0.0
        %v3390 = vmax.f32 %v3262, 0.0
        %v3391 = vmax.f32 %v3263, 0.0
        %v3392 = vmax.f32 %v3264, 0.0
        %v3393 = vmax.f32 %v3265, 0.0
        %v3394 = vmax.f32 %v3266, 0.0
        %v3395 = vmax.f32 %v3267, 0.0
        %v3396 = vmax.f32 %v3268, 0.0
        %v3397 = vmax.f32 %v3269, 0.0
        %v3398 = vmax.f32 %v3270, 0.0
        %v3399 = vmax.f32 %v3271, 0.0
        %v3400 = vmax.f32 %v3272, 0.0
        %v3401 = vmax.f32 %v3273, 0.0
        %v3402 = vmax.f32 %v3274, 0.0
        %v3403 = vmax.f32 %v3275, 0.0
        %v3404 = vmax.f32 %v3276, 0.0
        %v3405 = vmax.f32 %v3277, 0.0
        %v3406 = vmax.f32 %v3278, 0.0
        %v3407 = vmax.f32 %v3279, 0.0
        %v3408 = vmax.f32 %v3280, 0.0
        %v3409 = vmax.f32 %v3281, 0.0
        %v3410 = vmax.f32 %v3282, 0.0
        %v3411 = vmax.f32 %v3283, 0.0
        %v3412 = vmax.f32 %v3284, 0.0
        %v3413 = vmax.f32 %v3285, 0.0
        %v3414 = vmax.f32 %v3286, 0.0
        %v3415 = vmax.f32 %v3287, 0.0
        %v3416 = vmax.f32 %v3288, 0.0
        %v3417 = vmax.f32 %v3289, 0.0
        %v3418 = vmax.f32 %v3290, 0.0
        %v3419 = vmax.f32 %v3291, 0.0
        %v3420 = vmax.f32 %v3292, 0.0
        %v3421 = vmax.f32 %v3293, 0.0
        %v3422 = vmax.f32 %v3294, 0.0
        %v3423 = vmax.f32 %v3295, 0.0
        %v3424 = vmax.f32 %v3296, 0.0
        %v3425 = vmax.f32 %v3297, 0.0
        %v3426 = vmax.f32 %v3298, 0.0
        %v3427 = vmax.f32 %v3299, 0.0
        %v3428 = vmax.f32 %v3300, 0.0
        %v3429 = vmax.f32 %v3301, 0.0
        %v3430 = vmax.f32 %v3302, 0.0
        %v3431 = vmax.f32 %v3303, 0.0
        %v3432 = vmax.f32 %v3304, 0.0
        %v3433 = vmax.f32 %v3305, 0.0
        %v3434 = vmax.f32 %v3306, 0.0
        %v3435 = vmax.f32 %v3307, 0.0
        %v3436 = vmax.f32 %v3308, 0.0
        %v3437 = vmax.f32 %v3309, 0.0
        %v3438 = vmax.f32 %v3310, 0.0
        %v3439 = vmax.f32 %v3311, 0.0
        %v3440 = vmax.f32 %v3312, 0.0
        %v3441 = vmax.f32 %v3313, 0.0
        %v3442 = vmax.f32 %v3314, 0.0
        %v3443 = vmax.f32 %v3315, 0.0
        %v3444 = vmax.f32 %v3316, 0.0
        %v3445 = vmax.f32 %v3317, 0.0
        %v3446 = vmax.f32 %v3318, 0.0
        %v3447 = vmax.f32 %v3319, 0.0
        %v3448 = vmax.f32 %v3320, 0.0
        %v3449 = vmax.f32 %v3321, 0.0
        %v3450 = vmax.f32 %v3322, 0.0
        %v3451 = vmax.f32 %v3323, 0.0
        %v3452 = vmax.f32 %v3324, 0.0
        %v3453 = vmax.f32 %v3325, 0.0
        %v3454 = vmax.f32 %v3326, 0.0
        %v3455 = vmax.f32 %v3327, 0.0
        %v3456 = vmax.f32 %v3328, 0.0
        %v3457 = vmax.f32 %v3329, 0.0
        %v3458 = vmax.f32 %v3330, 0.0
        %v3459 = vmax.f32 %v3331, 0.0
        %v3460 = vmax.f32 %v3332, 0.0
        %v3461 = vmax.f32 %v3333, 0.0
        %v3462 = vmax.f32 %v3334, 0.0
        %v3463 = vmax.f32 %v3335, 0.0
        %v3464 = vmax.f32 %v3336, 0.0
        %v3465 = vmax.f32 %v3337, 0.0
        %v3466 = vmax.f32 %v3338, 0.0
        %v3467 = vmax.f32 %v3339, 0.0
        %v3468 = vmax.f32 %v3340, 0.0
        %v3469 = vmax.f32 %v3341, 0.0
        %v3470 = vmax.f32 %v3342, 0.0
        %v3471 = vmax.f32 %v3343, 0.0
        %v3472 = vmax.f32 %v3344, 0.0
        %v3473 = vmax.f32 %v3345, 0.0
        %v3474 = vmax.f32 %v3346, 0.0
        %v3475 = vmax.f32 %v3347, 0.0
        %v3476 = vmax.f32 %v3348, 0.0
        %v3477 = vmax.f32 %v3349, 0.0
        %v3478 = vmax.f32 %v3350, 0.0
        %v3479 = vmax.f32 %v3351, 0.0
        %v3480 = vmax.f32 %v3352, 0.0
        %v3481 = vmax.f32 %v3353, 0.0
        %v3482 = vmax.f32 %v3354, 0.0
        %v3483 = vmax.f32 %v3355, 0.0
        %v3484 = vmax.f32 %v3356, 0.0
        %v3485 = vmax.f32 %v3357, 0.0
        %v3486 = vmax.f32 %v3358, 0.0
        %v3487 = vmax.f32 %v3359, 0.0
        %v3488 = vmax.f32 %v3360, 0.0
        %v3489 = vmax.f32 %v3361, 0.0
        %v3490 = vmax.f32 %v3362, 0.0
        %v3491 = vmax.f32 %v3363, 0.0
        %v3492 = vmax.f32 %v3364, 0.0
        %v3493 = vmax.f32 %v3365, 0.0
        %v3494 = vmax.f32 %v3366, 0.0
        %v3495 = vmax.f32 %v3367, 0.0
        %v3496 = vmax.f32 %v3368, 0.0
        %v3497 = vmax.f32 %v3369, 0.0
        %v3498 = vmax.f32 %v3370, 0.0
        %v3499 = vmax.f32 %v3371, 0.0
        %v3500 = vmax.f32 %v3372, 0.0
        %v3501 = vmax.f32 %v3373, 0.0
        %v3502 = vmax.f32 %v3374, 0.0
        %v3503 = vmax.f32 %v3375, 0.0
        %v3504 = vmax.f32 %v3376, 0.0
        %v3505 = vmax.f32 %v3377, 0.0
        %v3506 = vmax.f32 %v3378, 0.0
        %v3507 = vmax.f32 %v3379, 0.0
        %v3508 = vmax.f32 %v3380, 0.0
        %v3509 = vmax.f32 %v3381, 0.0
        %3638 = vst [vmem:[#allocation1] ss:$4 sm:$0xff] %v3382
        %s3639 = scalar_lea.vmem [#allocation1], 1
        %3640 = vst [vmem:[%s3639] ss:$4 sm:$0xff] %v3383
        %s3641 = scalar_lea.vmem [#allocation1], 2
        %3642 = vst [vmem:[%s3641] ss:$4 sm:$0xff] %v3384
        %s3643 = scalar_lea.vmem [#allocation1], 3
        %3644 = vst [vmem:[%s3643] ss:$4 sm:$0xff] %v3385
        %s3645 = scalar_lea.vmem [#allocation1], 32
        %3646 = vst [vmem:[%s3645] ss:$4 sm:$0xff] %v3386
        %s3647 = scalar_lea.vmem [#allocation1], 33
        %3648 = vst [vmem:[%s3647] ss:$4 sm:$0xff] %v3387
        %s3649 = scalar_lea.vmem [#allocation1], 34
        %3650 = vst [vmem:[%s3649] ss:$4 sm:$0xff] %v3388
        %s3651 = scalar_lea.vmem [#allocation1], 35
        %3652 = vst [vmem:[%s3651] ss:$4 sm:$0xff] %v3389
        %v3653 = vld.sshfl [vmem:[#allocation1] sm:$0xff pattern:$0x73625140]
        %v3654 = vld.sshfl [vmem:[#allocation1 + $0x20] sm:$0xff pattern:$0x73625140]
        %3655 = vst [vmem:[#allocation1] ss:$4 sm:$0xff] %v3390
        %3656 = vst [vmem:[%s3639] ss:$4 sm:$0xff] %v3391
        %3657 = vst [vmem:[%s3641] ss:$4 sm:$0xff] %v3392
        %3658 = vst [vmem:[%s3643] ss:$4 sm:$0xff] %v3393
        %3659 = vst [vmem:[%s3645] ss:$4 sm:$0xff] %v3394
        %3660 = vst [vmem:[%s3647] ss:$4 sm:$0xff] %v3395
        %3661 = vst [vmem:[%s3649] ss:$4 sm:$0xff] %v3396
        %3662 = vst [vmem:[%s3651] ss:$4 sm:$0xff] %v3397
        %v3663 = vld.sshfl [vmem:[#allocation1] sm:$0xff pattern:$0x73625140]
        %v3664 = vld.sshfl [vmem:[#allocation1 + $0x20] sm:$0xff pattern:$0x73625140]
        %3665 = vst [vmem:[#allocation1] ss:$4 sm:$0xff] %v3398
        %3666 = vst [vmem:[%s3639] ss:$4 sm:$0xff] %v3399
        %3667 = vst [vmem:[%s3641] ss:$4 sm:$0xff] %v3400
        %3668 = vst [vmem:[%s3643] ss:$4 sm:$0xff] %v3401
        %3669 = vst [vmem:[%s3645] ss:$4 sm:$0xff] %v3402
        %3670 = vst [vmem:[%s3647] ss:$4 sm:$0xff] %v3403
        %3671 = vst [vmem:[%s3649] ss:$4 sm:$0xff] %v3404
        %3672 = vst [vmem:[%s3651] ss:$4 sm:$0xff] %v3405
        %v3673 = vld.sshfl [vmem:[#allocation1] sm:$0xff pattern:$0x73625140]
        %v3674 = vld.sshfl [vmem:[#allocation1 + $0x20] sm:$0xff pattern:$0x73625140]
        %3675 = vst [vmem:[#allocation1] ss:$4 sm:$0xff] %v3406
        %3676 = vst [vmem:[%s3639] ss:$4 sm:$0xff] %v3407
        %3677 = vst [vmem:[%s3641] ss:$4 sm:$0xff] %v3408
        %3678 = vst [vmem:[%s3643] ss:$4 sm:$0xff] %v3409
        %3679 = vst [vmem:[%s3645] ss:$4 sm:$0xff] %v3410
        %3680 = vst [vmem:[%s3647] ss:$4 sm:$0xff] %v3411
        %3681 = vst [vmem:[%s3649] ss:$4 sm:$0xff] %v3412
        %3682 = vst [vmem:[%s3651] ss:$4 sm:$0xff] %v3413
        %v3683 = vld.sshfl [vmem:[#allocation1] sm:$0xff pattern:$0x73625140]
        %v3684 = vld.sshfl [vmem:[#allocation1 + $0x20] sm:$0xff pattern:$0x73625140]
        %3685 = vst [vmem:[#allocation1] ss:$4 sm:$0xff] %v3414
        %3686 = vst [vmem:[%s3639] ss:$4 sm:$0xff] %v3415
        %3687 = vst [vmem:[%s3641] ss:$4 sm:$0xff] %v3416
        %3688 = vst [vmem:[%s3643] ss:$4 sm:$0xff] %v3417
        %3689 = vst [vmem:[%s3645] ss:$4 sm:$0xff] %v3418
        %3690 = vst [vmem:[%s3647] ss:$4 sm:$0xff] %v3419
        %3691 = vst [vmem:[%s3649] ss:$4 sm:$0xff] %v3420
        %3692 = vst [vmem:[%s3651] ss:$4 sm:$0xff] %v3421
        %v3693 = vld.sshfl [vmem:[#allocation1] sm:$0xff pattern:$0x73625140]
        %v3694 = vld.sshfl [vmem:[#allocation1 + $0x20] sm:$0xff pattern:$0x73625140]
        %3695 = vst [vmem:[#allocation1] ss:$4 sm:$0xff] %v3422
        %3696 = vst [vmem:[%s3639] ss:$4 sm:$0xff] %v3423
        %3697 = vst [vmem:[%s3641] ss:$4 sm:$0xff] %v3424
        %3698 = vst [vmem:[%s3643] ss:$4 sm:$0xff] %v3425
        %3699 = vst [vmem:[%s3645] ss:$4 sm:$0xff] %v3426
        %3700 = vst [vmem:[%s3647] ss:$4 sm:$0xff] %v3427
        %3701 = vst [vmem:[%s3649] ss:$4 sm:$0xff] %v3428
        %3702 = vst [vmem:[%s3651] ss:$4 sm:$0xff] %v3429
        %v3703 = vld.sshfl [vmem:[#allocation1] sm:$0xff pattern:$0x73625140]
        %v3704 = vld.sshfl [vmem:[#allocation1 + $0x20] sm:$0xff pattern:$0x73625140]
        %3705 = vst [vmem:[#allocation1] ss:$4 sm:$0xff] %v3430
        %3706 = vst [vmem:[%s3639] ss:$4 sm:$0xff] %v3431
        %3707 = vst [vmem:[%s3641] ss:$4 sm:$0xff] %v3432
        %3708 = vst [vmem:[%s3643] ss:$4 sm:$0xff] %v3433
        %3709 = vst [vmem:[%s3645] ss:$4 sm:$0xff] %v3434
        %3710 = vst [vmem:[%s3647] ss:$4 sm:$0xff] %v3435
        %3711 = vst [vmem:[%s3649] ss:$4 sm:$0xff] %v3436
        %3712 = vst [vmem:[%s3651] ss:$4 sm:$0xff] %v3437
        %v3713 = vld.sshfl [vmem:[#allocation1] sm:$0xff pattern:$0x73625140]
        %v3714 = vld.sshfl [vmem:[#allocation1 + $0x20] sm:$0xff pattern:$0x73625140]
        %3715 = vst [vmem:[#allocation1] ss:$4 sm:$0xff] %v3438
        %3716 = vst [vmem:[%s3639] ss:$4 sm:$0xff] %v3439
        %3717 = vst [vmem:[%s3641] ss:$4 sm:$0xff] %v3440
        %3718 = vst [vmem:[%s3643] ss:$4 sm:$0xff] %v3441
        %3719 = vst [vmem:[%s3645] ss:$4 sm:$0xff] %v3442
        %3720 = vst [vmem:[%s3647] ss:$4 sm:$0xff] %v3443
        %3721 = vst [vmem:[%s3649] ss:$4 sm:$0xff] %v3444
        %3722 = vst [vmem:[%s3651] ss:$4 sm:$0xff] %v3445
        %v3723 = vld.sshfl [vmem:[#allocation1] sm:$0xff pattern:$0x73625140]
        %v3724 = vld.sshfl [vmem:[#allocation1 + $0x20] sm:$0xff pattern:$0x73625140]
        %3725 = vst [vmem:[#allocation1] ss:$4 sm:$0xff] %v3446
        %3726 = vst [vmem:[%s3639] ss:$4 sm:$0xff] %v3447
        %3727 = vst [vmem:[%s3641] ss:$4 sm:$0xff] %v3448
        %3728 = vst [vmem:[%s3643] ss:$4 sm:$0xff] %v3449
        %3729 = vst [vmem:[%s3645] ss:$4 sm:$0xff] %v3450
        %3730 = vst [vmem:[%s3647] ss:$4 sm:$0xff] %v3451
        %3731 = vst [vmem:[%s3649] ss:$4 sm:$0xff] %v3452
        %3732 = vst [vmem:[%s3651] ss:$4 sm:$0xff] %v3453
        %v3733 = vld.sshfl [vmem:[#allocation1] sm:$0xff pattern:$0x73625140]
        %v3734 = vld.sshfl [vmem:[#allocation1 + $0x20] sm:$0xff pattern:$0x73625140]
        %3735 = vst [vmem:[#allocation1] ss:$4 sm:$0xff] %v3454
        %3736 = vst [vmem:[%s3639] ss:$4 sm:$0xff] %v3455
        %3737 = vst [vmem:[%s3641] ss:$4 sm:$0xff] %v3456
        %3738 = vst [vmem:[%s3643] ss:$4 sm:$0xff] %v3457
        %3739 = vst [vmem:[%s3645] ss:$4 sm:$0xff] %v3458
        %3740 = vst [vmem:[%s3647] ss:$4 sm:$0xff] %v3459
        %3741 = vst [vmem:[%s3649] ss:$4 sm:$0xff] %v3460
        %3742 = vst [vmem:[%s3651] ss:$4 sm:$0xff] %v3461
        %v3743 = vld.sshfl [vmem:[#allocation1] sm:$0xff pattern:$0x73625140]
        %v3744 = vld.sshfl [vmem:[#allocation1 + $0x20] sm:$0xff pattern:$0x73625140]
        %3745 = vst [vmem:[#allocation1] ss:$4 sm:$0xff] %v3462
        %3746 = vst [vmem:[%s3639] ss:$4 sm:$0xff] %v3463
        %3747 = vst [vmem:[%s3641] ss:$4 sm:$0xff] %v3464
        %3748 = vst [vmem:[%s3643] ss:$4 sm:$0xff] %v3465
        %3749 = vst [vmem:[%s3645] ss:$4 sm:$0xff] %v3466
        %3750 = vst [vmem:[%s3647] ss:$4 sm:$0xff] %v3467
        %3751 = vst [vmem:[%s3649] ss:$4 sm:$0xff] %v3468
        %3752 = vst [vmem:[%s3651] ss:$4 sm:$0xff] %v3469
        %v3753 = vld.sshfl [vmem:[#allocation1] sm:$0xff pattern:$0x73625140]
        %v3754 = vld.sshfl [vmem:[#allocation1 + $0x20] sm:$0xff pattern:$0x73625140]
        %3755 = vst [vmem:[#allocation1] ss:$4 sm:$0xff] %v3470
        %3756 = vst [vmem:[%s3639] ss:$4 sm:$0xff] %v3471
        %3757 = vst [vmem:[%s3641] ss:$4 sm:$0xff] %v3472
        %3758 = vst [vmem:[%s3643] ss:$4 sm:$0xff] %v3473
        %3759 = vst [vmem:[%s3645] ss:$4 sm:$0xff] %v3474
        %3760 = vst [vmem:[%s3647] ss:$4 sm:$0xff] %v3475
        %3761 = vst [vmem:[%s3649] ss:$4 sm:$0xff] %v3476
        %3762 = vst [vmem:[%s3651] ss:$4 sm:$0xff] %v3477
        %v3763 = vld.sshfl [vmem:[#allocation1] sm:$0xff pattern:$0x73625140]
        %v3764 = vld.sshfl [vmem:[#allocation1 + $0x20] sm:$0xff pattern:$0x73625140]
        %3765 = vst [vmem:[#allocation1] ss:$4 sm:$0xff] %v3478
        %3766 = vst [vmem:[%s3639] ss:$4 sm:$0xff] %v3479
        %3767 = vst [vmem:[%s3641] ss:$4 sm:$0xff] %v3480
        %3768 = vst [vmem:[%s3643] ss:$4 sm:$0xff] %v3481
        %3769 = vst [vmem:[%s3645] ss:$4 sm:$0xff] %v3482
        %3770 = vst [vmem:[%s3647] ss:$4 sm:$0xff] %v3483
        %3771 = vst [vmem:[%s3649] ss:$4 sm:$0xff] %v3484
        %3772 = vst [vmem:[%s3651] ss:$4 sm:$0xff] %v3485
        %v3773 = vld.sshfl [vmem:[#allocation1] sm:$0xff pattern:$0x73625140]
        %v3774 = vld.sshfl [vmem:[#allocation1 + $0x20] sm:$0xff pattern:$0x73625140]
        %3775 = vst [vmem:[#allocation1] ss:$4 sm:$0xff] %v3486
        %3776 = vst [vmem:[%s3639] ss:$4 sm:$0xff] %v3487
        %3777 = vst [vmem:[%s3641] ss:$4 sm:$0xff] %v3488
        %3778 = vst [vmem:[%s3643] ss:$4 sm:$0xff] %v3489
        %3779 = vst [vmem:[%s3645] ss:$4 sm:$0xff] %v3490
        %3780 = vst [vmem:[%s3647] ss:$4 sm:$0xff] %v3491
        %3781 = vst [vmem:[%s3649] ss:$4 sm:$0xff] %v3492
        %3782 = vst [vmem:[%s3651] ss:$4 sm:$0xff] %v3493
        %v3783 = vld.sshfl [vmem:[#allocation1] sm:$0xff pattern:$0x73625140]
        %v3784 = vld.sshfl [vmem:[#allocation1 + $0x20] sm:$0xff pattern:$0x73625140]
        %3785 = vst [vmem:[#allocation1] ss:$4 sm:$0xff] %v3494
        %3786 = vst [vmem:[%s3639] ss:$4 sm:$0xff] %v3495
        %3787 = vst [vmem:[%s3641] ss:$4 sm:$0xff] %v3496
        %3788 = vst [vmem:[%s3643] ss:$4 sm:$0xff] %v3497
        %3789 = vst [vmem:[%s3645] ss:$4 sm:$0xff] %v3498
        %3790 = vst [vmem:[%s3647] ss:$4 sm:$0xff] %v3499
        %3791 = vst [vmem:[%s3649] ss:$4 sm:$0xff] %v3500
        %3792 = vst [vmem:[%s3651] ss:$4 sm:$0xff] %v3501
        %v3793 = vld.sshfl [vmem:[#allocation1] sm:$0xff pattern:$0x73625140]
        %v3794 = vld.sshfl [vmem:[#allocation1 + $0x20] sm:$0xff pattern:$0x73625140]
        %3795 = vst [vmem:[#allocation1] ss:$4 sm:$0xff] %v3502
        %3796 = vst [vmem:[%s3639] ss:$4 sm:$0xff] %v3503
        %3797 = vst [vmem:[%s3641] ss:$4 sm:$0xff] %v3504
        %3798 = vst [vmem:[%s3643] ss:$4 sm:$0xff] %v3505
        %3799 = vst [vmem:[%s3645] ss:$4 sm:$0xff] %v3506
        %3800 = vst [vmem:[%s3647] ss:$4 sm:$0xff] %v3507
        %3801 = vst [vmem:[%s3649] ss:$4 sm:$0xff] %v3508
        %3802 = vst [vmem:[%s3651] ss:$4 sm:$0xff] %v3509
        %v3803 = vld.sshfl [vmem:[#allocation1] sm:$0xff pattern:$0x73625140]
        %v3804 = vld.sshfl [vmem:[#allocation1 + $0x20] sm:$0xff pattern:$0x73625140]
        %v3837 = vpack.c.bf16 %v3653, %v3653
        %v3838 = vpack.c.bf16 %v3654, %v3654
        %v3839 = vpack.c.bf16 %v3663, %v3663
        %v3840 = vpack.c.bf16 %v3664, %v3664
        %v3841 = vpack.c.bf16 %v3673, %v3673
        %v3842 = vpack.c.bf16 %v3674, %v3674
        %v3843 = vpack.c.bf16 %v3683, %v3683
        %v3844 = vpack.c.bf16 %v3684, %v3684
        %v3845 = vpack.c.bf16 %v3693, %v3693
        %v3846 = vpack.c.bf16 %v3694, %v3694
        %v3847 = vpack.c.bf16 %v3703, %v3703
        %v3848 = vpack.c.bf16 %v3704, %v3704
        %v3849 = vpack.c.bf16 %v3713, %v3713
        %v3850 = vpack.c.bf16 %v3714, %v3714
        %v3851 = vpack.c.bf16 %v3723, %v3723
        %v3852 = vpack.c.bf16 %v3724, %v3724
        %v3853 = vpack.c.bf16 %v3733, %v3733
        %v3854 = vpack.c.bf16 %v3734, %v3734
        %v3855 = vpack.c.bf16 %v3743, %v3743
        %v3856 = vpack.c.bf16 %v3744, %v3744
        %v3857 = vpack.c.bf16 %v3753, %v3753
        %v3858 = vpack.c.bf16 %v3754, %v3754
        %v3859 = vpack.c.bf16 %v3763, %v3763
        %v3860 = vpack.c.bf16 %v3764, %v3764
        %v3861 = vpack.c.bf16 %v3773, %v3773
        %v3862 = vpack.c.bf16 %v3774, %v3774
        %v3863 = vpack.c.bf16 %v3783, %v3783
        %v3864 = vpack.c.bf16 %v3784, %v3784
        %v3865 = vpack.c.bf16 %v3793, %v3793
        %v3866 = vpack.c.bf16 %v3794, %v3794
        %v3867 = vpack.c.bf16 %v3803, %v3803
        %v3868 = vpack.c.bf16 %v3804, %v3804
        %vm3869 = vcmask 519168
        %3870 = vst.msk [vmem:[%s243] sm:$0xf] %vm3869, %v3837
        %3871 = vst.msk [vmem:[%s243 + $0x4] sm:$0xf] %vm3869, %v3838
        %3872 = vst.msk [vmem:[%s243 + $0x8] sm:$0xf] %vm3869, %v3839
        %3873 = vst.msk [vmem:[%s243 + $0xc] sm:$0xf] %vm3869, %v3840
        %3874 = vst.msk [vmem:[%s243 + $0x10] sm:$0xf] %vm3869, %v3841
        %3875 = vst.msk [vmem:[%s243 + $0x14] sm:$0xf] %vm3869, %v3842
        %3876 = vst.msk [vmem:[%s243 + $0x18] sm:$0xf] %vm3869, %v3843
        %3877 = vst.msk [vmem:[%s243 + $0x1c] sm:$0xf] %vm3869, %v3844
        %3878 = vst.msk [vmem:[%s243 + $0x20] sm:$0xf] %vm3869, %v3845
        %3879 = vst.msk [vmem:[%s243 + $0x24] sm:$0xf] %vm3869, %v3846
        %3880 = vst.msk [vmem:[%s243 + $0x28] sm:$0xf] %vm3869, %v3847
        %3881 = vst.msk [vmem:[%s243 + $0x2c] sm:$0xf] %vm3869, %v3848
        %3882 = vst.msk [vmem:[%s243 + $0x30] sm:$0xf] %vm3869, %v3849
        %3883 = vst.msk [vmem:[%s243 + $0x34] sm:$0xf] %vm3869, %v3850
        %3884 = vst.msk [vmem:[%s243 + $0x38] sm:$0xf] %vm3869, %v3851
        %3885 = vst.msk [vmem:[%s243 + $0x3c] sm:$0xf] %vm3869, %v3852
        %3886 = vst.msk [vmem:[%s243 + $0x40] sm:$0xf] %vm3869, %v3853
        %3887 = vst.msk [vmem:[%s243 + $0x44] sm:$0xf] %vm3869, %v3854
        %3888 = vst.msk [vmem:[%s243 + $0x48] sm:$0xf] %vm3869, %v3855
        %3889 = vst.msk [vmem:[%s243 + $0x4c] sm:$0xf] %vm3869, %v3856
        %3890 = vst.msk [vmem:[%s243 + $0x50] sm:$0xf] %vm3869, %v3857
        %3891 = vst.msk [vmem:[%s243 + $0x54] sm:$0xf] %vm3869, %v3858
        %3892 = vst.msk [vmem:[%s243 + $0x58] sm:$0xf] %vm3869, %v3859
        %3893 = vst.msk [vmem:[%s243 + $0x5c] sm:$0xf] %vm3869, %v3860
        %3894 = vst.msk [vmem:[%s243 + $0x60] sm:$0xf] %vm3869, %v3861
        %3895 = vst.msk [vmem:[%s243 + $0x64] sm:$0xf] %vm3869, %v3862
        %3896 = vst.msk [vmem:[%s243 + $0x68] sm:$0xf] %vm3869, %v3863
        %3897 = vst.msk [vmem:[%s243 + $0x6c] sm:$0xf] %vm3869, %v3864
        %3898 = vst.msk [vmem:[%s243 + $0x70] sm:$0xf] %vm3869, %v3865
        %3899 = vst.msk [vmem:[%s243 + $0x74] sm:$0xf] %vm3869, %v3866
        %3900 = vst.msk [vmem:[%s243 + $0x78] sm:$0xf] %vm3869, %v3867
        %3901 = vst.msk [vmem:[%s243 + $0x7c] sm:$0xf] %vm3869, %v3868
        %s3902 = sand.u32 %s139, 1
        %s3903 = scalar_lea.sflag [#allocation3], %s3902
        %s3904 = sand.u32 %s139, 1
        %s3905 = smul.addr %s3904, 128
        %s3906 = scalar_lea.vmem [#allocation2], %s3905
        // Predicated region
        $region33: #{tpu_custom_call.1} parent=31 // pred_check
          %p3907 = pneg %p149
        $region34: #{tpu_custom_call.1} parent=31 // pred_check_branch
          %3909 = sbr.rel (%p3907) target = $region36
        $region35: #{tpu_custom_call.1} parent=31 // pred_region
          %3911 = vsyncadd %s3903, 0
          %s3912 = smul.addr %s25, 32
          %s3913 = sadd.s32 %s23, %s3912
          %s3914 = smul.addr %s24, 32
          %s3915 = sadd.s32 %s3913, %s3914
          %s3916 = smul.addr %s3915, 4
          %s3917 = scalar_lea.hbm %s3, %s3916
          %s3918 = sshll.u32 %s3906, 4
          %s3919 = int_to_ptr.vmem [resolvable:$true] %s3918
          %s3920 = sshll.u32 %s3917, 4
          %s3921 = int_to_ptr.hbm [resolvable:$true] %s3920
          %3926 = dma.vmem_to_hbm [thread:$0]  %s3919, 2048, %s3921, %s3903, 64, 64, 4
        $region36: #{tpu_custom_call.1} parent=31 // pred_fallthru
          _
      $region32: #{tpu_custom_call.1} parent=5 // pred_fallthru
        _
      %p3927 = scmp.le.s32.totalorder 2, %s12
      // Predicated region
      $region37: #{tpu_custom_call.1} parent=5 // pred_check
        %p3928 = pneg %p3927
      $region38: #{tpu_custom_call.1} parent=5 // pred_check_branch
        %3930 = sbr.rel (%p3928) target = $region40
      $region39: #{tpu_custom_call.1} parent=5 // pred_region
        %s3931 = ssub.s32 %s12, 2
        // Predicated region
        $region41: #{tpu_custom_call.1} parent=39 // pred_check
          %p3932 = pneg %p155
        $region42: #{tpu_custom_call.1} parent=39 // pred_check_branch
          %3934 = sbr.rel (%p3932) target = $region44
        $region43: #{tpu_custom_call.1} parent=39 // pred_region
          %s3935 = sand.u32 %s140, 1
          %s3936 = scalar_lea.sflag [#allocation3], %s3935
          %s3937 = sand.u32 %s140, 1
          %s3938 = smul.addr %s3937, 128
          %s3939 = scalar_lea.vmem [#allocation2], %s3938
          %3941 = dma.done %s3936, 2048
        $region44: #{tpu_custom_call.1} parent=39 // pred_fallthru
          _
      $region40: #{tpu_custom_call.1} parent=5 // pred_fallthru
        _
    $region6: #{tpu_custom_call.1} parent=1 // loop_footer
      %s16 = sadd.s32 1, %s12
    $region7: #{tpu_custom_call.1} parent=1 // loop_footer_branch
      %11 = sbr.rel target = $region3
    $region8: #{tpu_custom_call.1} parent=1 // loop_exit
      _
    %3942 = vsyncpa [#allocation3], 1
    %s3943 = scalar_lea.sflag [#allocation3], 1
    %3944 = vsyncpa %s3943, 1

</llo_original>
